<compile_context>
chip_gen: v7x
topology: tpu7x:2x2x1
jax: 0.10.0
libtpu: 0.0.40
codegen_flags: <defaults>
</compile_context>

<pallas_src>
import jax
import jax.numpy as jnp
from jax.experimental import pallas as pl
from jax.experimental.pallas import tpu as pltpu

# logical dims
D_IN, D_H, D_Z = 784, 400, 20
# lane-padded dims (multiples of 128)
D_IN_P, D_H_P, D_Z_P = 896, 512, 128
D_LAT_P = 2 * D_Z_P          # fused [mu | logvar], each padded to 128 lanes


def vae_kernel(x_ref, eps_ref,
               w1_ref, b1_ref,
               wlat_ref, blat_ref,
               w3_ref, b3_ref,
               w4_ref, b4_ref,
               recon_ref, mulv_ref):
    x = x_ref[...]                                         # (TB, 896) f32

    # encode: h1 = relu(x @ W1 + b1)   (bf16 MXU operands, f32 accumulate)
    h1 = jnp.dot(x.astype(jnp.bfloat16), w1_ref[...],
                 preferred_element_type=jnp.float32) + b1_ref[...]
    h1 = jnp.maximum(h1, 0.0)

    # fused mu/logvar projection: one (512 -> 256) matmul instead of two K=20 ones
    ml = jnp.dot(h1.astype(jnp.bfloat16), wlat_ref[...],
                 preferred_element_type=jnp.float32) + blat_ref[...]
    mu = ml[:, :D_Z_P]               # lanes   0..127 (0..19 valid)
    logvar = ml[:, D_Z_P:]           # lanes 128..255 (128..147 valid)

    # reparameterize: z = mu + eps * exp(0.5 * logvar)
    # (eps is zero-padded, and W3's padded rows are zero, so padding is inert)
    std = jnp.exp(0.5 * logvar)
    z = mu + eps_ref[...] * std

    # decode: sigmoid(relu(z @ W3 + b3) @ W4 + b4)
    h3 = jnp.dot(z.astype(jnp.bfloat16), w3_ref[...],
                 preferred_element_type=jnp.float32) + b3_ref[...]
    h3 = jnp.maximum(h3, 0.0)
    logits = jnp.dot(h3.astype(jnp.bfloat16), w4_ref[...],
                     preferred_element_type=jnp.float32) + b4_ref[...]

    recon_ref[...] = jax.nn.sigmoid(logits)
    mulv_ref[...] = ml               # single lane-dense store for mu & logvar


def _round_up(n, m):
    return (n + m - 1) // m * m


def init_params(key):
    """Deterministic init mirroring nn.Linear default (uniform +-1/sqrt(fan_in)),
    stored in PyTorch layout: W (out, in), b (out,)."""
    dims = [(784, 400), (400, 20), (400, 20), (20, 400), (400, 784)]
    params = []
    for (fan_in, fan_out) in dims:
        key, kw, kb = jax.random.split(key, 3)
        bound = 1.0 / jnp.sqrt(fan_in)
        w = jax.random.uniform(kw, (fan_out, fan_in), jnp.float32, -bound, bound)
        b = jax.random.uniform(kb, (fan_out,), jnp.float32, -bound, bound)
        params.append((w, b))
    return params


def pack_params(params):
    """One-time layout: transpose PyTorch (out,in) weights to (in,out), zero-pad
    feature dims to 128 multiples, fuse fc21/fc22, cast weights to bf16."""
    (w1, b1), (w21, b21), (w22, b22), (w3, b3), (w4, b4) = params

    def pad_w(wt, in_p, out_p):            # wt is already (in, out)
        z = jnp.zeros((in_p, out_p), jnp.float32)
        return z.at[:wt.shape[0], :wt.shape[1]].set(wt)

    def pad_b(b, out_p):
        return jnp.zeros((1, out_p), jnp.float32).at[0, :b.shape[0]].set(b)

    w1p = pad_w(w1.T, D_IN_P, D_H_P).astype(jnp.bfloat16)
    b1p = pad_b(b1, D_H_P)

    wlat = jnp.zeros((D_H_P, D_LAT_P), jnp.float32)
    wlat = wlat.at[:D_H, :D_Z].set(w21.T)
    wlat = wlat.at[:D_H, D_Z_P:D_Z_P + D_Z].set(w22.T)
    wlat = wlat.astype(jnp.bfloat16)
    blat = jnp.zeros((1, D_LAT_P), jnp.float32)
    blat = blat.at[0, :D_Z].set(b21).at[0, D_Z_P:D_Z_P + D_Z].set(b22)

    w3p = pad_w(w3.T, D_Z_P, D_H_P).astype(jnp.bfloat16)
    b3p = pad_b(b3, D_H_P)
    w4p = pad_w(w4.T, D_H_P, D_IN_P).astype(jnp.bfloat16)
    b4p = pad_b(b4, D_IN_P)

    return (w1p, b1p, wlat, blat, w3p, b3p, w4p, b4p)


@jax.jit
def vae_forward(x, eps, packed):
    """x: any shape whose trailing elements flatten to (-1, 784); eps: (B, 20)."""
    x2 = x.reshape(-1, D_IN).astype(jnp.float32)
    B = x2.shape[0]
    TB = min(256, _round_up(B, 8))          # batch tile (sublane-aligned)
    Bp = _round_up(B, TB)

    xp = jnp.zeros((Bp, D_IN_P), jnp.float32).at[:B, :D_IN].set(x2)
    epsp = jnp.zeros((Bp, D_Z_P), jnp.float32).at[:B, :D_Z].set(
        eps.astype(jnp.float32))

    w1p, b1p, wlat, blat, w3p, b3p, w4p, b4p = packed

    def row_spec(cols):                     # batch-tiled activations / outputs
        return pl.BlockSpec((TB, cols), lambda i: (i, 0))

    def res_spec(shape):                    # VMEM-resident weights / biases
        return pl.BlockSpec(shape, lambda i: (0, 0))

    recon_p, mulv = pl.pallas_call(
        vae_kernel,
        grid=(Bp // TB,),
        in_specs=[
            row_spec(D_IN_P), row_spec(D_Z_P),
            res_spec((D_IN_P, D_H_P)),   res_spec((1, D_H_P)),
            res_spec((D_H_P, D_LAT_P)),  res_spec((1, D_LAT_P)),
            res_spec((D_Z_P, D_H_P)),    res_spec((1, D_H_P)),
            res_spec((D_H_P, D_IN_P)),   res_spec((1, D_IN_P)),
        ],
        out_specs=(row_spec(D_IN_P), row_spec(D_LAT_P)),
        out_shape=(
            jax.ShapeDtypeStruct((Bp, D_IN_P), jnp.float32),
            jax.ShapeDtypeStruct((Bp, D_LAT_P), jnp.float32),
        ),
        compiler_params=pltpu.CompilerParams(
            dimension_semantics=("parallel",)),
    )(xp, epsp, w1p, b1p, wlat, blat, w3p, b3p, w4p, b4p)

    recon = recon_p[:B, :D_IN]
    mu = mulv[:B, :D_Z]
    logvar = mulv[:B, D_Z_P:D_Z_P + D_Z]
    return recon, mu, logvar


if __name__ == "__main__":
    key = jax.random.PRNGKey(0)
    k_params, k_x, k_eps = jax.random.split(key, 3)

    params = init_params(k_params)          # PyTorch-layout params
    packed = pack_params(params)            # one-time pre-layout / bf16 cast

    B = 8
    x = jax.random.uniform(k_x, (B, 1, 28, 28), jnp.float32)   # MNIST-like NCHW
    eps = jax.random.normal(k_eps, (B, D_Z), jnp.float32)      # reparam noise

    recon, mu, logvar = vae_forward(x, eps, packed)
    jax.block_until_ready((recon, mu, logvar))

    # f32 reference in plain JAX (kernel uses bf16 matmul operands -> loose tol)
    x2 = x.reshape(-1, D_IN)
    (w1, b1), (w21, b21), (w22, b22), (w3, b3), (w4, b4) = params
    h1 = jnp.maximum(x2 @ w1.T + b1, 0.0)
    mu_ref = h1 @ w21.T + b21
    lv_ref = h1 @ w22.T + b22
    z = mu_ref + eps * jnp.exp(0.5 * lv_ref)
    h3 = jnp.maximum(z @ w3.T + b3, 0.0)
    recon_ref = jax.nn.sigmoid(h3 @ w4.T + b4)

    assert recon.shape == (B, D_IN) and mu.shape == (B, D_Z) and logvar.shape == (B, D_Z)
    assert jnp.allclose(recon, recon_ref, atol=3e-2), "recon mismatch"
    assert jnp.allclose(mu, mu_ref, atol=3e-2), "mu mismatch"
    assert jnp.allclose(logvar, lv_ref, atol=3e-2), "logvar mismatch"

    print("KERNEL_OK")
</pallas_src>

<mosaic_0001>
module attributes {stable_mosaic.version = 11 : i64} {
  func.func @vae_kernel(%arg0: i32, %arg1: memref<8x896xf32, #tpu.memory_space<vmem>>, %arg2: memref<8x128xf32, #tpu.memory_space<vmem>>, %arg3: memref<896x512xbf16, #tpu.memory_space<vmem>>, %arg4: memref<1x512xf32, #tpu.memory_space<vmem>>, %arg5: memref<512x256xbf16, #tpu.memory_space<vmem>>, %arg6: memref<1x256xf32, #tpu.memory_space<vmem>>, %arg7: memref<128x512xbf16, #tpu.memory_space<vmem>>, %arg8: memref<1x512xf32, #tpu.memory_space<vmem>>, %arg9: memref<512x896xbf16, #tpu.memory_space<vmem>>, %arg10: memref<1x896xf32, #tpu.memory_space<vmem>>, %arg11: memref<8x896xf32, #tpu.memory_space<vmem>>, %arg12: memref<8x256xf32, #tpu.memory_space<vmem>>) attributes {dimension_semantics = [#tpu.dimension_semantics<parallel>], iteration_bounds = array<i64: 1>, scalar_prefetch = 0 : i64, scratch_operands = 0 : i64, tpu.core_type = #tpu.core_type<tc>, window_params = [{transform_indices = @transform_0, window_bounds = array<i64: 8, 896>}, {transform_indices = @transform_1, window_bounds = array<i64: 8, 128>}, {pipeline_mode = #tpu.pipeline_mode<synchronous>, transform_indices = @transform_2, window_bounds = array<i64: 896, 512>}, {pipeline_mode = #tpu.pipeline_mode<synchronous>, transform_indices = @transform_3, window_bounds = array<i64: 1, 512>}, {pipeline_mode = #tpu.pipeline_mode<synchronous>, transform_indices = @transform_4, window_bounds = array<i64: 512, 256>}, {pipeline_mode = #tpu.pipeline_mode<synchronous>, transform_indices = @transform_5, window_bounds = array<i64: 1, 256>}, {pipeline_mode = #tpu.pipeline_mode<synchronous>, transform_indices = @transform_6, window_bounds = array<i64: 128, 512>}, {pipeline_mode = #tpu.pipeline_mode<synchronous>, transform_indices = @transform_7, window_bounds = array<i64: 1, 512>}, {pipeline_mode = #tpu.pipeline_mode<synchronous>, transform_indices = @transform_8, window_bounds = array<i64: 512, 896>}, {pipeline_mode = #tpu.pipeline_mode<synchronous>, transform_indices = @transform_9, window_bounds = array<i64: 1, 896>}, {transform_indices = @transform_10, window_bounds = array<i64: 8, 896>}, {transform_indices = @transform_11, window_bounds = array<i64: 8, 256>}]} {
    %c0 = arith.constant 0 : index
    %c0_0 = arith.constant 0 : index
    %0 = vector.load %arg1[%c0, %c0_0] : memref<8x896xf32, #tpu.memory_space<vmem>>, vector<8x896xf32>
    %1 = arith.truncf %0 : vector<8x896xf32> to vector<8x896xbf16>
    %c0_1 = arith.constant 0 : index
    %c0_2 = arith.constant 0 : index
    %2 = vector.load %arg3[%c0_1, %c0_2] : memref<896x512xbf16, #tpu.memory_space<vmem>>, vector<896x512xbf16>
    %cst = arith.constant dense<0.000000e+00> : vector<8x512xf32>
    %3 = tpu.matmul %1, %2, %cst {dimension_numbers = #tpu.dot_dimension_numbers<[1], [0], [0], [1], [0, 0, 1, 1], [], []>} : vector<8x896xbf16>, vector<896x512xbf16>, vector<8x512xf32> -> vector<8x512xf32>
    %c0_3 = arith.constant 0 : index
    %c0_4 = arith.constant 0 : index
    %4 = vector.load %arg4[%c0_3, %c0_4] : memref<1x512xf32, #tpu.memory_space<vmem>>, vector<1x512xf32>
    %5 = vector.broadcast %4 : vector<1x512xf32> to vector<8x512xf32>
    %6 = arith.addf %3, %5 : vector<8x512xf32>
    %cst_5 = arith.constant 0.000000e+00 : f32
    %7 = vector.broadcast %cst_5 : f32 to vector<8x512xf32>
    %8 = arith.maximumf %6, %7 : vector<8x512xf32>
    %9 = arith.truncf %8 : vector<8x512xf32> to vector<8x512xbf16>
    %c0_6 = arith.constant 0 : index
    %c0_7 = arith.constant 0 : index
    %10 = vector.load %arg5[%c0_6, %c0_7] : memref<512x256xbf16, #tpu.memory_space<vmem>>, vector<512x256xbf16>
    %cst_8 = arith.constant dense<0.000000e+00> : vector<8x256xf32>
    %11 = tpu.matmul %9, %10, %cst_8 {dimension_numbers = #tpu.dot_dimension_numbers<[1], [0], [0], [1], [0, 0, 1, 1], [], []>} : vector<8x512xbf16>, vector<512x256xbf16>, vector<8x256xf32> -> vector<8x256xf32>
    %c0_9 = arith.constant 0 : index
    %c0_10 = arith.constant 0 : index
    %12 = vector.load %arg6[%c0_9, %c0_10] : memref<1x256xf32, #tpu.memory_space<vmem>>, vector<1x256xf32>
    %13 = vector.broadcast %12 : vector<1x256xf32> to vector<8x256xf32>
    %14 = arith.addf %11, %13 : vector<8x256xf32>
    %15 = vector.extract_strided_slice %14 {offsets = [0, 0], sizes = [8, 128], strides = [1, 1]} : vector<8x256xf32> to vector<8x128xf32>
    %16 = vector.extract_strided_slice %14 {offsets = [0, 128], sizes = [8, 128], strides = [1, 1]} : vector<8x256xf32> to vector<8x128xf32>
    %cst_11 = arith.constant 5.000000e-01 : f32
    %17 = vector.broadcast %cst_11 : f32 to vector<8x128xf32>
    %18 = arith.mulf %17, %16 : vector<8x128xf32>
    %19 = math.exp %18 : vector<8x128xf32>
    %c0_12 = arith.constant 0 : index
    %c0_13 = arith.constant 0 : index
    %20 = vector.load %arg2[%c0_12, %c0_13] : memref<8x128xf32, #tpu.memory_space<vmem>>, vector<8x128xf32>
    %21 = arith.mulf %20, %19 : vector<8x128xf32>
    %22 = arith.addf %15, %21 : vector<8x128xf32>
    %23 = arith.truncf %22 : vector<8x128xf32> to vector<8x128xbf16>
    %c0_14 = arith.constant 0 : index
    %c0_15 = arith.constant 0 : index
    %24 = vector.load %arg7[%c0_14, %c0_15] : memref<128x512xbf16, #tpu.memory_space<vmem>>, vector<128x512xbf16>
    %cst_16 = arith.constant dense<0.000000e+00> : vector<8x512xf32>
    %25 = tpu.matmul %23, %24, %cst_16 {dimension_numbers = #tpu.dot_dimension_numbers<[1], [0], [0], [1], [0, 0, 1, 1], [], []>} : vector<8x128xbf16>, vector<128x512xbf16>, vector<8x512xf32> -> vector<8x512xf32>
    %c0_17 = arith.constant 0 : index
    %c0_18 = arith.constant 0 : index
    %26 = vector.load %arg8[%c0_17, %c0_18] : memref<1x512xf32, #tpu.memory_space<vmem>>, vector<1x512xf32>
    %27 = vector.broadcast %26 : vector<1x512xf32> to vector<8x512xf32>
    %28 = arith.addf %25, %27 : vector<8x512xf32>
    %cst_19 = arith.constant 0.000000e+00 : f32
    %29 = vector.broadcast %cst_19 : f32 to vector<8x512xf32>
    %30 = arith.maximumf %28, %29 : vector<8x512xf32>
    %31 = arith.truncf %30 : vector<8x512xf32> to vector<8x512xbf16>
    %c0_20 = arith.constant 0 : index
    %c0_21 = arith.constant 0 : index
    %32 = vector.load %arg9[%c0_20, %c0_21] : memref<512x896xbf16, #tpu.memory_space<vmem>>, vector<512x896xbf16>
    %cst_22 = arith.constant dense<0.000000e+00> : vector<8x896xf32>
    %33 = tpu.matmul %31, %32, %cst_22 {dimension_numbers = #tpu.dot_dimension_numbers<[1], [0], [0], [1], [0, 0, 1, 1], [], []>} : vector<8x512xbf16>, vector<512x896xbf16>, vector<8x896xf32> -> vector<8x896xf32>
    %c0_23 = arith.constant 0 : index
    %c0_24 = arith.constant 0 : index
    %34 = vector.load %arg10[%c0_23, %c0_24] : memref<1x896xf32, #tpu.memory_space<vmem>>, vector<1x896xf32>
    %35 = vector.broadcast %34 : vector<1x896xf32> to vector<8x896xf32>
    %36 = arith.addf %33, %35 : vector<8x896xf32>
    %37 = arith.negf %36 : vector<8x896xf32>
    %38 = math.exp %37 : vector<8x896xf32>
    %cst_25 = arith.constant 1.000000e+00 : f32
    %39 = vector.broadcast %cst_25 : f32 to vector<8x896xf32>
    %40 = arith.addf %39, %38 : vector<8x896xf32>
    %41 = arith.divf %39, %40 : vector<8x896xf32>
    %c0_26 = arith.constant 0 : index
    %c0_27 = arith.constant 0 : index
    %42 = vector.load %arg11[%c0_26, %c0_27] : memref<8x896xf32, #tpu.memory_space<vmem>>, vector<8x896xf32>
    tpu.vector_store %arg11[%c0_26, %c0_27], %41 {strides = array<i32>} : memref<8x896xf32, #tpu.memory_space<vmem>>, vector<8x896xf32>,
    %c0_28 = arith.constant 0 : index
    %c0_29 = arith.constant 0 : index
    %43 = vector.load %arg12[%c0_28, %c0_29] : memref<8x256xf32, #tpu.memory_space<vmem>>, vector<8x256xf32>
    tpu.vector_store %arg12[%c0_28, %c0_29], %14 {strides = array<i32>} : memref<8x256xf32, #tpu.memory_space<vmem>>, vector<8x256xf32>,
    return
  }
  func.func @transform_0(%arg0: i32) -> (i32, i32) {
    %c0_i32 = arith.constant 0 : i32
    %c0_i32_0 = arith.constant 0 : i32
    return %arg0, %c0_i32 : i32, i32
  }
  func.func @transform_1(%arg0: i32) -> (i32, i32) {
    %c0_i32 = arith.constant 0 : i32
    %c0_i32_0 = arith.constant 0 : i32
    return %arg0, %c0_i32 : i32, i32
  }
  func.func @transform_2(%arg0: i32) -> (i32, i32) {
    %c0_i32 = arith.constant 0 : i32
    %c0_i32_0 = arith.constant 0 : i32
    %c0_i32_1 = arith.constant 0 : i32
    return %c0_i32, %c0_i32_0 : i32, i32
  }
  func.func @transform_3(%arg0: i32) -> (i32, i32) {
    %c0_i32 = arith.constant 0 : i32
    %c0_i32_0 = arith.constant 0 : i32
    %c0_i32_1 = arith.constant 0 : i32
    return %c0_i32, %c0_i32_0 : i32, i32
  }
  func.func @transform_4(%arg0: i32) -> (i32, i32) {
    %c0_i32 = arith.constant 0 : i32
    %c0_i32_0 = arith.constant 0 : i32
    %c0_i32_1 = arith.constant 0 : i32
    return %c0_i32, %c0_i32_0 : i32, i32
  }
  func.func @transform_5(%arg0: i32) -> (i32, i32) {
    %c0_i32 = arith.constant 0 : i32
    %c0_i32_0 = arith.constant 0 : i32
    %c0_i32_1 = arith.constant 0 : i32
    return %c0_i32, %c0_i32_0 : i32, i32
  }
  func.func @transform_6(%arg0: i32) -> (i32, i32) {
    %c0_i32 = arith.constant 0 : i32
    %c0_i32_0 = arith.constant 0 : i32
    %c0_i32_1 = arith.constant 0 : i32
    return %c0_i32, %c0_i32_0 : i32, i32
  }
  func.func @transform_7(%arg0: i32) -> (i32, i32) {
    %c0_i32 = arith.constant 0 : i32
    %c0_i32_0 = arith.constant 0 : i32
    %c0_i32_1 = arith.constant 0 : i32
    return %c0_i32, %c0_i32_0 : i32, i32
  }
  func.func @transform_8(%arg0: i32) -> (i32, i32) {
    %c0_i32 = arith.constant 0 : i32
    %c0_i32_0 = arith.constant 0 : i32
    %c0_i32_1 = arith.constant 0 : i32
    return %c0_i32, %c0_i32_0 : i32, i32
  }
  func.func @transform_9(%arg0: i32) -> (i32, i32) {
    %c0_i32 = arith.constant 0 : i32
    %c0_i32_0 = arith.constant 0 : i32
    %c0_i32_1 = arith.constant 0 : i32
    return %c0_i32, %c0_i32_0 : i32, i32
  }
  func.func @transform_10(%arg0: i32) -> (i32, i32) {
    %c0_i32 = arith.constant 0 : i32
    %c0_i32_0 = arith.constant 0 : i32
    return %arg0, %c0_i32 : i32, i32
  }
  func.func @transform_11(%arg0: i32) -> (i32, i32) {
    %c0_i32 = arith.constant 0 : i32
    %c0_i32_0 = arith.constant 0 : i32
    return %arg0, %c0_i32 : i32, i32
  }
}

</mosaic_0001>

<llo_original>
// kernel: vae_forward.1
$region0: #{vae_forward.1}
  #allocation0 [shape = 'u32[]', space=smem, size = 0x4, offset = 0x4, fixed_abs, tag = 'smem constant byte address 0x4 - core index']
  #allocation1 [shape = 'u32[144,128]{1,0:T(1,128)}', space=vmem, size = 0x12000, scoped, tag = 'internal scratch']
  %s0 = inlined_call_operand.vmem [shape: f32[8,896], index: 0, kind: input, shape index: {}]
  %s1 = inlined_call_operand.vmem [shape: f32[8,128], index: 1, kind: input, shape index: {}]
  %s2 = inlined_call_operand.hbm [shape: bf16[896,512], index: 2, kind: input, shape index: {}]
  %s3 = inlined_call_operand.vmem [shape: f32[1,512], index: 3, kind: input, shape index: {}]
  %s4 = inlined_call_operand.vmem [shape: bf16[512,256], index: 4, kind: input, shape index: {}]
  %s5 = inlined_call_operand.vmem [shape: f32[1,256], index: 5, kind: input, shape index: {}]
  %s6 = inlined_call_operand.vmem [shape: bf16[128,512], index: 6, kind: input, shape index: {}]
  %s7 = inlined_call_operand.vmem [shape: f32[1,512], index: 7, kind: input, shape index: {}]
  %s8 = inlined_call_operand.hbm [shape: bf16[512,896], index: 8, kind: input, shape index: {}]
  %s9 = inlined_call_operand.vmem [shape: f32[1,896], index: 9, kind: input, shape index: {}]
  %s10 = inlined_call_operand.hbm [shape: f32[8,896], index: 10, kind: output, shape index: {0}]
  %s11 = inlined_call_operand.vmem [shape: f32[8,256], index: 11, kind: output, shape index: {1}]
  %12 = xla_tuple %s10, %s11
  %s13 = sld [smem:[#allocation0]]
  $region66: #{vae_forward.1} parent=0
    _
  %s15 = ssub.s32 1, %s13
  %s16 = scalar_select 0, %s15, %s13
  $region1: #{vae_forward.1} parent=0
    #allocation2 [shape = 'u8[917504]{0}', space=vmem, size = 0xe0000, scoped, tag = 'input window, operand 2, single buffered']
    #allocation3 [shape = 's32[1]{0}', space=sflag, size = 0x4, scoped, tag = 'scoped memory for vae_forward.1']
    #allocation4 [shape = 's32[1]{0}', space=sflag, size = 0x4, scoped, tag = 'scoped memory for vae_forward.1']
    #allocation5 [shape = 'u8[917504]{0}', space=vmem, size = 0xe0000, scoped, tag = 'input window, operand 8, single buffered']
    #allocation6 [shape = 's32[1]{0}', space=sflag, size = 0x4, scoped, tag = 'scoped memory for vae_forward.1']
    #allocation7 [shape = 'u8[28672]{0}', space=vmem, size = 0x7000, scoped, tag = 'output window, operand 0, single buffered']
    %17 = vsyncpa [#allocation3], 0
    %18 = vsyncpa [#allocation6], 0
    %19 = vsyncpa [#allocation4], 0
    // Predicated region
    $region2: #{vae_forward.1} parent=1 // pred_check
      _
    $region3: #{vae_forward.1} parent=1 // pred_check_branch
      %21 = sbr.rel (0) target = $region5
    $region4: #{vae_forward.1} parent=1 // pred_region
      _
    $region5: #{vae_forward.1} parent=1 // pred_fallthru
      _
    // Predicated region
    $region6: #{vae_forward.1} parent=1 // pred_check
      _
    $region7: #{vae_forward.1} parent=1 // pred_check_branch
      %23 = sbr.rel (0) target = $region9
    $region8: #{vae_forward.1} parent=1 // pred_region
      _
    $region9: #{vae_forward.1} parent=1 // pred_fallthru
      _
    // Predicated region
    $region10: #{vae_forward.1} parent=1 // pred_check
      _
    $region11: #{vae_forward.1} parent=1 // pred_check_branch
      %25 = sbr.rel (0) target = $region13
    $region12: #{vae_forward.1} parent=1 // pred_region
      %s27 = ssub.s32 28672, 28672
      %28 = vsyncadd [#allocation3], %s27
      %s29 = sshll.u32 [#allocation2], 4
      %s30 = int_to_ptr.vmem [resolvable:$true] %s29
      %35 = dma.hbm_to_vmem [thread:$0]  %s2, 28672, %s30, [#allocation3], 256, 256, 16
    $region13: #{vae_forward.1} parent=1 // pred_fallthru
      _
    // Predicated region
    $region14: #{vae_forward.1} parent=1 // pred_check
      _
    $region15: #{vae_forward.1} parent=1 // pred_check_branch
      %37 = sbr.rel (0) target = $region17
    $region16: #{vae_forward.1} parent=1 // pred_region
      _
    $region17: #{vae_forward.1} parent=1 // pred_fallthru
      _
    // Predicated region
    $region18: #{vae_forward.1} parent=1 // pred_check
      _
    $region19: #{vae_forward.1} parent=1 // pred_check_branch
      %39 = sbr.rel (0) target = $region21
    $region20: #{vae_forward.1} parent=1 // pred_region
      _
    $region21: #{vae_forward.1} parent=1 // pred_fallthru
      _
    // Predicated region
    $region22: #{vae_forward.1} parent=1 // pred_check
      _
    $region23: #{vae_forward.1} parent=1 // pred_check_branch
      %41 = sbr.rel (0) target = $region25
    $region24: #{vae_forward.1} parent=1 // pred_region
      _
    $region25: #{vae_forward.1} parent=1 // pred_fallthru
      _
    // Predicated region
    $region26: #{vae_forward.1} parent=1 // pred_check
      _
    $region27: #{vae_forward.1} parent=1 // pred_check_branch
      %43 = sbr.rel (0) target = $region29
    $region28: #{vae_forward.1} parent=1 // pred_region
      _
    $region29: #{vae_forward.1} parent=1 // pred_fallthru
      _
    // Predicated region
    $region30: #{vae_forward.1} parent=1 // pred_check
      _
    $region31: #{vae_forward.1} parent=1 // pred_check_branch
      %45 = sbr.rel (0) target = $region33
    $region32: #{vae_forward.1} parent=1 // pred_region
      _
    $region33: #{vae_forward.1} parent=1 // pred_fallthru
      _
    // Predicated region
    $region34: #{vae_forward.1} parent=1 // pred_check
      _
    $region35: #{vae_forward.1} parent=1 // pred_check_branch
      %47 = sbr.rel (0) target = $region37
    $region36: #{vae_forward.1} parent=1 // pred_region
      %s49 = ssub.s32 28672, 28672
      %50 = vsyncadd [#allocation6], %s49
      %s51 = sshll.u32 [#allocation5], 4
      %s52 = int_to_ptr.vmem [resolvable:$true] %s51
      %57 = dma.hbm_to_vmem [thread:$0]  %s8, 28672, %s52, [#allocation6], 448, 448, 28
    $region37: #{vae_forward.1} parent=1 // pred_fallthru
      _
    // Predicated region
    $region38: #{vae_forward.1} parent=1 // pred_check
      _
    $region39: #{vae_forward.1} parent=1 // pred_check_branch
      %59 = sbr.rel (0) target = $region41
    $region40: #{vae_forward.1} parent=1 // pred_region
      _
    $region41: #{vae_forward.1} parent=1 // pred_fallthru
      _
    // Predicated region
    $region42: #{vae_forward.1} parent=1 // pred_check
      _
    $region43: #{vae_forward.1} parent=1 // pred_check_branch
      %61 = sbr.rel (0) target = $region45
    $region44: #{vae_forward.1} parent=1 // pred_region
      %62 = dma.done [#allocation3], 28672
    $region45: #{vae_forward.1} parent=1 // pred_fallthru
      _
    // Predicated region
    $region46: #{vae_forward.1} parent=1 // pred_check
      _
    $region47: #{vae_forward.1} parent=1 // pred_check_branch
      %64 = sbr.rel (0) target = $region49
    $region48: #{vae_forward.1} parent=1 // pred_region
      %65 = dma.done [#allocation6], 28672
    $region49: #{vae_forward.1} parent=1 // pred_fallthru
      _
    %v67 = vld [vmem:[%s0] sm:$0xff]
    %v68 = vld [vmem:[%s0 + $0x8] sm:$0xff]
    %v69 = vld [vmem:[%s0 + $0x10] sm:$0xff]
    %v70 = vld [vmem:[%s0 + $0x18] sm:$0xff]
    %v71 = vld [vmem:[%s0 + $0x20] sm:$0xff]
    %v72 = vld [vmem:[%s0 + $0x28] sm:$0xff]
    %v73 = vld [vmem:[%s0 + $0x30] sm:$0xff]
    %v74 = vpack.c.bf16 %v67, %v67
    %v75 = vpack.c.bf16 %v68, %v68
    %v76 = vpack.c.bf16 %v69, %v69
    %v77 = vpack.c.bf16 %v70, %v70
    %v78 = vpack.c.bf16 %v71, %v71
    %v79 = vpack.c.bf16 %v72, %v72
    %v80 = vpack.c.bf16 %v73, %v73
    %v81 = vld [vmem:[#allocation2] sm:$0xff]
    %v82 = vld [vmem:[#allocation2 + $0x8] sm:$0xff]
    %v83 = vld [vmem:[#allocation2 + $0x10] sm:$0xff]
    %v84 = vld [vmem:[#allocation2 + $0x18] sm:$0xff]
    %v85 = vld [vmem:[#allocation2 + $0x20] sm:$0xff]
    %v86 = vld [vmem:[#allocation2 + $0x28] sm:$0xff]
    %v87 = vld [vmem:[#allocation2 + $0x30] sm:$0xff]
    %v88 = vld [vmem:[#allocation2 + $0x38] sm:$0xff]
    %v89 = vld [vmem:[#allocation2 + $0x40] sm:$0xff]
    %v90 = vld [vmem:[#allocation2 + $0x48] sm:$0xff]
    %v91 = vld [vmem:[#allocation2 + $0x50] sm:$0xff]
    %v92 = vld [vmem:[#allocation2 + $0x58] sm:$0xff]
    %v93 = vld [vmem:[#allocation2 + $0x60] sm:$0xff]
    %v94 = vld [vmem:[#allocation2 + $0x68] sm:$0xff]
    %v95 = vld [vmem:[#allocation2 + $0x70] sm:$0xff]
    %v96 = vld [vmem:[#allocation2 + $0x78] sm:$0xff]
    %v97 = vld [vmem:[#allocation2 + $0x80] sm:$0xff]
    %v98 = vld [vmem:[#allocation2 + $0x88] sm:$0xff]
    %v99 = vld [vmem:[#allocation2 + $0x90] sm:$0xff]
    %v100 = vld [vmem:[#allocation2 + $0x98] sm:$0xff]
    %v101 = vld [vmem:[#allocation2 + $0xa0] sm:$0xff]
    %v102 = vld [vmem:[#allocation2 + $0xa8] sm:$0xff]
    %v103 = vld [vmem:[#allocation2 + $0xb0] sm:$0xff]
    %v104 = vld [vmem:[#allocation2 + $0xb8] sm:$0xff]
    %v105 = vld [vmem:[#allocation2 + $0xc0] sm:$0xff]
    %v106 = vld [vmem:[#allocation2 + $0xc8] sm:$0xff]
    %v107 = vld [vmem:[#allocation2 + $0xd0] sm:$0xff]
    %v108 = vld [vmem:[#allocation2 + $0xd8] sm:$0xff]
    %v109 = vld [vmem:[#allocation2 + $0xe0] sm:$0xff]
    %v110 = vld [vmem:[#allocation2 + $0xe8] sm:$0xff]
    %v111 = vld [vmem:[#allocation2 + $0xf0] sm:$0xff]
    %v112 = vld [vmem:[#allocation2 + $0xf8] sm:$0xff]
    %v113 = vld [vmem:[#allocation2 + $0x100] sm:$0xff]
    %v114 = vld [vmem:[#allocation2 + $0x108] sm:$0xff]
    %v115 = vld [vmem:[#allocation2 + $0x110] sm:$0xff]
    %v116 = vld [vmem:[#allocation2 + $0x118] sm:$0xff]
    %v117 = vld [vmem:[#allocation2 + $0x120] sm:$0xff]
    %v118 = vld [vmem:[#allocation2 + $0x128] sm:$0xff]
    %v119 = vld [vmem:[#allocation2 + $0x130] sm:$0xff]
    %v120 = vld [vmem:[#allocation2 + $0x138] sm:$0xff]
    %v121 = vld [vmem:[#allocation2 + $0x140] sm:$0xff]
    %v122 = vld [vmem:[#allocation2 + $0x148] sm:$0xff]
    %v123 = vld [vmem:[#allocation2 + $0x150] sm:$0xff]
    %v124 = vld [vmem:[#allocation2 + $0x158] sm:$0xff]
    %v125 = vld [vmem:[#allocation2 + $0x160] sm:$0xff]
    %v126 = vld [vmem:[#allocation2 + $0x168] sm:$0xff]
    %v127 = vld [vmem:[#allocation2 + $0x170] sm:$0xff]
    %v128 = vld [vmem:[#allocation2 + $0x178] sm:$0xff]
    %v129 = vld [vmem:[#allocation2 + $0x180] sm:$0xff]
    %v130 = vld [vmem:[#allocation2 + $0x188] sm:$0xff]
    %v131 = vld [vmem:[#allocation2 + $0x190] sm:$0xff]
    %v132 = vld [vmem:[#allocation2 + $0x198] sm:$0xff]
    %v133 = vld [vmem:[#allocation2 + $0x1a0] sm:$0xff]
    %v134 = vld [vmem:[#allocation2 + $0x1a8] sm:$0xff]
    %v135 = vld [vmem:[#allocation2 + $0x1b0] sm:$0xff]
    %v136 = vld [vmem:[#allocation2 + $0x1b8] sm:$0xff]
    %v137 = vld [vmem:[#allocation2 + $0x1c0] sm:$0xff]
    %v138 = vld [vmem:[#allocation2 + $0x1c8] sm:$0xff]
    %v139 = vld [vmem:[#allocation2 + $0x1d0] sm:$0xff]
    %v140 = vld [vmem:[#allocation2 + $0x1d8] sm:$0xff]
    %v141 = vld [vmem:[#allocation2 + $0x1e0] sm:$0xff]
    %v142 = vld [vmem:[#allocation2 + $0x1e8] sm:$0xff]
    %v143 = vld [vmem:[#allocation2 + $0x1f0] sm:$0xff]
    %v144 = vld [vmem:[#allocation2 + $0x1f8] sm:$0xff]
    %v145 = vld [vmem:[#allocation2 + $0x200] sm:$0xff]
    %v146 = vld [vmem:[#allocation2 + $0x208] sm:$0xff]
    %v147 = vld [vmem:[#allocation2 + $0x210] sm:$0xff]
    %v148 = vld [vmem:[#allocation2 + $0x218] sm:$0xff]
    %v149 = vld [vmem:[#allocation2 + $0x220] sm:$0xff]
    %v150 = vld [vmem:[#allocation2 + $0x228] sm:$0xff]
    %v151 = vld [vmem:[#allocation2 + $0x230] sm:$0xff]
    %v152 = vld [vmem:[#allocation2 + $0x238] sm:$0xff]
    %v153 = vld [vmem:[#allocation2 + $0x240] sm:$0xff]
    %v154 = vld [vmem:[#allocation2 + $0x248] sm:$0xff]
    %v155 = vld [vmem:[#allocation2 + $0x250] sm:$0xff]
    %v156 = vld [vmem:[#allocation2 + $0x258] sm:$0xff]
    %v157 = vld [vmem:[#allocation2 + $0x260] sm:$0xff]
    %v158 = vld [vmem:[#allocation2 + $0x268] sm:$0xff]
    %v159 = vld [vmem:[#allocation2 + $0x270] sm:$0xff]
    %v160 = vld [vmem:[#allocation2 + $0x278] sm:$0xff]
    %v161 = vld [vmem:[#allocation2 + $0x280] sm:$0xff]
    %v162 = vld [vmem:[#allocation2 + $0x288] sm:$0xff]
    %v163 = vld [vmem:[#allocation2 + $0x290] sm:$0xff]
    %v164 = vld [vmem:[#allocation2 + $0x298] sm:$0xff]
    %v165 = vld [vmem:[#allocation2 + $0x2a0] sm:$0xff]
    %v166 = vld [vmem:[#allocation2 + $0x2a8] sm:$0xff]
    %v167 = vld [vmem:[#allocation2 + $0x2b0] sm:$0xff]
    %v168 = vld [vmem:[#allocation2 + $0x2b8] sm:$0xff]
    %v169 = vld [vmem:[#allocation2 + $0x2c0] sm:$0xff]
    %v170 = vld [vmem:[#allocation2 + $0x2c8] sm:$0xff]
    %v171 = vld [vmem:[#allocation2 + $0x2d0] sm:$0xff]
    %v172 = vld [vmem:[#allocation2 + $0x2d8] sm:$0xff]
    %v173 = vld [vmem:[#allocation2 + $0x2e0] sm:$0xff]
    %v174 = vld [vmem:[#allocation2 + $0x2e8] sm:$0xff]
    %v175 = vld [vmem:[#allocation2 + $0x2f0] sm:$0xff]
    %v176 = vld [vmem:[#allocation2 + $0x2f8] sm:$0xff]
    %v177 = vld [vmem:[#allocation2 + $0x300] sm:$0xff]
    %v178 = vld [vmem:[#allocation2 + $0x308] sm:$0xff]
    %v179 = vld [vmem:[#allocation2 + $0x310] sm:$0xff]
    %v180 = vld [vmem:[#allocation2 + $0x318] sm:$0xff]
    %v181 = vld [vmem:[#allocation2 + $0x320] sm:$0xff]
    %v182 = vld [vmem:[#allocation2 + $0x328] sm:$0xff]
    %v183 = vld [vmem:[#allocation2 + $0x330] sm:$0xff]
    %v184 = vld [vmem:[#allocation2 + $0x338] sm:$0xff]
    %v185 = vld [vmem:[#allocation2 + $0x340] sm:$0xff]
    %v186 = vld [vmem:[#allocation2 + $0x348] sm:$0xff]
    %v187 = vld [vmem:[#allocation2 + $0x350] sm:$0xff]
    %v188 = vld [vmem:[#allocation2 + $0x358] sm:$0xff]
    %v189 = vld [vmem:[#allocation2 + $0x360] sm:$0xff]
    %v190 = vld [vmem:[#allocation2 + $0x368] sm:$0xff]
    %v191 = vld [vmem:[#allocation2 + $0x370] sm:$0xff]
    %v192 = vld [vmem:[#allocation2 + $0x378] sm:$0xff]
    %v193 = vld [vmem:[#allocation2 + $0x380] sm:$0xff]
    %v194 = vld [vmem:[#allocation2 + $0x388] sm:$0xff]
    %v195 = vld [vmem:[#allocation2 + $0x390] sm:$0xff]
    %v196 = vld [vmem:[#allocation2 + $0x398] sm:$0xff]
    %v197 = vld [vmem:[#allocation2 + $0x3a0] sm:$0xff]
    %v198 = vld [vmem:[#allocation2 + $0x3a8] sm:$0xff]
    %v199 = vld [vmem:[#allocation2 + $0x3b0] sm:$0xff]
    %v200 = vld [vmem:[#allocation2 + $0x3b8] sm:$0xff]
    %v201 = vld [vmem:[#allocation2 + $0x3c0] sm:$0xff]
    %v202 = vld [vmem:[#allocation2 + $0x3c8] sm:$0xff]
    %v203 = vld [vmem:[#allocation2 + $0x3d0] sm:$0xff]
    %v204 = vld [vmem:[#allocation2 + $0x3d8] sm:$0xff]
    %v205 = vld [vmem:[#allocation2 + $0x3e0] sm:$0xff]
    %v206 = vld [vmem:[#allocation2 + $0x3e8] sm:$0xff]
    %v207 = vld [vmem:[#allocation2 + $0x3f0] sm:$0xff]
    %v208 = vld [vmem:[#allocation2 + $0x3f8] sm:$0xff]
    %v209 = vld [vmem:[#allocation2 + $0x400] sm:$0xff]
    %v210 = vld [vmem:[#allocation2 + $0x408] sm:$0xff]
    %v211 = vld [vmem:[#allocation2 + $0x410] sm:$0xff]
    %v212 = vld [vmem:[#allocation2 + $0x418] sm:$0xff]
    %v213 = vld [vmem:[#allocation2 + $0x420] sm:$0xff]
    %v214 = vld [vmem:[#allocation2 + $0x428] sm:$0xff]
    %v215 = vld [vmem:[#allocation2 + $0x430] sm:$0xff]
    %v216 = vld [vmem:[#allocation2 + $0x438] sm:$0xff]
    %v217 = vld [vmem:[#allocation2 + $0x440] sm:$0xff]
    %v218 = vld [vmem:[#allocation2 + $0x448] sm:$0xff]
    %v219 = vld [vmem:[#allocation2 + $0x450] sm:$0xff]
    %v220 = vld [vmem:[#allocation2 + $0x458] sm:$0xff]
    %v221 = vld [vmem:[#allocation2 + $0x460] sm:$0xff]
    %v222 = vld [vmem:[#allocation2 + $0x468] sm:$0xff]
    %v223 = vld [vmem:[#allocation2 + $0x470] sm:$0xff]
    %v224 = vld [vmem:[#allocation2 + $0x478] sm:$0xff]
    %v225 = vld [vmem:[#allocation2 + $0x480] sm:$0xff]
    %v226 = vld [vmem:[#allocation2 + $0x488] sm:$0xff]
    %v227 = vld [vmem:[#allocation2 + $0x490] sm:$0xff]
    %v228 = vld [vmem:[#allocation2 + $0x498] sm:$0xff]
    %v229 = vld [vmem:[#allocation2 + $0x4a0] sm:$0xff]
    %v230 = vld [vmem:[#allocation2 + $0x4a8] sm:$0xff]
    %v231 = vld [vmem:[#allocation2 + $0x4b0] sm:$0xff]
    %v232 = vld [vmem:[#allocation2 + $0x4b8] sm:$0xff]
    %v233 = vld [vmem:[#allocation2 + $0x4c0] sm:$0xff]
    %v234 = vld [vmem:[#allocation2 + $0x4c8] sm:$0xff]
    %v235 = vld [vmem:[#allocation2 + $0x4d0] sm:$0xff]
    %v236 = vld [vmem:[#allocation2 + $0x4d8] sm:$0xff]
    %v237 = vld [vmem:[#allocation2 + $0x4e0] sm:$0xff]
    %v238 = vld [vmem:[#allocation2 + $0x4e8] sm:$0xff]
    %v239 = vld [vmem:[#allocation2 + $0x4f0] sm:$0xff]
    %v240 = vld [vmem:[#allocation2 + $0x4f8] sm:$0xff]
    %v241 = vld [vmem:[#allocation2 + $0x500] sm:$0xff]
    %v242 = vld [vmem:[#allocation2 + $0x508] sm:$0xff]
    %v243 = vld [vmem:[#allocation2 + $0x510] sm:$0xff]
    %v244 = vld [vmem:[#allocation2 + $0x518] sm:$0xff]
    %v245 = vld [vmem:[#allocation2 + $0x520] sm:$0xff]
    %v246 = vld [vmem:[#allocation2 + $0x528] sm:$0xff]
    %v247 = vld [vmem:[#allocation2 + $0x530] sm:$0xff]
    %v248 = vld [vmem:[#allocation2 + $0x538] sm:$0xff]
    %v249 = vld [vmem:[#allocation2 + $0x540] sm:$0xff]
    %v250 = vld [vmem:[#allocation2 + $0x548] sm:$0xff]
    %v251 = vld [vmem:[#allocation2 + $0x550] sm:$0xff]
    %v252 = vld [vmem:[#allocation2 + $0x558] sm:$0xff]
    %v253 = vld [vmem:[#allocation2 + $0x560] sm:$0xff]
    %v254 = vld [vmem:[#allocation2 + $0x568] sm:$0xff]
    %v255 = vld [vmem:[#allocation2 + $0x570] sm:$0xff]
    %v256 = vld [vmem:[#allocation2 + $0x578] sm:$0xff]
    %v257 = vld [vmem:[#allocation2 + $0x580] sm:$0xff]
    %v258 = vld [vmem:[#allocation2 + $0x588] sm:$0xff]
    %v259 = vld [vmem:[#allocation2 + $0x590] sm:$0xff]
    %v260 = vld [vmem:[#allocation2 + $0x598] sm:$0xff]
    %v261 = vld [vmem:[#allocation2 + $0x5a0] sm:$0xff]
    %v262 = vld [vmem:[#allocation2 + $0x5a8] sm:$0xff]
    %v263 = vld [vmem:[#allocation2 + $0x5b0] sm:$0xff]
    %v264 = vld [vmem:[#allocation2 + $0x5b8] sm:$0xff]
    %v265 = vld [vmem:[#allocation2 + $0x5c0] sm:$0xff]
    %v266 = vld [vmem:[#allocation2 + $0x5c8] sm:$0xff]
    %v267 = vld [vmem:[#allocation2 + $0x5d0] sm:$0xff]
    %v268 = vld [vmem:[#allocation2 + $0x5d8] sm:$0xff]
    %v269 = vld [vmem:[#allocation2 + $0x5e0] sm:$0xff]
    %v270 = vld [vmem:[#allocation2 + $0x5e8] sm:$0xff]
    %v271 = vld [vmem:[#allocation2 + $0x5f0] sm:$0xff]
    %v272 = vld [vmem:[#allocation2 + $0x5f8] sm:$0xff]
    %v273 = vld [vmem:[#allocation2 + $0x600] sm:$0xff]
    %v274 = vld [vmem:[#allocation2 + $0x608] sm:$0xff]
    %v275 = vld [vmem:[#allocation2 + $0x610] sm:$0xff]
    %v276 = vld [vmem:[#allocation2 + $0x618] sm:$0xff]
    %v277 = vld [vmem:[#allocation2 + $0x620] sm:$0xff]
    %v278 = vld [vmem:[#allocation2 + $0x628] sm:$0xff]
    %v279 = vld [vmem:[#allocation2 + $0x630] sm:$0xff]
    %v280 = vld [vmem:[#allocation2 + $0x638] sm:$0xff]
    %v281 = vld [vmem:[#allocation2 + $0x640] sm:$0xff]
    %v282 = vld [vmem:[#allocation2 + $0x648] sm:$0xff]
    %v283 = vld [vmem:[#allocation2 + $0x650] sm:$0xff]
    %v284 = vld [vmem:[#allocation2 + $0x658] sm:$0xff]
    %v285 = vld [vmem:[#allocation2 + $0x660] sm:$0xff]
    %v286 = vld [vmem:[#allocation2 + $0x668] sm:$0xff]
    %v287 = vld [vmem:[#allocation2 + $0x670] sm:$0xff]
    %v288 = vld [vmem:[#allocation2 + $0x678] sm:$0xff]
    %v289 = vld [vmem:[#allocation2 + $0x680] sm:$0xff]
    %v290 = vld [vmem:[#allocation2 + $0x688] sm:$0xff]
    %v291 = vld [vmem:[#allocation2 + $0x690] sm:$0xff]
    %v292 = vld [vmem:[#allocation2 + $0x698] sm:$0xff]
    %v293 = vld [vmem:[#allocation2 + $0x6a0] sm:$0xff]
    %v294 = vld [vmem:[#allocation2 + $0x6a8] sm:$0xff]
    %v295 = vld [vmem:[#allocation2 + $0x6b0] sm:$0xff]
    %v296 = vld [vmem:[#allocation2 + $0x6b8] sm:$0xff]
    %v297 = vld [vmem:[#allocation2 + $0x6c0] sm:$0xff]
    %v298 = vld [vmem:[#allocation2 + $0x6c8] sm:$0xff]
    %v299 = vld [vmem:[#allocation2 + $0x6d0] sm:$0xff]
    %v300 = vld [vmem:[#allocation2 + $0x6d8] sm:$0xff]
    %v301 = vld [vmem:[#allocation2 + $0x6e0] sm:$0xff]
    %v302 = vld [vmem:[#allocation2 + $0x6e8] sm:$0xff]
    %v303 = vld [vmem:[#allocation2 + $0x6f0] sm:$0xff]
    %v304 = vld [vmem:[#allocation2 + $0x6f8] sm:$0xff]
    %v305 = vld [vmem:[%s3] sm:$0xf]
    %v307 = vlaneseq
    %v308 = vshrl.u32 %v307, 7
    %v309 = vsub.s32 0, %v308
    %v310 = vrot.slane %v305, %v309
    %v311 = vlaneseq
    %v312 = vshrl.u32 %v311, 7
    %v313 = vsub.s32 1, %v312
    %v314 = vrot.slane %v305, %v313
    %v315 = vlaneseq
    %v316 = vshrl.u32 %v315, 7
    %v317 = vsub.s32 2, %v316
    %v318 = vrot.slane %v305, %v317
    %v319 = vlaneseq
    %v320 = vshrl.u32 %v319, 7
    %v321 = vsub.s32 3, %v320
    %v322 = vrot.slane %v305, %v321
    %v551 = vunpack.c.l.b16 %v81
    %v552 = vunpack.c.h.b16 %v81
    %v553 = vunpack.c.l.b16 %v82
    %v554 = vunpack.c.h.b16 %v82
    %v555 = vunpack.c.l.b16 %v83
    %v556 = vunpack.c.h.b16 %v83
    %v557 = vunpack.c.l.b16 %v84
    %v558 = vunpack.c.h.b16 %v84
    %v559 = vunpack.c.l.b16 %v85
    %v560 = vunpack.c.h.b16 %v85
    %v561 = vunpack.c.l.b16 %v86
    %v562 = vunpack.c.h.b16 %v86
    %v563 = vunpack.c.l.b16 %v87
    %v564 = vunpack.c.h.b16 %v87
    %v565 = vunpack.c.l.b16 %v88
    %v566 = vunpack.c.h.b16 %v88
    %v567 = vunpack.c.l.b16 %v89
    %v568 = vunpack.c.h.b16 %v89
    %v569 = vunpack.c.l.b16 %v90
    %v570 = vunpack.c.h.b16 %v90
    %v571 = vunpack.c.l.b16 %v91
    %v572 = vunpack.c.h.b16 %v91
    %v573 = vunpack.c.l.b16 %v92
    %v574 = vunpack.c.h.b16 %v92
    %v575 = vunpack.c.l.b16 %v93
    %v576 = vunpack.c.h.b16 %v93
    %v577 = vunpack.c.l.b16 %v94
    %v578 = vunpack.c.h.b16 %v94
    %v579 = vunpack.c.l.b16 %v95
    %v580 = vunpack.c.h.b16 %v95
    %v581 = vunpack.c.l.b16 %v96
    %v582 = vunpack.c.h.b16 %v96
    %v583 = vunpack.c.l.b16 %v97
    %v584 = vunpack.c.h.b16 %v97
    %v585 = vunpack.c.l.b16 %v98
    %v586 = vunpack.c.h.b16 %v98
    %v587 = vunpack.c.l.b16 %v99
    %v588 = vunpack.c.h.b16 %v99
    %v589 = vunpack.c.l.b16 %v100
    %v590 = vunpack.c.h.b16 %v100
    %v591 = vunpack.c.l.b16 %v101
    %v592 = vunpack.c.h.b16 %v101
    %v593 = vunpack.c.l.b16 %v102
    %v594 = vunpack.c.h.b16 %v102
    %v595 = vunpack.c.l.b16 %v103
    %v596 = vunpack.c.h.b16 %v103
    %v597 = vunpack.c.l.b16 %v104
    %v598 = vunpack.c.h.b16 %v104
    %v599 = vunpack.c.l.b16 %v105
    %v600 = vunpack.c.h.b16 %v105
    %v601 = vunpack.c.l.b16 %v106
    %v602 = vunpack.c.h.b16 %v106
    %v603 = vunpack.c.l.b16 %v107
    %v604 = vunpack.c.h.b16 %v107
    %v605 = vunpack.c.l.b16 %v108
    %v606 = vunpack.c.h.b16 %v108
    %v607 = vunpack.c.l.b16 %v109
    %v608 = vunpack.c.h.b16 %v109
    %v609 = vunpack.c.l.b16 %v110
    %v610 = vunpack.c.h.b16 %v110
    %v611 = vunpack.c.l.b16 %v111
    %v612 = vunpack.c.h.b16 %v111
    %v613 = vunpack.c.l.b16 %v112
    %v614 = vunpack.c.h.b16 %v112
    %v615 = vunpack.c.l.b16 %v113
    %v616 = vunpack.c.h.b16 %v113
    %v617 = vunpack.c.l.b16 %v114
    %v618 = vunpack.c.h.b16 %v114
    %v619 = vunpack.c.l.b16 %v115
    %v620 = vunpack.c.h.b16 %v115
    %v621 = vunpack.c.l.b16 %v116
    %v622 = vunpack.c.h.b16 %v116
    %v623 = vunpack.c.l.b16 %v117
    %v624 = vunpack.c.h.b16 %v117
    %v625 = vunpack.c.l.b16 %v118
    %v626 = vunpack.c.h.b16 %v118
    %v627 = vunpack.c.l.b16 %v119
    %v628 = vunpack.c.h.b16 %v119
    %v629 = vunpack.c.l.b16 %v120
    %v630 = vunpack.c.h.b16 %v120
    %v631 = vunpack.c.l.b16 %v121
    %v632 = vunpack.c.h.b16 %v121
    %v633 = vunpack.c.l.b16 %v122
    %v634 = vunpack.c.h.b16 %v122
    %v635 = vunpack.c.l.b16 %v123
    %v636 = vunpack.c.h.b16 %v123
    %v637 = vunpack.c.l.b16 %v124
    %v638 = vunpack.c.h.b16 %v124
    %v639 = vunpack.c.l.b16 %v125
    %v640 = vunpack.c.h.b16 %v125
    %v641 = vunpack.c.l.b16 %v126
    %v642 = vunpack.c.h.b16 %v126
    %v643 = vunpack.c.l.b16 %v127
    %v644 = vunpack.c.h.b16 %v127
    %v645 = vunpack.c.l.b16 %v128
    %v646 = vunpack.c.h.b16 %v128
    %v647 = vunpack.c.l.b16 %v129
    %v648 = vunpack.c.h.b16 %v129
    %v649 = vunpack.c.l.b16 %v130
    %v650 = vunpack.c.h.b16 %v130
    %v651 = vunpack.c.l.b16 %v131
    %v652 = vunpack.c.h.b16 %v131
    %v653 = vunpack.c.l.b16 %v132
    %v654 = vunpack.c.h.b16 %v132
    %v655 = vunpack.c.l.b16 %v133
    %v656 = vunpack.c.h.b16 %v133
    %v657 = vunpack.c.l.b16 %v134
    %v658 = vunpack.c.h.b16 %v134
    %v659 = vunpack.c.l.b16 %v135
    %v660 = vunpack.c.h.b16 %v135
    %v661 = vunpack.c.l.b16 %v136
    %v662 = vunpack.c.h.b16 %v136
    %v663 = vunpack.c.l.b16 %v137
    %v664 = vunpack.c.h.b16 %v137
    %v665 = vunpack.c.l.b16 %v138
    %v666 = vunpack.c.h.b16 %v138
    %v667 = vunpack.c.l.b16 %v139
    %v668 = vunpack.c.h.b16 %v139
    %v669 = vunpack.c.l.b16 %v140
    %v670 = vunpack.c.h.b16 %v140
    %v671 = vunpack.c.l.b16 %v141
    %v672 = vunpack.c.h.b16 %v141
    %v673 = vunpack.c.l.b16 %v142
    %v674 = vunpack.c.h.b16 %v142
    %v675 = vunpack.c.l.b16 %v143
    %v676 = vunpack.c.h.b16 %v143
    %v677 = vunpack.c.l.b16 %v144
    %v678 = vunpack.c.h.b16 %v144
    %v679 = vunpack.c.l.b16 %v145
    %v680 = vunpack.c.h.b16 %v145
    %v681 = vunpack.c.l.b16 %v146
    %v682 = vunpack.c.h.b16 %v146
    %v683 = vunpack.c.l.b16 %v147
    %v684 = vunpack.c.h.b16 %v147
    %v685 = vunpack.c.l.b16 %v148
    %v686 = vunpack.c.h.b16 %v148
    %v687 = vunpack.c.l.b16 %v149
    %v688 = vunpack.c.h.b16 %v149
    %v689 = vunpack.c.l.b16 %v150
    %v690 = vunpack.c.h.b16 %v150
    %v691 = vunpack.c.l.b16 %v151
    %v692 = vunpack.c.h.b16 %v151
    %v693 = vunpack.c.l.b16 %v152
    %v694 = vunpack.c.h.b16 %v152
    %v695 = vunpack.c.l.b16 %v153
    %v696 = vunpack.c.h.b16 %v153
    %v697 = vunpack.c.l.b16 %v154
    %v698 = vunpack.c.h.b16 %v154
    %v699 = vunpack.c.l.b16 %v155
    %v700 = vunpack.c.h.b16 %v155
    %v701 = vunpack.c.l.b16 %v156
    %v702 = vunpack.c.h.b16 %v156
    %v703 = vunpack.c.l.b16 %v157
    %v704 = vunpack.c.h.b16 %v157
    %v705 = vunpack.c.l.b16 %v158
    %v706 = vunpack.c.h.b16 %v158
    %v707 = vunpack.c.l.b16 %v159
    %v708 = vunpack.c.h.b16 %v159
    %v709 = vunpack.c.l.b16 %v160
    %v710 = vunpack.c.h.b16 %v160
    %v711 = vunpack.c.l.b16 %v161
    %v712 = vunpack.c.h.b16 %v161
    %v713 = vunpack.c.l.b16 %v162
    %v714 = vunpack.c.h.b16 %v162
    %v715 = vunpack.c.l.b16 %v163
    %v716 = vunpack.c.h.b16 %v163
    %v717 = vunpack.c.l.b16 %v164
    %v718 = vunpack.c.h.b16 %v164
    %v719 = vunpack.c.l.b16 %v165
    %v720 = vunpack.c.h.b16 %v165
    %v721 = vunpack.c.l.b16 %v166
    %v722 = vunpack.c.h.b16 %v166
    %v723 = vunpack.c.l.b16 %v167
    %v724 = vunpack.c.h.b16 %v167
    %v725 = vunpack.c.l.b16 %v168
    %v726 = vunpack.c.h.b16 %v168
    %v727 = vunpack.c.l.b16 %v169
    %v728 = vunpack.c.h.b16 %v169
    %v729 = vunpack.c.l.b16 %v170
    %v730 = vunpack.c.h.b16 %v170
    %v731 = vunpack.c.l.b16 %v171
    %v732 = vunpack.c.h.b16 %v171
    %v733 = vunpack.c.l.b16 %v172
    %v734 = vunpack.c.h.b16 %v172
    %v735 = vunpack.c.l.b16 %v173
    %v736 = vunpack.c.h.b16 %v173
    %v737 = vunpack.c.l.b16 %v174
    %v738 = vunpack.c.h.b16 %v174
    %v739 = vunpack.c.l.b16 %v175
    %v740 = vunpack.c.h.b16 %v175
    %v741 = vunpack.c.l.b16 %v176
    %v742 = vunpack.c.h.b16 %v176
    %v743 = vunpack.c.l.b16 %v177
    %v744 = vunpack.c.h.b16 %v177
    %v745 = vunpack.c.l.b16 %v178
    %v746 = vunpack.c.h.b16 %v178
    %v747 = vunpack.c.l.b16 %v179
    %v748 = vunpack.c.h.b16 %v179
    %v749 = vunpack.c.l.b16 %v180
    %v750 = vunpack.c.h.b16 %v180
    %v751 = vunpack.c.l.b16 %v181
    %v752 = vunpack.c.h.b16 %v181
    %v753 = vunpack.c.l.b16 %v182
    %v754 = vunpack.c.h.b16 %v182
    %v755 = vunpack.c.l.b16 %v183
    %v756 = vunpack.c.h.b16 %v183
    %v757 = vunpack.c.l.b16 %v184
    %v758 = vunpack.c.h.b16 %v184
    %v759 = vunpack.c.l.b16 %v185
    %v760 = vunpack.c.h.b16 %v185
    %v761 = vunpack.c.l.b16 %v186
    %v762 = vunpack.c.h.b16 %v186
    %v763 = vunpack.c.l.b16 %v187
    %v764 = vunpack.c.h.b16 %v187
    %v765 = vunpack.c.l.b16 %v188
    %v766 = vunpack.c.h.b16 %v188
    %v767 = vunpack.c.l.b16 %v189
    %v768 = vunpack.c.h.b16 %v189
    %v769 = vunpack.c.l.b16 %v190
    %v770 = vunpack.c.h.b16 %v190
    %v771 = vunpack.c.l.b16 %v191
    %v772 = vunpack.c.h.b16 %v191
    %v773 = vunpack.c.l.b16 %v192
    %v774 = vunpack.c.h.b16 %v192
    %v775 = vunpack.c.l.b16 %v193
    %v776 = vunpack.c.h.b16 %v193
    %v777 = vunpack.c.l.b16 %v194
    %v778 = vunpack.c.h.b16 %v194
    %v779 = vunpack.c.l.b16 %v195
    %v780 = vunpack.c.h.b16 %v195
    %v781 = vunpack.c.l.b16 %v196
    %v782 = vunpack.c.h.b16 %v196
    %v783 = vunpack.c.l.b16 %v197
    %v784 = vunpack.c.h.b16 %v197
    %v785 = vunpack.c.l.b16 %v198
    %v786 = vunpack.c.h.b16 %v198
    %v787 = vunpack.c.l.b16 %v199
    %v788 = vunpack.c.h.b16 %v199
    %v789 = vunpack.c.l.b16 %v200
    %v790 = vunpack.c.h.b16 %v200
    %v791 = vunpack.c.l.b16 %v201
    %v792 = vunpack.c.h.b16 %v201
    %v793 = vunpack.c.l.b16 %v202
    %v794 = vunpack.c.h.b16 %v202
    %v795 = vunpack.c.l.b16 %v203
    %v796 = vunpack.c.h.b16 %v203
    %v797 = vunpack.c.l.b16 %v204
    %v798 = vunpack.c.h.b16 %v204
    %v799 = vunpack.c.l.b16 %v205
    %v800 = vunpack.c.h.b16 %v205
    %v801 = vunpack.c.l.b16 %v206
    %v802 = vunpack.c.h.b16 %v206
    %v803 = vunpack.c.l.b16 %v207
    %v804 = vunpack.c.h.b16 %v207
    %v805 = vunpack.c.l.b16 %v208
    %v806 = vunpack.c.h.b16 %v208
    %v807 = vunpack.c.l.b16 %v209
    %v808 = vunpack.c.h.b16 %v209
    %v809 = vunpack.c.l.b16 %v210
    %v810 = vunpack.c.h.b16 %v210
    %v811 = vunpack.c.l.b16 %v211
    %v812 = vunpack.c.h.b16 %v211
    %v813 = vunpack.c.l.b16 %v212
    %v814 = vunpack.c.h.b16 %v212
    %v815 = vunpack.c.l.b16 %v213
    %v816 = vunpack.c.h.b16 %v213
    %v817 = vunpack.c.l.b16 %v214
    %v818 = vunpack.c.h.b16 %v214
    %v819 = vunpack.c.l.b16 %v215
    %v820 = vunpack.c.h.b16 %v215
    %v821 = vunpack.c.l.b16 %v216
    %v822 = vunpack.c.h.b16 %v216
    %v823 = vunpack.c.l.b16 %v217
    %v824 = vunpack.c.h.b16 %v217
    %v825 = vunpack.c.l.b16 %v218
    %v826 = vunpack.c.h.b16 %v218
    %v827 = vunpack.c.l.b16 %v219
    %v828 = vunpack.c.h.b16 %v219
    %v829 = vunpack.c.l.b16 %v220
    %v830 = vunpack.c.h.b16 %v220
    %v831 = vunpack.c.l.b16 %v221
    %v832 = vunpack.c.h.b16 %v221
    %v833 = vunpack.c.l.b16 %v222
    %v834 = vunpack.c.h.b16 %v222
    %v835 = vunpack.c.l.b16 %v223
    %v836 = vunpack.c.h.b16 %v223
    %v837 = vunpack.c.l.b16 %v224
    %v838 = vunpack.c.h.b16 %v224
    %v839 = vunpack.c.l.b16 %v225
    %v840 = vunpack.c.h.b16 %v225
    %v841 = vunpack.c.l.b16 %v226
    %v842 = vunpack.c.h.b16 %v226
    %v843 = vunpack.c.l.b16 %v227
    %v844 = vunpack.c.h.b16 %v227
    %v845 = vunpack.c.l.b16 %v228
    %v846 = vunpack.c.h.b16 %v228
    %v847 = vunpack.c.l.b16 %v229
    %v848 = vunpack.c.h.b16 %v229
    %v849 = vunpack.c.l.b16 %v230
    %v850 = vunpack.c.h.b16 %v230
    %v851 = vunpack.c.l.b16 %v231
    %v852 = vunpack.c.h.b16 %v231
    %v853 = vunpack.c.l.b16 %v232
    %v854 = vunpack.c.h.b16 %v232
    %v855 = vunpack.c.l.b16 %v233
    %v856 = vunpack.c.h.b16 %v233
    %v857 = vunpack.c.l.b16 %v234
    %v858 = vunpack.c.h.b16 %v234
    %v859 = vunpack.c.l.b16 %v235
    %v860 = vunpack.c.h.b16 %v235
    %v861 = vunpack.c.l.b16 %v236
    %v862 = vunpack.c.h.b16 %v236
    %v863 = vunpack.c.l.b16 %v237
    %v864 = vunpack.c.h.b16 %v237
    %v865 = vunpack.c.l.b16 %v238
    %v866 = vunpack.c.h.b16 %v238
    %v867 = vunpack.c.l.b16 %v239
    %v868 = vunpack.c.h.b16 %v239
    %v869 = vunpack.c.l.b16 %v240
    %v870 = vunpack.c.h.b16 %v240
    %v871 = vunpack.c.l.b16 %v241
    %v872 = vunpack.c.h.b16 %v241
    %v873 = vunpack.c.l.b16 %v242
    %v874 = vunpack.c.h.b16 %v242
    %v875 = vunpack.c.l.b16 %v243
    %v876 = vunpack.c.h.b16 %v243
    %v877 = vunpack.c.l.b16 %v244
    %v878 = vunpack.c.h.b16 %v244
    %v879 = vunpack.c.l.b16 %v245
    %v880 = vunpack.c.h.b16 %v245
    %v881 = vunpack.c.l.b16 %v246
    %v882 = vunpack.c.h.b16 %v246
    %v883 = vunpack.c.l.b16 %v247
    %v884 = vunpack.c.h.b16 %v247
    %v885 = vunpack.c.l.b16 %v248
    %v886 = vunpack.c.h.b16 %v248
    %v887 = vunpack.c.l.b16 %v249
    %v888 = vunpack.c.h.b16 %v249
    %v889 = vunpack.c.l.b16 %v250
    %v890 = vunpack.c.h.b16 %v250
    %v891 = vunpack.c.l.b16 %v251
    %v892 = vunpack.c.h.b16 %v251
    %v893 = vunpack.c.l.b16 %v252
    %v894 = vunpack.c.h.b16 %v252
    %v895 = vunpack.c.l.b16 %v253
    %v896 = vunpack.c.h.b16 %v253
    %v897 = vunpack.c.l.b16 %v254
    %v898 = vunpack.c.h.b16 %v254
    %v899 = vunpack.c.l.b16 %v255
    %v900 = vunpack.c.h.b16 %v255
    %v901 = vunpack.c.l.b16 %v256
    %v902 = vunpack.c.h.b16 %v256
    %v903 = vunpack.c.l.b16 %v257
    %v904 = vunpack.c.h.b16 %v257
    %v905 = vunpack.c.l.b16 %v258
    %v906 = vunpack.c.h.b16 %v258
    %v907 = vunpack.c.l.b16 %v259
    %v908 = vunpack.c.h.b16 %v259
    %v909 = vunpack.c.l.b16 %v260
    %v910 = vunpack.c.h.b16 %v260
    %v911 = vunpack.c.l.b16 %v261
    %v912 = vunpack.c.h.b16 %v261
    %v913 = vunpack.c.l.b16 %v262
    %v914 = vunpack.c.h.b16 %v262
    %v915 = vunpack.c.l.b16 %v263
    %v916 = vunpack.c.h.b16 %v263
    %v917 = vunpack.c.l.b16 %v264
    %v918 = vunpack.c.h.b16 %v264
    %v919 = vunpack.c.l.b16 %v265
    %v920 = vunpack.c.h.b16 %v265
    %v921 = vunpack.c.l.b16 %v266
    %v922 = vunpack.c.h.b16 %v266
    %v923 = vunpack.c.l.b16 %v267
    %v924 = vunpack.c.h.b16 %v267
    %v925 = vunpack.c.l.b16 %v268
    %v926 = vunpack.c.h.b16 %v268
    %v927 = vunpack.c.l.b16 %v269
    %v928 = vunpack.c.h.b16 %v269
    %v929 = vunpack.c.l.b16 %v270
    %v930 = vunpack.c.h.b16 %v270
    %v931 = vunpack.c.l.b16 %v271
    %v932 = vunpack.c.h.b16 %v271
    %v933 = vunpack.c.l.b16 %v272
    %v934 = vunpack.c.h.b16 %v272
    %v935 = vunpack.c.l.b16 %v273
    %v936 = vunpack.c.h.b16 %v273
    %v937 = vunpack.c.l.b16 %v274
    %v938 = vunpack.c.h.b16 %v274
    %v939 = vunpack.c.l.b16 %v275
    %v940 = vunpack.c.h.b16 %v275
    %v941 = vunpack.c.l.b16 %v276
    %v942 = vunpack.c.h.b16 %v276
    %v943 = vunpack.c.l.b16 %v277
    %v944 = vunpack.c.h.b16 %v277
    %v945 = vunpack.c.l.b16 %v278
    %v946 = vunpack.c.h.b16 %v278
    %v947 = vunpack.c.l.b16 %v279
    %v948 = vunpack.c.h.b16 %v279
    %v949 = vunpack.c.l.b16 %v280
    %v950 = vunpack.c.h.b16 %v280
    %v951 = vunpack.c.l.b16 %v281
    %v952 = vunpack.c.h.b16 %v281
    %v953 = vunpack.c.l.b16 %v282
    %v954 = vunpack.c.h.b16 %v282
    %v955 = vunpack.c.l.b16 %v283
    %v956 = vunpack.c.h.b16 %v283
    %v957 = vunpack.c.l.b16 %v284
    %v958 = vunpack.c.h.b16 %v284
    %v959 = vunpack.c.l.b16 %v285
    %v960 = vunpack.c.h.b16 %v285
    %v961 = vunpack.c.l.b16 %v286
    %v962 = vunpack.c.h.b16 %v286
    %v963 = vunpack.c.l.b16 %v287
    %v964 = vunpack.c.h.b16 %v287
    %v965 = vunpack.c.l.b16 %v288
    %v966 = vunpack.c.h.b16 %v288
    %v967 = vunpack.c.l.b16 %v289
    %v968 = vunpack.c.h.b16 %v289
    %v969 = vunpack.c.l.b16 %v290
    %v970 = vunpack.c.h.b16 %v290
    %v971 = vunpack.c.l.b16 %v291
    %v972 = vunpack.c.h.b16 %v291
    %v973 = vunpack.c.l.b16 %v292
    %v974 = vunpack.c.h.b16 %v292
    %v975 = vunpack.c.l.b16 %v293
    %v976 = vunpack.c.h.b16 %v293
    %v977 = vunpack.c.l.b16 %v294
    %v978 = vunpack.c.h.b16 %v294
    %v979 = vunpack.c.l.b16 %v295
    %v980 = vunpack.c.h.b16 %v295
    %v981 = vunpack.c.l.b16 %v296
    %v982 = vunpack.c.h.b16 %v296
    %v983 = vunpack.c.l.b16 %v297
    %v984 = vunpack.c.h.b16 %v297
    %v985 = vunpack.c.l.b16 %v298
    %v986 = vunpack.c.h.b16 %v298
    %v987 = vunpack.c.l.b16 %v299
    %v988 = vunpack.c.h.b16 %v299
    %v989 = vunpack.c.l.b16 %v300
    %v990 = vunpack.c.h.b16 %v300
    %v991 = vunpack.c.l.b16 %v301
    %v992 = vunpack.c.h.b16 %v301
    %v993 = vunpack.c.l.b16 %v302
    %v994 = vunpack.c.h.b16 %v302
    %v995 = vunpack.c.l.b16 %v303
    %v996 = vunpack.c.h.b16 %v303
    %v997 = vunpack.c.l.b16 %v304
    %v998 = vunpack.c.h.b16 %v304
    %v999 = vpack.c.b16 %v555, %v551
    %v1000 = vpack.c.b16 %v556, %v552
    %v1001 = vpack.c.b16 %v557, %v553
    %v1002 = vpack.c.b16 %v558, %v554
    %v1003 = vpack.c.b16 %v563, %v559
    %v1004 = vpack.c.b16 %v564, %v560
    %v1005 = vpack.c.b16 %v565, %v561
    %v1006 = vpack.c.b16 %v566, %v562
    %v1007 = vpack.c.b16 %v571, %v567
    %v1008 = vpack.c.b16 %v572, %v568
    %v1009 = vpack.c.b16 %v573, %v569
    %v1010 = vpack.c.b16 %v574, %v570
    %v1011 = vpack.c.b16 %v579, %v575
    %v1012 = vpack.c.b16 %v580, %v576
    %v1013 = vpack.c.b16 %v581, %v577
    %v1014 = vpack.c.b16 %v582, %v578
    %v1015 = vpack.c.b16 %v587, %v583
    %v1016 = vpack.c.b16 %v588, %v584
    %v1017 = vpack.c.b16 %v589, %v585
    %v1018 = vpack.c.b16 %v590, %v586
    %v1019 = vpack.c.b16 %v595, %v591
    %v1020 = vpack.c.b16 %v596, %v592
    %v1021 = vpack.c.b16 %v597, %v593
    %v1022 = vpack.c.b16 %v598, %v594
    %v1023 = vpack.c.b16 %v603, %v599
    %v1024 = vpack.c.b16 %v604, %v600
    %v1025 = vpack.c.b16 %v605, %v601
    %v1026 = vpack.c.b16 %v606, %v602
    %v1027 = vpack.c.b16 %v611, %v607
    %v1028 = vpack.c.b16 %v612, %v608
    %v1029 = vpack.c.b16 %v613, %v609
    %v1030 = vpack.c.b16 %v614, %v610
    %v1031 = vpack.c.b16 %v619, %v615
    %v1032 = vpack.c.b16 %v620, %v616
    %v1033 = vpack.c.b16 %v621, %v617
    %v1034 = vpack.c.b16 %v622, %v618
    %v1035 = vpack.c.b16 %v627, %v623
    %v1036 = vpack.c.b16 %v628, %v624
    %v1037 = vpack.c.b16 %v629, %v625
    %v1038 = vpack.c.b16 %v630, %v626
    %v1039 = vpack.c.b16 %v635, %v631
    %v1040 = vpack.c.b16 %v636, %v632
    %v1041 = vpack.c.b16 %v637, %v633
    %v1042 = vpack.c.b16 %v638, %v634
    %v1043 = vpack.c.b16 %v643, %v639
    %v1044 = vpack.c.b16 %v644, %v640
    %v1045 = vpack.c.b16 %v645, %v641
    %v1046 = vpack.c.b16 %v646, %v642
    %v1047 = vpack.c.b16 %v651, %v647
    %v1048 = vpack.c.b16 %v652, %v648
    %v1049 = vpack.c.b16 %v653, %v649
    %v1050 = vpack.c.b16 %v654, %v650
    %v1051 = vpack.c.b16 %v659, %v655
    %v1052 = vpack.c.b16 %v660, %v656
    %v1053 = vpack.c.b16 %v661, %v657
    %v1054 = vpack.c.b16 %v662, %v658
    %v1055 = vpack.c.b16 %v667, %v663
    %v1056 = vpack.c.b16 %v668, %v664
    %v1057 = vpack.c.b16 %v669, %v665
    %v1058 = vpack.c.b16 %v670, %v666
    %v1059 = vpack.c.b16 %v675, %v671
    %v1060 = vpack.c.b16 %v676, %v672
    %v1061 = vpack.c.b16 %v677, %v673
    %v1062 = vpack.c.b16 %v678, %v674
    %v1063 = vpack.c.b16 %v683, %v679
    %v1064 = vpack.c.b16 %v684, %v680
    %v1065 = vpack.c.b16 %v685, %v681
    %v1066 = vpack.c.b16 %v686, %v682
    %v1067 = vpack.c.b16 %v691, %v687
    %v1068 = vpack.c.b16 %v692, %v688
    %v1069 = vpack.c.b16 %v693, %v689
    %v1070 = vpack.c.b16 %v694, %v690
    %v1071 = vpack.c.b16 %v699, %v695
    %v1072 = vpack.c.b16 %v700, %v696
    %v1073 = vpack.c.b16 %v701, %v697
    %v1074 = vpack.c.b16 %v702, %v698
    %v1075 = vpack.c.b16 %v707, %v703
    %v1076 = vpack.c.b16 %v708, %v704
    %v1077 = vpack.c.b16 %v709, %v705
    %v1078 = vpack.c.b16 %v710, %v706
    %v1079 = vpack.c.b16 %v715, %v711
    %v1080 = vpack.c.b16 %v716, %v712
    %v1081 = vpack.c.b16 %v717, %v713
    %v1082 = vpack.c.b16 %v718, %v714
    %v1083 = vpack.c.b16 %v723, %v719
    %v1084 = vpack.c.b16 %v724, %v720
    %v1085 = vpack.c.b16 %v725, %v721
    %v1086 = vpack.c.b16 %v726, %v722
    %v1087 = vpack.c.b16 %v731, %v727
    %v1088 = vpack.c.b16 %v732, %v728
    %v1089 = vpack.c.b16 %v733, %v729
    %v1090 = vpack.c.b16 %v734, %v730
    %v1091 = vpack.c.b16 %v739, %v735
    %v1092 = vpack.c.b16 %v740, %v736
    %v1093 = vpack.c.b16 %v741, %v737
    %v1094 = vpack.c.b16 %v742, %v738
    %v1095 = vpack.c.b16 %v747, %v743
    %v1096 = vpack.c.b16 %v748, %v744
    %v1097 = vpack.c.b16 %v749, %v745
    %v1098 = vpack.c.b16 %v750, %v746
    %v1099 = vpack.c.b16 %v755, %v751
    %v1100 = vpack.c.b16 %v756, %v752
    %v1101 = vpack.c.b16 %v757, %v753
    %v1102 = vpack.c.b16 %v758, %v754
    %v1103 = vpack.c.b16 %v763, %v759
    %v1104 = vpack.c.b16 %v764, %v760
    %v1105 = vpack.c.b16 %v765, %v761
    %v1106 = vpack.c.b16 %v766, %v762
    %v1107 = vpack.c.b16 %v771, %v767
    %v1108 = vpack.c.b16 %v772, %v768
    %v1109 = vpack.c.b16 %v773, %v769
    %v1110 = vpack.c.b16 %v774, %v770
    %v1111 = vpack.c.b16 %v779, %v775
    %v1112 = vpack.c.b16 %v780, %v776
    %v1113 = vpack.c.b16 %v781, %v777
    %v1114 = vpack.c.b16 %v782, %v778
    %v1115 = vpack.c.b16 %v787, %v783
    %v1116 = vpack.c.b16 %v788, %v784
    %v1117 = vpack.c.b16 %v789, %v785
    %v1118 = vpack.c.b16 %v790, %v786
    %v1119 = vpack.c.b16 %v795, %v791
    %v1120 = vpack.c.b16 %v796, %v792
    %v1121 = vpack.c.b16 %v797, %v793
    %v1122 = vpack.c.b16 %v798, %v794
    %v1123 = vpack.c.b16 %v803, %v799
    %v1124 = vpack.c.b16 %v804, %v800
    %v1125 = vpack.c.b16 %v805, %v801
    %v1126 = vpack.c.b16 %v806, %v802
    %v1127 = vpack.c.b16 %v811, %v807
    %v1128 = vpack.c.b16 %v812, %v808
    %v1129 = vpack.c.b16 %v813, %v809
    %v1130 = vpack.c.b16 %v814, %v810
    %v1131 = vpack.c.b16 %v819, %v815
    %v1132 = vpack.c.b16 %v820, %v816
    %v1133 = vpack.c.b16 %v821, %v817
    %v1134 = vpack.c.b16 %v822, %v818
    %v1135 = vpack.c.b16 %v827, %v823
    %v1136 = vpack.c.b16 %v828, %v824
    %v1137 = vpack.c.b16 %v829, %v825
    %v1138 = vpack.c.b16 %v830, %v826
    %v1139 = vpack.c.b16 %v835, %v831
    %v1140 = vpack.c.b16 %v836, %v832
    %v1141 = vpack.c.b16 %v837, %v833
    %v1142 = vpack.c.b16 %v838, %v834
    %v1143 = vpack.c.b16 %v843, %v839
    %v1144 = vpack.c.b16 %v844, %v840
    %v1145 = vpack.c.b16 %v845, %v841
    %v1146 = vpack.c.b16 %v846, %v842
    %v1147 = vpack.c.b16 %v851, %v847
    %v1148 = vpack.c.b16 %v852, %v848
    %v1149 = vpack.c.b16 %v853, %v849
    %v1150 = vpack.c.b16 %v854, %v850
    %v1151 = vpack.c.b16 %v859, %v855
    %v1152 = vpack.c.b16 %v860, %v856
    %v1153 = vpack.c.b16 %v861, %v857
    %v1154 = vpack.c.b16 %v862, %v858
    %v1155 = vpack.c.b16 %v867, %v863
    %v1156 = vpack.c.b16 %v868, %v864
    %v1157 = vpack.c.b16 %v869, %v865
    %v1158 = vpack.c.b16 %v870, %v866
    %v1159 = vpack.c.b16 %v875, %v871
    %v1160 = vpack.c.b16 %v876, %v872
    %v1161 = vpack.c.b16 %v877, %v873
    %v1162 = vpack.c.b16 %v878, %v874
    %v1163 = vpack.c.b16 %v883, %v879
    %v1164 = vpack.c.b16 %v884, %v880
    %v1165 = vpack.c.b16 %v885, %v881
    %v1166 = vpack.c.b16 %v886, %v882
    %v1167 = vpack.c.b16 %v891, %v887
    %v1168 = vpack.c.b16 %v892, %v888
    %v1169 = vpack.c.b16 %v893, %v889
    %v1170 = vpack.c.b16 %v894, %v890
    %v1171 = vpack.c.b16 %v899, %v895
    %v1172 = vpack.c.b16 %v900, %v896
    %v1173 = vpack.c.b16 %v901, %v897
    %v1174 = vpack.c.b16 %v902, %v898
    %v1175 = vpack.c.b16 %v907, %v903
    %v1176 = vpack.c.b16 %v908, %v904
    %v1177 = vpack.c.b16 %v909, %v905
    %v1178 = vpack.c.b16 %v910, %v906
    %v1179 = vpack.c.b16 %v915, %v911
    %v1180 = vpack.c.b16 %v916, %v912
    %v1181 = vpack.c.b16 %v917, %v913
    %v1182 = vpack.c.b16 %v918, %v914
    %v1183 = vpack.c.b16 %v923, %v919
    %v1184 = vpack.c.b16 %v924, %v920
    %v1185 = vpack.c.b16 %v925, %v921
    %v1186 = vpack.c.b16 %v926, %v922
    %v1187 = vpack.c.b16 %v931, %v927
    %v1188 = vpack.c.b16 %v932, %v928
    %v1189 = vpack.c.b16 %v933, %v929
    %v1190 = vpack.c.b16 %v934, %v930
    %v1191 = vpack.c.b16 %v939, %v935
    %v1192 = vpack.c.b16 %v940, %v936
    %v1193 = vpack.c.b16 %v941, %v937
    %v1194 = vpack.c.b16 %v942, %v938
    %v1195 = vpack.c.b16 %v947, %v943
    %v1196 = vpack.c.b16 %v948, %v944
    %v1197 = vpack.c.b16 %v949, %v945
    %v1198 = vpack.c.b16 %v950, %v946
    %v1199 = vpack.c.b16 %v955, %v951
    %v1200 = vpack.c.b16 %v956, %v952
    %v1201 = vpack.c.b16 %v957, %v953
    %v1202 = vpack.c.b16 %v958, %v954
    %v1203 = vpack.c.b16 %v963, %v959
    %v1204 = vpack.c.b16 %v964, %v960
    %v1205 = vpack.c.b16 %v965, %v961
    %v1206 = vpack.c.b16 %v966, %v962
    %v1207 = vpack.c.b16 %v971, %v967
    %v1208 = vpack.c.b16 %v972, %v968
    %v1209 = vpack.c.b16 %v973, %v969
    %v1210 = vpack.c.b16 %v974, %v970
    %v1211 = vpack.c.b16 %v979, %v975
    %v1212 = vpack.c.b16 %v980, %v976
    %v1213 = vpack.c.b16 %v981, %v977
    %v1214 = vpack.c.b16 %v982, %v978
    %v1215 = vpack.c.b16 %v987, %v983
    %v1216 = vpack.c.b16 %v988, %v984
    %v1217 = vpack.c.b16 %v989, %v985
    %v1218 = vpack.c.b16 %v990, %v986
    %v1219 = vpack.c.b16 %v995, %v991
    %v1220 = vpack.c.b16 %v996, %v992
    %v1221 = vpack.c.b16 %v997, %v993
    %v1222 = vpack.c.b16 %v998, %v994
    %1447 = vmatprep.subr.bf16.mxu0 %v1000
    %1448 = vmatpush1.bf16.msra.mxu0 %v999
    %1449 = vmatprep.subr.bf16.mxu0 %v1004
    %1450 = vmatpush1.bf16.msra.mxu0 %v1003
    %1451 = vmatprep.subr.bf16.mxu0 %v1008
    %1452 = vmatpush1.bf16.msra.mxu0 %v1007
    %1453 = vmatprep.subr.bf16.mxu0 %v1012
    %1454 = vmatpush1.bf16.msra.mxu0 %v1011
    %1455 = vmatprep.subr.bf16.mxu0 %v1016
    %1456 = vmatpush1.bf16.msra.mxu0 %v1015
    %1457 = vmatprep.subr.bf16.mxu0 %v1020
    %1458 = vmatpush1.bf16.msra.mxu0 %v1019
    %1459 = vmatprep.subr.bf16.mxu0 %v1024
    %1460 = vmatpush1.bf16.msra.mxu0 %v1023
    %1461 = vmatprep.subr.bf16.mxu0 %v1028
    %1462 = vmatpush1.bf16.msra.mxu0 %v1027
    %1463 = vmatprep.subr.bf16.mxu0 %v1032
    %1464 = vmatpush1.bf16.msra.mxu0 %v1031
    %1465 = vmatprep.subr.bf16.mxu0 %v1036
    %1466 = vmatpush1.bf16.msra.mxu0 %v1035
    %1467 = vmatprep.subr.bf16.mxu0 %v1040
    %1468 = vmatpush1.bf16.msra.mxu0 %v1039
    %1469 = vmatprep.subr.bf16.mxu0 %v1044
    %1470 = vmatpush1.bf16.msra.mxu0 %v1043
    %1471 = vmatprep.subr.bf16.mxu0 %v1048
    %1472 = vmatpush1.bf16.msra.mxu0 %v1047
    %1473 = vmatprep.subr.bf16.mxu0 %v1052
    %1474 = vmatpush1.bf16.msra.mxu0 %v1051
    %1475 = vmatprep.subr.bf16.mxu0 %v1056
    %1476 = vmatpush1.bf16.msra.mxu0 %v1055
    %1477 = vmatprep.subr.bf16.mxu0 %v1060
    %1478 = vmatpush1.bf16.msra.mxu0 %v1059
    %1479 = vmatprep.mubr.bf16.mxu0 %v75
    %1480 = vmatmul.mubr.bf16.gmra.mrb[0].mxu0 %v74
    %v1481 = vpop.f32.mrb[0].mxu0
    %v1482 = vadd.f32 %v310, %v1481
    %v1483 = vpop.f32.mrb[0].mxu0
    %v1484 = vadd.f32 %v314, %v1483
    %v1485 = vpop.f32.mrb[0].mxu0
    %v1486 = vpop.f32.mrb[0].mxu0
    %1487 = vdwg.mxu0
    %1488 = vmatprep.subr.bf16.mxu0 %v1064
    %1489 = vmatpush1.bf16.msra.mxu0 %v1063
    %1490 = vmatprep.subr.bf16.mxu0 %v1068
    %1491 = vmatpush1.bf16.msra.mxu0 %v1067
    %1492 = vmatprep.subr.bf16.mxu0 %v1072
    %1493 = vmatpush1.bf16.msra.mxu0 %v1071
    %1494 = vmatprep.subr.bf16.mxu0 %v1076
    %1495 = vmatpush1.bf16.msra.mxu0 %v1075
    %1496 = vmatprep.subr.bf16.mxu0 %v1080
    %1497 = vmatpush1.bf16.msra.mxu0 %v1079
    %1498 = vmatprep.subr.bf16.mxu0 %v1084
    %1499 = vmatpush1.bf16.msra.mxu0 %v1083
    %1500 = vmatprep.subr.bf16.mxu0 %v1088
    %1501 = vmatpush1.bf16.msra.mxu0 %v1087
    %1502 = vmatprep.subr.bf16.mxu0 %v1092
    %1503 = vmatpush1.bf16.msra.mxu0 %v1091
    %1504 = vmatprep.subr.bf16.mxu0 %v1096
    %1505 = vmatpush1.bf16.msra.mxu0 %v1095
    %1506 = vmatprep.subr.bf16.mxu0 %v1100
    %1507 = vmatpush1.bf16.msra.mxu0 %v1099
    %1508 = vmatprep.subr.bf16.mxu0 %v1104
    %1509 = vmatpush1.bf16.msra.mxu0 %v1103
    %1510 = vmatprep.subr.bf16.mxu0 %v1108
    %1511 = vmatpush1.bf16.msra.mxu0 %v1107
    %1512 = vmatprep.subr.bf16.mxu0 %v1112
    %1513 = vmatpush1.bf16.msra.mxu0 %v1111
    %1514 = vmatprep.subr.bf16.mxu0 %v1116
    %1515 = vmatpush1.bf16.msra.mxu0 %v1115
    %1516 = vmatprep.subr.bf16.mxu0 %v1120
    %1517 = vmatpush1.bf16.msra.mxu0 %v1119
    %1518 = vmatprep.subr.bf16.mxu0 %v1124
    %1519 = vmatpush1.bf16.msra.mxu0 %v1123
    %1520 = vmatprep.mubr.bf16.mxu0 %v77
    %1521 = vmatmul.mubr.bf16.gmra.mrb[0].mxu0 %v76
    %v1522 = vpop.f32.mrb[0].mxu0
    %v1523 = vadd.f32 %v1482, %v1522
    %v1524 = vpop.f32.mrb[0].mxu0
    %v1525 = vadd.f32 %v1484, %v1524
    %v1526 = vpop.f32.mrb[0].mxu0
    %v1527 = vpop.f32.mrb[0].mxu0
    %1528 = vdwg.mxu0
    %1529 = vmatprep.subr.bf16.mxu0 %v1128
    %1530 = vmatpush1.bf16.msra.mxu0 %v1127
    %1531 = vmatprep.subr.bf16.mxu0 %v1132
    %1532 = vmatpush1.bf16.msra.mxu0 %v1131
    %1533 = vmatprep.subr.bf16.mxu0 %v1136
    %1534 = vmatpush1.bf16.msra.mxu0 %v1135
    %1535 = vmatprep.subr.bf16.mxu0 %v1140
    %1536 = vmatpush1.bf16.msra.mxu0 %v1139
    %1537 = vmatprep.subr.bf16.mxu0 %v1144
    %1538 = vmatpush1.bf16.msra.mxu0 %v1143
    %1539 = vmatprep.subr.bf16.mxu0 %v1148
    %1540 = vmatpush1.bf16.msra.mxu0 %v1147
    %1541 = vmatprep.subr.bf16.mxu0 %v1152
    %1542 = vmatpush1.bf16.msra.mxu0 %v1151
    %1543 = vmatprep.subr.bf16.mxu0 %v1156
    %1544 = vmatpush1.bf16.msra.mxu0 %v1155
    %1545 = vmatprep.subr.bf16.mxu0 %v1160
    %1546 = vmatpush1.bf16.msra.mxu0 %v1159
    %1547 = vmatprep.subr.bf16.mxu0 %v1164
    %1548 = vmatpush1.bf16.msra.mxu0 %v1163
    %1549 = vmatprep.subr.bf16.mxu0 %v1168
    %1550 = vmatpush1.bf16.msra.mxu0 %v1167
    %1551 = vmatprep.subr.bf16.mxu0 %v1172
    %1552 = vmatpush1.bf16.msra.mxu0 %v1171
    %1553 = vmatprep.subr.bf16.mxu0 %v1176
    %1554 = vmatpush1.bf16.msra.mxu0 %v1175
    %1555 = vmatprep.subr.bf16.mxu0 %v1180
    %1556 = vmatpush1.bf16.msra.mxu0 %v1179
    %1557 = vmatprep.subr.bf16.mxu0 %v1184
    %1558 = vmatpush1.bf16.msra.mxu0 %v1183
    %1559 = vmatprep.subr.bf16.mxu0 %v1188
    %1560 = vmatpush1.bf16.msra.mxu0 %v1187
    %1561 = vmatprep.mubr.bf16.mxu0 %v79
    %1562 = vmatmul.mubr.bf16.gmra.mrb[0].mxu0 %v78
    %v1563 = vpop.f32.mrb[0].mxu0
    %v1564 = vadd.f32 %v1523, %v1563
    %v1565 = vpop.f32.mrb[0].mxu0
    %v1566 = vadd.f32 %v1525, %v1565
    %v1567 = vpop.f32.mrb[0].mxu0
    %v1568 = vpop.f32.mrb[0].mxu0
    %1569 = vdwg.mxu0
    %1570 = vmatprep.subr.bf16.mxu0 %v1192
    %1571 = vmatpush1.bf16.msra.mxu0 %v1191
    %1572 = vmatprep.subr.bf16.mxu0 %v1196
    %1573 = vmatpush1.bf16.msra.mxu0 %v1195
    %1574 = vmatprep.subr.bf16.mxu0 %v1200
    %1575 = vmatpush1.bf16.msra.mxu0 %v1199
    %1576 = vmatprep.subr.bf16.mxu0 %v1204
    %1577 = vmatpush1.bf16.msra.mxu0 %v1203
    %1578 = vmatprep.subr.bf16.mxu0 %v1208
    %1579 = vmatpush1.bf16.msra.mxu0 %v1207
    %1580 = vmatprep.subr.bf16.mxu0 %v1212
    %1581 = vmatpush1.bf16.msra.mxu0 %v1211
    %1582 = vmatprep.subr.bf16.mxu0 %v1216
    %1583 = vmatpush1.bf16.msra.mxu0 %v1215
    %1584 = vmatprep.subr.bf16.mxu0 %v1220
    %1585 = vmatpush1.bf16.msra.mxu0 %v1219
    %1586 = vmatprep.subr.bf16.mxu0 0
    %1587 = vmatpush1.bf16.msra.mxu0 0
    %1588 = vmatprep.subr.bf16.mxu0 0
    %1589 = vmatpush1.bf16.msra.mxu0 0
    %1590 = vmatprep.subr.bf16.mxu0 0
    %1591 = vmatpush1.bf16.msra.mxu0 0
    %1592 = vmatprep.subr.bf16.mxu0 0
    %1593 = vmatpush1.bf16.msra.mxu0 0
    %1594 = vmatprep.subr.bf16.mxu0 0
    %1595 = vmatpush1.bf16.msra.mxu0 0
    %1596 = vmatprep.subr.bf16.mxu0 0
    %1597 = vmatpush1.bf16.msra.mxu0 0
    %1598 = vmatprep.subr.bf16.mxu0 0
    %1599 = vmatpush1.bf16.msra.mxu0 0
    %1600 = vmatprep.subr.bf16.mxu0 0
    %1601 = vmatpush1.bf16.msra.mxu0 0
    %1602 = vmatprep.mubr.bf16.mxu0 0
    %1603 = vmatmul.mubr.bf16.gmra.mrb[0].mxu0 %v80
    %v1604 = vpop.f32.mrb[0].mxu0
    %v1605 = vadd.f32 %v1564, %v1604
    %v1606 = vpop.f32.mrb[0].mxu0
    %v1607 = vadd.f32 %v1566, %v1606
    %v1608 = vpop.f32.mrb[0].mxu0
    %v1609 = vpop.f32.mrb[0].mxu0
    %1610 = vdwg.mxu0
    %1611 = vmatprep.subr.bf16.mxu0 %v1002
    %1612 = vmatpush1.bf16.msra.mxu0 %v1001
    %1613 = vmatprep.subr.bf16.mxu0 %v1006
    %1614 = vmatpush1.bf16.msra.mxu0 %v1005
    %1615 = vmatprep.subr.bf16.mxu0 %v1010
    %1616 = vmatpush1.bf16.msra.mxu0 %v1009
    %1617 = vmatprep.subr.bf16.mxu0 %v1014
    %1618 = vmatpush1.bf16.msra.mxu0 %v1013
    %1619 = vmatprep.subr.bf16.mxu0 %v1018
    %1620 = vmatpush1.bf16.msra.mxu0 %v1017
    %1621 = vmatprep.subr.bf16.mxu0 %v1022
    %1622 = vmatpush1.bf16.msra.mxu0 %v1021
    %1623 = vmatprep.subr.bf16.mxu0 %v1026
    %1624 = vmatpush1.bf16.msra.mxu0 %v1025
    %1625 = vmatprep.subr.bf16.mxu0 %v1030
    %1626 = vmatpush1.bf16.msra.mxu0 %v1029
    %1627 = vmatprep.subr.bf16.mxu0 %v1034
    %1628 = vmatpush1.bf16.msra.mxu0 %v1033
    %1629 = vmatprep.subr.bf16.mxu0 %v1038
    %1630 = vmatpush1.bf16.msra.mxu0 %v1037
    %1631 = vmatprep.subr.bf16.mxu0 %v1042
    %1632 = vmatpush1.bf16.msra.mxu0 %v1041
    %1633 = vmatprep.subr.bf16.mxu0 %v1046
    %1634 = vmatpush1.bf16.msra.mxu0 %v1045
    %1635 = vmatprep.subr.bf16.mxu0 %v1050
    %1636 = vmatpush1.bf16.msra.mxu0 %v1049
    %1637 = vmatprep.subr.bf16.mxu0 %v1054
    %1638 = vmatpush1.bf16.msra.mxu0 %v1053
    %1639 = vmatprep.subr.bf16.mxu0 %v1058
    %1640 = vmatpush1.bf16.msra.mxu0 %v1057
    %1641 = vmatprep.subr.bf16.mxu0 %v1062
    %1642 = vmatpush1.bf16.msra.mxu0 %v1061
    %1643 = vmatprep.mubr.bf16.mxu0 %v75
    %1644 = vmatmul.mubr.bf16.gmra.mrb[0].mxu0 %v74
    %v1645 = vpop.f32.mrb[0].mxu0
    %v1646 = vadd.f32 %v318, %v1645
    %v1647 = vpop.f32.mrb[0].mxu0
    %v1648 = vadd.f32 %v322, %v1647
    %v1649 = vpop.f32.mrb[0].mxu0
    %v1650 = vpop.f32.mrb[0].mxu0
    %1651 = vdwg.mxu0
    %1652 = vmatprep.subr.bf16.mxu0 %v1066
    %1653 = vmatpush1.bf16.msra.mxu0 %v1065
    %1654 = vmatprep.subr.bf16.mxu0 %v1070
    %1655 = vmatpush1.bf16.msra.mxu0 %v1069
    %1656 = vmatprep.subr.bf16.mxu0 %v1074
    %1657 = vmatpush1.bf16.msra.mxu0 %v1073
    %1658 = vmatprep.subr.bf16.mxu0 %v1078
    %1659 = vmatpush1.bf16.msra.mxu0 %v1077
    %1660 = vmatprep.subr.bf16.mxu0 %v1082
    %1661 = vmatpush1.bf16.msra.mxu0 %v1081
    %1662 = vmatprep.subr.bf16.mxu0 %v1086
    %1663 = vmatpush1.bf16.msra.mxu0 %v1085
    %1664 = vmatprep.subr.bf16.mxu0 %v1090
    %1665 = vmatpush1.bf16.msra.mxu0 %v1089
    %1666 = vmatprep.subr.bf16.mxu0 %v1094
    %1667 = vmatpush1.bf16.msra.mxu0 %v1093
    %1668 = vmatprep.subr.bf16.mxu0 %v1098
    %1669 = vmatpush1.bf16.msra.mxu0 %v1097
    %1670 = vmatprep.subr.bf16.mxu0 %v1102
    %1671 = vmatpush1.bf16.msra.mxu0 %v1101
    %1672 = vmatprep.subr.bf16.mxu0 %v1106
    %1673 = vmatpush1.bf16.msra.mxu0 %v1105
    %1674 = vmatprep.subr.bf16.mxu0 %v1110
    %1675 = vmatpush1.bf16.msra.mxu0 %v1109
    %1676 = vmatprep.subr.bf16.mxu0 %v1114
    %1677 = vmatpush1.bf16.msra.mxu0 %v1113
    %1678 = vmatprep.subr.bf16.mxu0 %v1118
    %1679 = vmatpush1.bf16.msra.mxu0 %v1117
    %1680 = vmatprep.subr.bf16.mxu0 %v1122
    %1681 = vmatpush1.bf16.msra.mxu0 %v1121
    %1682 = vmatprep.subr.bf16.mxu0 %v1126
    %1683 = vmatpush1.bf16.msra.mxu0 %v1125
    %1684 = vmatprep.mubr.bf16.mxu0 %v77
    %1685 = vmatmul.mubr.bf16.gmra.mrb[0].mxu0 %v76
    %v1686 = vpop.f32.mrb[0].mxu0
    %v1687 = vadd.f32 %v1646, %v1686
    %v1688 = vpop.f32.mrb[0].mxu0
    %v1689 = vadd.f32 %v1648, %v1688
    %v1690 = vpop.f32.mrb[0].mxu0
    %v1691 = vpop.f32.mrb[0].mxu0
    %1692 = vdwg.mxu0
    %1693 = vmatprep.subr.bf16.mxu0 %v1130
    %1694 = vmatpush1.bf16.msra.mxu0 %v1129
    %1695 = vmatprep.subr.bf16.mxu0 %v1134
    %1696 = vmatpush1.bf16.msra.mxu0 %v1133
    %1697 = vmatprep.subr.bf16.mxu0 %v1138
    %1698 = vmatpush1.bf16.msra.mxu0 %v1137
    %1699 = vmatprep.subr.bf16.mxu0 %v1142
    %1700 = vmatpush1.bf16.msra.mxu0 %v1141
    %1701 = vmatprep.subr.bf16.mxu0 %v1146
    %1702 = vmatpush1.bf16.msra.mxu0 %v1145
    %1703 = vmatprep.subr.bf16.mxu0 %v1150
    %1704 = vmatpush1.bf16.msra.mxu0 %v1149
    %1705 = vmatprep.subr.bf16.mxu0 %v1154
    %1706 = vmatpush1.bf16.msra.mxu0 %v1153
    %1707 = vmatprep.subr.bf16.mxu0 %v1158
    %1708 = vmatpush1.bf16.msra.mxu0 %v1157
    %1709 = vmatprep.subr.bf16.mxu0 %v1162
    %1710 = vmatpush1.bf16.msra.mxu0 %v1161
    %1711 = vmatprep.subr.bf16.mxu0 %v1166
    %1712 = vmatpush1.bf16.msra.mxu0 %v1165
    %1713 = vmatprep.subr.bf16.mxu0 %v1170
    %1714 = vmatpush1.bf16.msra.mxu0 %v1169
    %1715 = vmatprep.subr.bf16.mxu0 %v1174
    %1716 = vmatpush1.bf16.msra.mxu0 %v1173
    %1717 = vmatprep.subr.bf16.mxu0 %v1178
    %1718 = vmatpush1.bf16.msra.mxu0 %v1177
    %1719 = vmatprep.subr.bf16.mxu0 %v1182
    %1720 = vmatpush1.bf16.msra.mxu0 %v1181
    %1721 = vmatprep.subr.bf16.mxu0 %v1186
    %1722 = vmatpush1.bf16.msra.mxu0 %v1185
    %1723 = vmatprep.subr.bf16.mxu0 %v1190
    %1724 = vmatpush1.bf16.msra.mxu0 %v1189
    %1725 = vmatprep.mubr.bf16.mxu0 %v79
    %1726 = vmatmul.mubr.bf16.gmra.mrb[0].mxu0 %v78
    %v1727 = vpop.f32.mrb[0].mxu0
    %v1728 = vadd.f32 %v1687, %v1727
    %v1729 = vpop.f32.mrb[0].mxu0
    %v1730 = vadd.f32 %v1689, %v1729
    %v1731 = vpop.f32.mrb[0].mxu0
    %v1732 = vpop.f32.mrb[0].mxu0
    %1733 = vdwg.mxu0
    %1734 = vmatprep.subr.bf16.mxu0 %v1194
    %1735 = vmatpush1.bf16.msra.mxu0 %v1193
    %1736 = vmatprep.subr.bf16.mxu0 %v1198
    %1737 = vmatpush1.bf16.msra.mxu0 %v1197
    %1738 = vmatprep.subr.bf16.mxu0 %v1202
    %1739 = vmatpush1.bf16.msra.mxu0 %v1201
    %1740 = vmatprep.subr.bf16.mxu0 %v1206
    %1741 = vmatpush1.bf16.msra.mxu0 %v1205
    %1742 = vmatprep.subr.bf16.mxu0 %v1210
    %1743 = vmatpush1.bf16.msra.mxu0 %v1209
    %1744 = vmatprep.subr.bf16.mxu0 %v1214
    %1745 = vmatpush1.bf16.msra.mxu0 %v1213
    %1746 = vmatprep.subr.bf16.mxu0 %v1218
    %1747 = vmatpush1.bf16.msra.mxu0 %v1217
    %1748 = vmatprep.subr.bf16.mxu0 %v1222
    %1749 = vmatpush1.bf16.msra.mxu0 %v1221
    %1750 = vmatprep.subr.bf16.mxu0 0
    %1751 = vmatpush1.bf16.msra.mxu0 0
    %1752 = vmatprep.subr.bf16.mxu0 0
    %1753 = vmatpush1.bf16.msra.mxu0 0
    %1754 = vmatprep.subr.bf16.mxu0 0
    %1755 = vmatpush1.bf16.msra.mxu0 0
    %1756 = vmatprep.subr.bf16.mxu0 0
    %1757 = vmatpush1.bf16.msra.mxu0 0
    %1758 = vmatprep.subr.bf16.mxu0 0
    %1759 = vmatpush1.bf16.msra.mxu0 0
    %1760 = vmatprep.subr.bf16.mxu0 0
    %1761 = vmatpush1.bf16.msra.mxu0 0
    %1762 = vmatprep.subr.bf16.mxu0 0
    %1763 = vmatpush1.bf16.msra.mxu0 0
    %1764 = vmatprep.subr.bf16.mxu0 0
    %1765 = vmatpush1.bf16.msra.mxu0 0
    %1766 = vmatprep.mubr.bf16.mxu0 0
    %1767 = vmatmul.mubr.bf16.gmra.mrb[0].mxu0 %v80
    %v1768 = vpop.f32.mrb[0].mxu0
    %v1769 = vadd.f32 %v1728, %v1768
    %v1770 = vpop.f32.mrb[0].mxu0
    %v1771 = vadd.f32 %v1730, %v1770
    %v1772 = vpop.f32.mrb[0].mxu0
    %v1773 = vpop.f32.mrb[0].mxu0
    %1774 = vdwg.mxu0
    %v1775 = vmax.f32 %v1605, 0.0
    %v1776 = vmax.f32 %v1607, 0.0
    %v1777 = vmax.f32 %v1769, 0.0
    %v1778 = vmax.f32 %v1771, 0.0
    %v1779 = vpack.c.bf16 %v1775, %v1775
    %v1780 = vpack.c.bf16 %v1776, %v1776
    %v1781 = vpack.c.bf16 %v1777, %v1777
    %v1782 = vpack.c.bf16 %v1778, %v1778
    %v1783 = vld [vmem:[%s4] sm:$0xff]
    %v1784 = vld [vmem:[%s4 + $0x8] sm:$0xff]
    %v1785 = vld [vmem:[%s4 + $0x10] sm:$0xff]
    %v1786 = vld [vmem:[%s4 + $0x18] sm:$0xff]
    %v1787 = vld [vmem:[%s4 + $0x20] sm:$0xff]
    %v1788 = vld [vmem:[%s4 + $0x28] sm:$0xff]
    %v1789 = vld [vmem:[%s4 + $0x30] sm:$0xff]
    %v1790 = vld [vmem:[%s4 + $0x38] sm:$0xff]
    %v1791 = vld [vmem:[%s4 + $0x40] sm:$0xff]
    %v1792 = vld [vmem:[%s4 + $0x48] sm:$0xff]
    %v1793 = vld [vmem:[%s4 + $0x50] sm:$0xff]
    %v1794 = vld [vmem:[%s4 + $0x58] sm:$0xff]
    %v1795 = vld [vmem:[%s4 + $0x60] sm:$0xff]
    %v1796 = vld [vmem:[%s4 + $0x68] sm:$0xff]
    %v1797 = vld [vmem:[%s4 + $0x70] sm:$0xff]
    %v1798 = vld [vmem:[%s4 + $0x78] sm:$0xff]
    %v1799 = vld [vmem:[%s4 + $0x80] sm:$0xff]
    %v1800 = vld [vmem:[%s4 + $0x88] sm:$0xff]
    %v1801 = vld [vmem:[%s4 + $0x90] sm:$0xff]
    %v1802 = vld [vmem:[%s4 + $0x98] sm:$0xff]
    %v1803 = vld [vmem:[%s4 + $0xa0] sm:$0xff]
    %v1804 = vld [vmem:[%s4 + $0xa8] sm:$0xff]
    %v1805 = vld [vmem:[%s4 + $0xb0] sm:$0xff]
    %v1806 = vld [vmem:[%s4 + $0xb8] sm:$0xff]
    %v1807 = vld [vmem:[%s4 + $0xc0] sm:$0xff]
    %v1808 = vld [vmem:[%s4 + $0xc8] sm:$0xff]
    %v1809 = vld [vmem:[%s4 + $0xd0] sm:$0xff]
    %v1810 = vld [vmem:[%s4 + $0xd8] sm:$0xff]
    %v1811 = vld [vmem:[%s4 + $0xe0] sm:$0xff]
    %v1812 = vld [vmem:[%s4 + $0xe8] sm:$0xff]
    %v1813 = vld [vmem:[%s4 + $0xf0] sm:$0xff]
    %v1814 = vld [vmem:[%s4 + $0xf8] sm:$0xff]
    %v1815 = vld [vmem:[%s4 + $0x100] sm:$0xff]
    %v1816 = vld [vmem:[%s4 + $0x108] sm:$0xff]
    %v1817 = vld [vmem:[%s4 + $0x110] sm:$0xff]
    %v1818 = vld [vmem:[%s4 + $0x118] sm:$0xff]
    %v1819 = vld [vmem:[%s4 + $0x120] sm:$0xff]
    %v1820 = vld [vmem:[%s4 + $0x128] sm:$0xff]
    %v1821 = vld [vmem:[%s4 + $0x130] sm:$0xff]
    %v1822 = vld [vmem:[%s4 + $0x138] sm:$0xff]
    %v1823 = vld [vmem:[%s4 + $0x140] sm:$0xff]
    %v1824 = vld [vmem:[%s4 + $0x148] sm:$0xff]
    %v1825 = vld [vmem:[%s4 + $0x150] sm:$0xff]
    %v1826 = vld [vmem:[%s4 + $0x158] sm:$0xff]
    %v1827 = vld [vmem:[%s4 + $0x160] sm:$0xff]
    %v1828 = vld [vmem:[%s4 + $0x168] sm:$0xff]
    %v1829 = vld [vmem:[%s4 + $0x170] sm:$0xff]
    %v1830 = vld [vmem:[%s4 + $0x178] sm:$0xff]
    %v1831 = vld [vmem:[%s4 + $0x180] sm:$0xff]
    %v1832 = vld [vmem:[%s4 + $0x188] sm:$0xff]
    %v1833 = vld [vmem:[%s4 + $0x190] sm:$0xff]
    %v1834 = vld [vmem:[%s4 + $0x198] sm:$0xff]
    %v1835 = vld [vmem:[%s4 + $0x1a0] sm:$0xff]
    %v1836 = vld [vmem:[%s4 + $0x1a8] sm:$0xff]
    %v1837 = vld [vmem:[%s4 + $0x1b0] sm:$0xff]
    %v1838 = vld [vmem:[%s4 + $0x1b8] sm:$0xff]
    %v1839 = vld [vmem:[%s4 + $0x1c0] sm:$0xff]
    %v1840 = vld [vmem:[%s4 + $0x1c8] sm:$0xff]
    %v1841 = vld [vmem:[%s4 + $0x1d0] sm:$0xff]
    %v1842 = vld [vmem:[%s4 + $0x1d8] sm:$0xff]
    %v1843 = vld [vmem:[%s4 + $0x1e0] sm:$0xff]
    %v1844 = vld [vmem:[%s4 + $0x1e8] sm:$0xff]
    %v1845 = vld [vmem:[%s4 + $0x1f0] sm:$0xff]
    %v1846 = vld [vmem:[%s4 + $0x1f8] sm:$0xff]
    %v1847 = vld [vmem:[%s5] sm:$0x3]
    %v1849 = vlaneseq
    %v1850 = vshrl.u32 %v1849, 7
    %v1851 = vsub.s32 0, %v1850
    %v1852 = vrot.slane %v1847, %v1851
    %v1853 = vlaneseq
    %v1854 = vshrl.u32 %v1853, 7
    %v1855 = vsub.s32 1, %v1854
    %v1856 = vrot.slane %v1847, %v1855
    %v1923 = vunpack.c.l.b16 %v1783
    %v1924 = vunpack.c.h.b16 %v1783
    %v1925 = vunpack.c.l.b16 %v1784
    %v1926 = vunpack.c.h.b16 %v1784
    %v1927 = vunpack.c.l.b16 %v1785
    %v1928 = vunpack.c.h.b16 %v1785
    %v1929 = vunpack.c.l.b16 %v1786
    %v1930 = vunpack.c.h.b16 %v1786
    %v1931 = vunpack.c.l.b16 %v1787
    %v1932 = vunpack.c.h.b16 %v1787
    %v1933 = vunpack.c.l.b16 %v1788
    %v1934 = vunpack.c.h.b16 %v1788
    %v1935 = vunpack.c.l.b16 %v1789
    %v1936 = vunpack.c.h.b16 %v1789
    %v1937 = vunpack.c.l.b16 %v1790
    %v1938 = vunpack.c.h.b16 %v1790
    %v1939 = vunpack.c.l.b16 %v1791
    %v1940 = vunpack.c.h.b16 %v1791
    %v1941 = vunpack.c.l.b16 %v1792
    %v1942 = vunpack.c.h.b16 %v1792
    %v1943 = vunpack.c.l.b16 %v1793
    %v1944 = vunpack.c.h.b16 %v1793
    %v1945 = vunpack.c.l.b16 %v1794
    %v1946 = vunpack.c.h.b16 %v1794
    %v1947 = vunpack.c.l.b16 %v1795
    %v1948 = vunpack.c.h.b16 %v1795
    %v1949 = vunpack.c.l.b16 %v1796
    %v1950 = vunpack.c.h.b16 %v1796
    %v1951 = vunpack.c.l.b16 %v1797
    %v1952 = vunpack.c.h.b16 %v1797
    %v1953 = vunpack.c.l.b16 %v1798
    %v1954 = vunpack.c.h.b16 %v1798
    %v1955 = vunpack.c.l.b16 %v1799
    %v1956 = vunpack.c.h.b16 %v1799
    %v1957 = vunpack.c.l.b16 %v1800
    %v1958 = vunpack.c.h.b16 %v1800
    %v1959 = vunpack.c.l.b16 %v1801
    %v1960 = vunpack.c.h.b16 %v1801
    %v1961 = vunpack.c.l.b16 %v1802
    %v1962 = vunpack.c.h.b16 %v1802
    %v1963 = vunpack.c.l.b16 %v1803
    %v1964 = vunpack.c.h.b16 %v1803
    %v1965 = vunpack.c.l.b16 %v1804
    %v1966 = vunpack.c.h.b16 %v1804
    %v1967 = vunpack.c.l.b16 %v1805
    %v1968 = vunpack.c.h.b16 %v1805
    %v1969 = vunpack.c.l.b16 %v1806
    %v1970 = vunpack.c.h.b16 %v1806
    %v1971 = vunpack.c.l.b16 %v1807
    %v1972 = vunpack.c.h.b16 %v1807
    %v1973 = vunpack.c.l.b16 %v1808
    %v1974 = vunpack.c.h.b16 %v1808
    %v1975 = vunpack.c.l.b16 %v1809
    %v1976 = vunpack.c.h.b16 %v1809
    %v1977 = vunpack.c.l.b16 %v1810
    %v1978 = vunpack.c.h.b16 %v1810
    %v1979 = vunpack.c.l.b16 %v1811
    %v1980 = vunpack.c.h.b16 %v1811
    %v1981 = vunpack.c.l.b16 %v1812
    %v1982 = vunpack.c.h.b16 %v1812
    %v1983 = vunpack.c.l.b16 %v1813
    %v1984 = vunpack.c.h.b16 %v1813
    %v1985 = vunpack.c.l.b16 %v1814
    %v1986 = vunpack.c.h.b16 %v1814
    %v1987 = vunpack.c.l.b16 %v1815
    %v1988 = vunpack.c.h.b16 %v1815
    %v1989 = vunpack.c.l.b16 %v1816
    %v1990 = vunpack.c.h.b16 %v1816
    %v1991 = vunpack.c.l.b16 %v1817
    %v1992 = vunpack.c.h.b16 %v1817
    %v1993 = vunpack.c.l.b16 %v1818
    %v1994 = vunpack.c.h.b16 %v1818
    %v1995 = vunpack.c.l.b16 %v1819
    %v1996 = vunpack.c.h.b16 %v1819
    %v1997 = vunpack.c.l.b16 %v1820
    %v1998 = vunpack.c.h.b16 %v1820
    %v1999 = vunpack.c.l.b16 %v1821
    %v2000 = vunpack.c.h.b16 %v1821
    %v2001 = vunpack.c.l.b16 %v1822
    %v2002 = vunpack.c.h.b16 %v1822
    %v2003 = vunpack.c.l.b16 %v1823
    %v2004 = vunpack.c.h.b16 %v1823
    %v2005 = vunpack.c.l.b16 %v1824
    %v2006 = vunpack.c.h.b16 %v1824
    %v2007 = vunpack.c.l.b16 %v1825
    %v2008 = vunpack.c.h.b16 %v1825
    %v2009 = vunpack.c.l.b16 %v1826
    %v2010 = vunpack.c.h.b16 %v1826
    %v2011 = vunpack.c.l.b16 %v1827
    %v2012 = vunpack.c.h.b16 %v1827
    %v2013 = vunpack.c.l.b16 %v1828
    %v2014 = vunpack.c.h.b16 %v1828
    %v2015 = vunpack.c.l.b16 %v1829
    %v2016 = vunpack.c.h.b16 %v1829
    %v2017 = vunpack.c.l.b16 %v1830
    %v2018 = vunpack.c.h.b16 %v1830
    %v2019 = vunpack.c.l.b16 %v1831
    %v2020 = vunpack.c.h.b16 %v1831
    %v2021 = vunpack.c.l.b16 %v1832
    %v2022 = vunpack.c.h.b16 %v1832
    %v2023 = vunpack.c.l.b16 %v1833
    %v2024 = vunpack.c.h.b16 %v1833
    %v2025 = vunpack.c.l.b16 %v1834
    %v2026 = vunpack.c.h.b16 %v1834
    %v2027 = vunpack.c.l.b16 %v1835
    %v2028 = vunpack.c.h.b16 %v1835
    %v2029 = vunpack.c.l.b16 %v1836
    %v2030 = vunpack.c.h.b16 %v1836
    %v2031 = vunpack.c.l.b16 %v1837
    %v2032 = vunpack.c.h.b16 %v1837
    %v2033 = vunpack.c.l.b16 %v1838
    %v2034 = vunpack.c.h.b16 %v1838
    %v2035 = vunpack.c.l.b16 %v1839
    %v2036 = vunpack.c.h.b16 %v1839
    %v2037 = vunpack.c.l.b16 %v1840
    %v2038 = vunpack.c.h.b16 %v1840
    %v2039 = vunpack.c.l.b16 %v1841
    %v2040 = vunpack.c.h.b16 %v1841
    %v2041 = vunpack.c.l.b16 %v1842
    %v2042 = vunpack.c.h.b16 %v1842
    %v2043 = vunpack.c.l.b16 %v1843
    %v2044 = vunpack.c.h.b16 %v1843
    %v2045 = vunpack.c.l.b16 %v1844
    %v2046 = vunpack.c.h.b16 %v1844
    %v2047 = vunpack.c.l.b16 %v1845
    %v2048 = vunpack.c.h.b16 %v1845
    %v2049 = vunpack.c.l.b16 %v1846
    %v2050 = vunpack.c.h.b16 %v1846
    %v2051 = vpack.c.b16 %v1925, %v1923
    %v2052 = vpack.c.b16 %v1926, %v1924
    %v2053 = vpack.c.b16 %v1929, %v1927
    %v2054 = vpack.c.b16 %v1930, %v1928
    %v2055 = vpack.c.b16 %v1933, %v1931
    %v2056 = vpack.c.b16 %v1934, %v1932
    %v2057 = vpack.c.b16 %v1937, %v1935
    %v2058 = vpack.c.b16 %v1938, %v1936
    %v2059 = vpack.c.b16 %v1941, %v1939
    %v2060 = vpack.c.b16 %v1942, %v1940
    %v2061 = vpack.c.b16 %v1945, %v1943
    %v2062 = vpack.c.b16 %v1946, %v1944
    %v2063 = vpack.c.b16 %v1949, %v1947
    %v2064 = vpack.c.b16 %v1950, %v1948
    %v2065 = vpack.c.b16 %v1953, %v1951
    %v2066 = vpack.c.b16 %v1954, %v1952
    %v2067 = vpack.c.b16 %v1957, %v1955
    %v2068 = vpack.c.b16 %v1958, %v1956
    %v2069 = vpack.c.b16 %v1961, %v1959
    %v2070 = vpack.c.b16 %v1962, %v1960
    %v2071 = vpack.c.b16 %v1965, %v1963
    %v2072 = vpack.c.b16 %v1966, %v1964
    %v2073 = vpack.c.b16 %v1969, %v1967
    %v2074 = vpack.c.b16 %v1970, %v1968
    %v2075 = vpack.c.b16 %v1973, %v1971
    %v2076 = vpack.c.b16 %v1974, %v1972
    %v2077 = vpack.c.b16 %v1977, %v1975
    %v2078 = vpack.c.b16 %v1978, %v1976
    %v2079 = vpack.c.b16 %v1981, %v1979
    %v2080 = vpack.c.b16 %v1982, %v1980
    %v2081 = vpack.c.b16 %v1985, %v1983
    %v2082 = vpack.c.b16 %v1986, %v1984
    %v2083 = vpack.c.b16 %v1989, %v1987
    %v2084 = vpack.c.b16 %v1990, %v1988
    %v2085 = vpack.c.b16 %v1993, %v1991
    %v2086 = vpack.c.b16 %v1994, %v1992
    %v2087 = vpack.c.b16 %v1997, %v1995
    %v2088 = vpack.c.b16 %v1998, %v1996
    %v2089 = vpack.c.b16 %v2001, %v1999
    %v2090 = vpack.c.b16 %v2002, %v2000
    %v2091 = vpack.c.b16 %v2005, %v2003
    %v2092 = vpack.c.b16 %v2006, %v2004
    %v2093 = vpack.c.b16 %v2009, %v2007
    %v2094 = vpack.c.b16 %v2010, %v2008
    %v2095 = vpack.c.b16 %v2013, %v2011
    %v2096 = vpack.c.b16 %v2014, %v2012
    %v2097 = vpack.c.b16 %v2017, %v2015
    %v2098 = vpack.c.b16 %v2018, %v2016
    %v2099 = vpack.c.b16 %v2021, %v2019
    %v2100 = vpack.c.b16 %v2022, %v2020
    %v2101 = vpack.c.b16 %v2025, %v2023
    %v2102 = vpack.c.b16 %v2026, %v2024
    %v2103 = vpack.c.b16 %v2029, %v2027
    %v2104 = vpack.c.b16 %v2030, %v2028
    %v2105 = vpack.c.b16 %v2033, %v2031
    %v2106 = vpack.c.b16 %v2034, %v2032
    %v2107 = vpack.c.b16 %v2037, %v2035
    %v2108 = vpack.c.b16 %v2038, %v2036
    %v2109 = vpack.c.b16 %v2041, %v2039
    %v2110 = vpack.c.b16 %v2042, %v2040
    %v2111 = vpack.c.b16 %v2045, %v2043
    %v2112 = vpack.c.b16 %v2046, %v2044
    %v2113 = vpack.c.b16 %v2049, %v2047
    %v2114 = vpack.c.b16 %v2050, %v2048
    %2179 = vmatprep.subr.bf16.mxu0 %v2052
    %2180 = vmatpush1.bf16.msra.mxu0 %v2051
    %2181 = vmatprep.subr.bf16.mxu0 %v2054
    %2182 = vmatpush1.bf16.msra.mxu0 %v2053
    %2183 = vmatprep.subr.bf16.mxu0 %v2056
    %2184 = vmatpush1.bf16.msra.mxu0 %v2055
    %2185 = vmatprep.subr.bf16.mxu0 %v2058
    %2186 = vmatpush1.bf16.msra.mxu0 %v2057
    %2187 = vmatprep.subr.bf16.mxu0 %v2060
    %2188 = vmatpush1.bf16.msra.mxu0 %v2059
    %2189 = vmatprep.subr.bf16.mxu0 %v2062
    %2190 = vmatpush1.bf16.msra.mxu0 %v2061
    %2191 = vmatprep.subr.bf16.mxu0 %v2064
    %2192 = vmatpush1.bf16.msra.mxu0 %v2063
    %2193 = vmatprep.subr.bf16.mxu0 %v2066
    %2194 = vmatpush1.bf16.msra.mxu0 %v2065
    %2195 = vmatprep.subr.bf16.mxu0 %v2068
    %2196 = vmatpush1.bf16.msra.mxu0 %v2067
    %2197 = vmatprep.subr.bf16.mxu0 %v2070
    %2198 = vmatpush1.bf16.msra.mxu0 %v2069
    %2199 = vmatprep.subr.bf16.mxu0 %v2072
    %2200 = vmatpush1.bf16.msra.mxu0 %v2071
    %2201 = vmatprep.subr.bf16.mxu0 %v2074
    %2202 = vmatpush1.bf16.msra.mxu0 %v2073
    %2203 = vmatprep.subr.bf16.mxu0 %v2076
    %2204 = vmatpush1.bf16.msra.mxu0 %v2075
    %2205 = vmatprep.subr.bf16.mxu0 %v2078
    %2206 = vmatpush1.bf16.msra.mxu0 %v2077
    %2207 = vmatprep.subr.bf16.mxu0 %v2080
    %2208 = vmatpush1.bf16.msra.mxu0 %v2079
    %2209 = vmatprep.subr.bf16.mxu0 %v2082
    %2210 = vmatpush1.bf16.msra.mxu0 %v2081
    %2211 = vmatprep.mubr.bf16.mxu0 %v1780
    %2212 = vmatmul.mubr.bf16.gmra.mrb[0].mxu0 %v1779
    %v2213 = vpop.f32.mrb[0].mxu0
    %v2214 = vadd.f32 %v1852, %v2213
    %v2215 = vpop.f32.mrb[0].mxu0
    %v2216 = vadd.f32 %v1856, %v2215
    %v2217 = vpop.f32.mrb[0].mxu0
    %v2218 = vpop.f32.mrb[0].mxu0
    %2219 = vdwg.mxu0
    %2220 = vmatprep.subr.bf16.mxu0 %v2084
    %2221 = vmatpush1.bf16.msra.mxu0 %v2083
    %2222 = vmatprep.subr.bf16.mxu0 %v2086
    %2223 = vmatpush1.bf16.msra.mxu0 %v2085
    %2224 = vmatprep.subr.bf16.mxu0 %v2088
    %2225 = vmatpush1.bf16.msra.mxu0 %v2087
    %2226 = vmatprep.subr.bf16.mxu0 %v2090
    %2227 = vmatpush1.bf16.msra.mxu0 %v2089
    %2228 = vmatprep.subr.bf16.mxu0 %v2092
    %2229 = vmatpush1.bf16.msra.mxu0 %v2091
    %2230 = vmatprep.subr.bf16.mxu0 %v2094
    %2231 = vmatpush1.bf16.msra.mxu0 %v2093
    %2232 = vmatprep.subr.bf16.mxu0 %v2096
    %2233 = vmatpush1.bf16.msra.mxu0 %v2095
    %2234 = vmatprep.subr.bf16.mxu0 %v2098
    %2235 = vmatpush1.bf16.msra.mxu0 %v2097
    %2236 = vmatprep.subr.bf16.mxu0 %v2100
    %2237 = vmatpush1.bf16.msra.mxu0 %v2099
    %2238 = vmatprep.subr.bf16.mxu0 %v2102
    %2239 = vmatpush1.bf16.msra.mxu0 %v2101
    %2240 = vmatprep.subr.bf16.mxu0 %v2104
    %2241 = vmatpush1.bf16.msra.mxu0 %v2103
    %2242 = vmatprep.subr.bf16.mxu0 %v2106
    %2243 = vmatpush1.bf16.msra.mxu0 %v2105
    %2244 = vmatprep.subr.bf16.mxu0 %v2108
    %2245 = vmatpush1.bf16.msra.mxu0 %v2107
    %2246 = vmatprep.subr.bf16.mxu0 %v2110
    %2247 = vmatpush1.bf16.msra.mxu0 %v2109
    %2248 = vmatprep.subr.bf16.mxu0 %v2112
    %2249 = vmatpush1.bf16.msra.mxu0 %v2111
    %2250 = vmatprep.subr.bf16.mxu0 %v2114
    %2251 = vmatpush1.bf16.msra.mxu0 %v2113
    %2252 = vmatprep.mubr.bf16.mxu0 %v1782
    %2253 = vmatmul.mubr.bf16.gmra.mrb[0].mxu0 %v1781
    %v2254 = vpop.f32.mrb[0].mxu0
    %v2255 = vadd.f32 %v2214, %v2254
    %v2256 = vpop.f32.mrb[0].mxu0
    %v2257 = vadd.f32 %v2216, %v2256
    %v2258 = vpop.f32.mrb[0].mxu0
    %v2259 = vpop.f32.mrb[0].mxu0
    %2260 = vdwg.mxu0
    %v2261 = vmul.f32 %v2257, 0.5
    %v2262 = vmul.f32 %v2261, 1.442695
    %v2263 = vpow.pop %v2262
    %v2264 = vld [vmem:[%s1] sm:$0xff]
    %v2265 = vmul.f32 %v2264, %v2263
    %v2266 = vadd.f32 %v2255, %v2265
    %v2267 = vpack.c.bf16 %v2266, %v2266
    %v2268 = vld [vmem:[%s6] sm:$0xff]
    %v2269 = vld [vmem:[%s6 + $0x8] sm:$0xff]
    %v2270 = vld [vmem:[%s6 + $0x10] sm:$0xff]
    %v2271 = vld [vmem:[%s6 + $0x18] sm:$0xff]
    %v2272 = vld [vmem:[%s6 + $0x20] sm:$0xff]
    %v2273 = vld [vmem:[%s6 + $0x28] sm:$0xff]
    %v2274 = vld [vmem:[%s6 + $0x30] sm:$0xff]
    %v2275 = vld [vmem:[%s6 + $0x38] sm:$0xff]
    %v2276 = vld [vmem:[%s6 + $0x40] sm:$0xff]
    %v2277 = vld [vmem:[%s6 + $0x48] sm:$0xff]
    %v2278 = vld [vmem:[%s6 + $0x50] sm:$0xff]
    %v2279 = vld [vmem:[%s6 + $0x58] sm:$0xff]
    %v2280 = vld [vmem:[%s6 + $0x60] sm:$0xff]
    %v2281 = vld [vmem:[%s6 + $0x68] sm:$0xff]
    %v2282 = vld [vmem:[%s6 + $0x70] sm:$0xff]
    %v2283 = vld [vmem:[%s6 + $0x78] sm:$0xff]
    %v2284 = vld [vmem:[%s6 + $0x80] sm:$0xff]
    %v2285 = vld [vmem:[%s6 + $0x88] sm:$0xff]
    %v2286 = vld [vmem:[%s6 + $0x90] sm:$0xff]
    %v2287 = vld [vmem:[%s6 + $0x98] sm:$0xff]
    %v2288 = vld [vmem:[%s6 + $0xa0] sm:$0xff]
    %v2289 = vld [vmem:[%s6 + $0xa8] sm:$0xff]
    %v2290 = vld [vmem:[%s6 + $0xb0] sm:$0xff]
    %v2291 = vld [vmem:[%s6 + $0xb8] sm:$0xff]
    %v2292 = vld [vmem:[%s6 + $0xc0] sm:$0xff]
    %v2293 = vld [vmem:[%s6 + $0xc8] sm:$0xff]
    %v2294 = vld [vmem:[%s6 + $0xd0] sm:$0xff]
    %v2295 = vld [vmem:[%s6 + $0xd8] sm:$0xff]
    %v2296 = vld [vmem:[%s6 + $0xe0] sm:$0xff]
    %v2297 = vld [vmem:[%s6 + $0xe8] sm:$0xff]
    %v2298 = vld [vmem:[%s6 + $0xf0] sm:$0xff]
    %v2299 = vld [vmem:[%s6 + $0xf8] sm:$0xff]
    %v2300 = vld [vmem:[%s7] sm:$0xf]
    %v2302 = vlaneseq
    %v2303 = vshrl.u32 %v2302, 7
    %v2304 = vsub.s32 0, %v2303
    %v2305 = vrot.slane %v2300, %v2304
    %v2306 = vlaneseq
    %v2307 = vshrl.u32 %v2306, 7
    %v2308 = vsub.s32 1, %v2307
    %v2309 = vrot.slane %v2300, %v2308
    %v2310 = vlaneseq
    %v2311 = vshrl.u32 %v2310, 7
    %v2312 = vsub.s32 2, %v2311
    %v2313 = vrot.slane %v2300, %v2312
    %v2314 = vlaneseq
    %v2315 = vshrl.u32 %v2314, 7
    %v2316 = vsub.s32 3, %v2315
    %v2317 = vrot.slane %v2300, %v2316
    %v2354 = vunpack.c.l.b16 %v2268
    %v2355 = vunpack.c.h.b16 %v2268
    %v2356 = vunpack.c.l.b16 %v2269
    %v2357 = vunpack.c.h.b16 %v2269
    %v2358 = vunpack.c.l.b16 %v2270
    %v2359 = vunpack.c.h.b16 %v2270
    %v2360 = vunpack.c.l.b16 %v2271
    %v2361 = vunpack.c.h.b16 %v2271
    %v2362 = vunpack.c.l.b16 %v2272
    %v2363 = vunpack.c.h.b16 %v2272
    %v2364 = vunpack.c.l.b16 %v2273
    %v2365 = vunpack.c.h.b16 %v2273
    %v2366 = vunpack.c.l.b16 %v2274
    %v2367 = vunpack.c.h.b16 %v2274
    %v2368 = vunpack.c.l.b16 %v2275
    %v2369 = vunpack.c.h.b16 %v2275
    %v2370 = vunpack.c.l.b16 %v2276
    %v2371 = vunpack.c.h.b16 %v2276
    %v2372 = vunpack.c.l.b16 %v2277
    %v2373 = vunpack.c.h.b16 %v2277
    %v2374 = vunpack.c.l.b16 %v2278
    %v2375 = vunpack.c.h.b16 %v2278
    %v2376 = vunpack.c.l.b16 %v2279
    %v2377 = vunpack.c.h.b16 %v2279
    %v2378 = vunpack.c.l.b16 %v2280
    %v2379 = vunpack.c.h.b16 %v2280
    %v2380 = vunpack.c.l.b16 %v2281
    %v2381 = vunpack.c.h.b16 %v2281
    %v2382 = vunpack.c.l.b16 %v2282
    %v2383 = vunpack.c.h.b16 %v2282
    %v2384 = vunpack.c.l.b16 %v2283
    %v2385 = vunpack.c.h.b16 %v2283
    %v2386 = vunpack.c.l.b16 %v2284
    %v2387 = vunpack.c.h.b16 %v2284
    %v2388 = vunpack.c.l.b16 %v2285
    %v2389 = vunpack.c.h.b16 %v2285
    %v2390 = vunpack.c.l.b16 %v2286
    %v2391 = vunpack.c.h.b16 %v2286
    %v2392 = vunpack.c.l.b16 %v2287
    %v2393 = vunpack.c.h.b16 %v2287
    %v2394 = vunpack.c.l.b16 %v2288
    %v2395 = vunpack.c.h.b16 %v2288
    %v2396 = vunpack.c.l.b16 %v2289
    %v2397 = vunpack.c.h.b16 %v2289
    %v2398 = vunpack.c.l.b16 %v2290
    %v2399 = vunpack.c.h.b16 %v2290
    %v2400 = vunpack.c.l.b16 %v2291
    %v2401 = vunpack.c.h.b16 %v2291
    %v2402 = vunpack.c.l.b16 %v2292
    %v2403 = vunpack.c.h.b16 %v2292
    %v2404 = vunpack.c.l.b16 %v2293
    %v2405 = vunpack.c.h.b16 %v2293
    %v2406 = vunpack.c.l.b16 %v2294
    %v2407 = vunpack.c.h.b16 %v2294
    %v2408 = vunpack.c.l.b16 %v2295
    %v2409 = vunpack.c.h.b16 %v2295
    %v2410 = vunpack.c.l.b16 %v2296
    %v2411 = vunpack.c.h.b16 %v2296
    %v2412 = vunpack.c.l.b16 %v2297
    %v2413 = vunpack.c.h.b16 %v2297
    %v2414 = vunpack.c.l.b16 %v2298
    %v2415 = vunpack.c.h.b16 %v2298
    %v2416 = vunpack.c.l.b16 %v2299
    %v2417 = vunpack.c.h.b16 %v2299
    %v2418 = vpack.c.b16 %v2358, %v2354
    %v2419 = vpack.c.b16 %v2359, %v2355
    %v2420 = vpack.c.b16 %v2360, %v2356
    %v2421 = vpack.c.b16 %v2361, %v2357
    %v2422 = vpack.c.b16 %v2366, %v2362
    %v2423 = vpack.c.b16 %v2367, %v2363
    %v2424 = vpack.c.b16 %v2368, %v2364
    %v2425 = vpack.c.b16 %v2369, %v2365
    %v2426 = vpack.c.b16 %v2374, %v2370
    %v2427 = vpack.c.b16 %v2375, %v2371
    %v2428 = vpack.c.b16 %v2376, %v2372
    %v2429 = vpack.c.b16 %v2377, %v2373
    %v2430 = vpack.c.b16 %v2382, %v2378
    %v2431 = vpack.c.b16 %v2383, %v2379
    %v2432 = vpack.c.b16 %v2384, %v2380
    %v2433 = vpack.c.b16 %v2385, %v2381
    %v2434 = vpack.c.b16 %v2390, %v2386
    %v2435 = vpack.c.b16 %v2391, %v2387
    %v2436 = vpack.c.b16 %v2392, %v2388
    %v2437 = vpack.c.b16 %v2393, %v2389
    %v2438 = vpack.c.b16 %v2398, %v2394
    %v2439 = vpack.c.b16 %v2399, %v2395
    %v2440 = vpack.c.b16 %v2400, %v2396
    %v2441 = vpack.c.b16 %v2401, %v2397
    %v2442 = vpack.c.b16 %v2406, %v2402
    %v2443 = vpack.c.b16 %v2407, %v2403
    %v2444 = vpack.c.b16 %v2408, %v2404
    %v2445 = vpack.c.b16 %v2409, %v2405
    %v2446 = vpack.c.b16 %v2414, %v2410
    %v2447 = vpack.c.b16 %v2415, %v2411
    %v2448 = vpack.c.b16 %v2416, %v2412
    %v2449 = vpack.c.b16 %v2417, %v2413
    %2482 = vmatprep.subr.bf16.mxu0 %v2419
    %2483 = vmatpush1.bf16.msra.mxu0 %v2418
    %2484 = vmatprep.subr.bf16.mxu0 %v2423
    %2485 = vmatpush1.bf16.msra.mxu0 %v2422
    %2486 = vmatprep.subr.bf16.mxu0 %v2427
    %2487 = vmatpush1.bf16.msra.mxu0 %v2426
    %2488 = vmatprep.subr.bf16.mxu0 %v2431
    %2489 = vmatpush1.bf16.msra.mxu0 %v2430
    %2490 = vmatprep.subr.bf16.mxu0 %v2435
    %2491 = vmatpush1.bf16.msra.mxu0 %v2434
    %2492 = vmatprep.subr.bf16.mxu0 %v2439
    %2493 = vmatpush1.bf16.msra.mxu0 %v2438
    %2494 = vmatprep.subr.bf16.mxu0 %v2443
    %2495 = vmatpush1.bf16.msra.mxu0 %v2442
    %2496 = vmatprep.subr.bf16.mxu0 %v2447
    %2497 = vmatpush1.bf16.msra.mxu0 %v2446
    %2498 = vmatprep.subr.bf16.mxu0 0
    %2499 = vmatpush1.bf16.msra.mxu0 0
    %2500 = vmatprep.subr.bf16.mxu0 0
    %2501 = vmatpush1.bf16.msra.mxu0 0
    %2502 = vmatprep.subr.bf16.mxu0 0
    %2503 = vmatpush1.bf16.msra.mxu0 0
    %2504 = vmatprep.subr.bf16.mxu0 0
    %2505 = vmatpush1.bf16.msra.mxu0 0
    %2506 = vmatprep.subr.bf16.mxu0 0
    %2507 = vmatpush1.bf16.msra.mxu0 0
    %2508 = vmatprep.subr.bf16.mxu0 0
    %2509 = vmatpush1.bf16.msra.mxu0 0
    %2510 = vmatprep.subr.bf16.mxu0 0
    %2511 = vmatpush1.bf16.msra.mxu0 0
    %2512 = vmatprep.subr.bf16.mxu0 0
    %2513 = vmatpush1.bf16.msra.mxu0 0
    %2514 = vmatprep.mubr.bf16.mxu0 0
    %2515 = vmatmul.mubr.bf16.gmra.mrb[0].mxu0 %v2267
    %v2516 = vpop.f32.mrb[0].mxu0
    %v2517 = vadd.f32 %v2305, %v2516
    %v2518 = vpop.f32.mrb[0].mxu0
    %v2519 = vadd.f32 %v2309, %v2518
    %v2520 = vpop.f32.mrb[0].mxu0
    %v2521 = vpop.f32.mrb[0].mxu0
    %2522 = vdwg.mxu0
    %2523 = vmatprep.subr.bf16.mxu0 %v2421
    %2524 = vmatpush1.bf16.msra.mxu0 %v2420
    %2525 = vmatprep.subr.bf16.mxu0 %v2425
    %2526 = vmatpush1.bf16.msra.mxu0 %v2424
    %2527 = vmatprep.subr.bf16.mxu0 %v2429
    %2528 = vmatpush1.bf16.msra.mxu0 %v2428
    %2529 = vmatprep.subr.bf16.mxu0 %v2433
    %2530 = vmatpush1.bf16.msra.mxu0 %v2432
    %2531 = vmatprep.subr.bf16.mxu0 %v2437
    %2532 = vmatpush1.bf16.msra.mxu0 %v2436
    %2533 = vmatprep.subr.bf16.mxu0 %v2441
    %2534 = vmatpush1.bf16.msra.mxu0 %v2440
    %2535 = vmatprep.subr.bf16.mxu0 %v2445
    %2536 = vmatpush1.bf16.msra.mxu0 %v2444
    %2537 = vmatprep.subr.bf16.mxu0 %v2449
    %2538 = vmatpush1.bf16.msra.mxu0 %v2448
    %2539 = vmatprep.subr.bf16.mxu0 0
    %2540 = vmatpush1.bf16.msra.mxu0 0
    %2541 = vmatprep.subr.bf16.mxu0 0
    %2542 = vmatpush1.bf16.msra.mxu0 0
    %2543 = vmatprep.subr.bf16.mxu0 0
    %2544 = vmatpush1.bf16.msra.mxu0 0
    %2545 = vmatprep.subr.bf16.mxu0 0
    %2546 = vmatpush1.bf16.msra.mxu0 0
    %2547 = vmatprep.subr.bf16.mxu0 0
    %2548 = vmatpush1.bf16.msra.mxu0 0
    %2549 = vmatprep.subr.bf16.mxu0 0
    %2550 = vmatpush1.bf16.msra.mxu0 0
    %2551 = vmatprep.subr.bf16.mxu0 0
    %2552 = vmatpush1.bf16.msra.mxu0 0
    %2553 = vmatprep.subr.bf16.mxu0 0
    %2554 = vmatpush1.bf16.msra.mxu0 0
    %2555 = vmatprep.mubr.bf16.mxu0 0
    %2556 = vmatmul.mubr.bf16.gmra.mrb[0].mxu0 %v2267
    %v2557 = vpop.f32.mrb[0].mxu0
    %v2558 = vadd.f32 %v2313, %v2557
    %v2559 = vpop.f32.mrb[0].mxu0
    %v2560 = vadd.f32 %v2317, %v2559
    %v2561 = vpop.f32.mrb[0].mxu0
    %v2562 = vpop.f32.mrb[0].mxu0
    %2563 = vdwg.mxu0
    %v2564 = vmax.f32 %v2517, 0.0
    %v2565 = vmax.f32 %v2519, 0.0
    %v2566 = vmax.f32 %v2558, 0.0
    %v2567 = vmax.f32 %v2560, 0.0
    %v2568 = vpack.c.bf16 %v2564, %v2564
    %v2569 = vpack.c.bf16 %v2565, %v2565
    %v2570 = vpack.c.bf16 %v2566, %v2566
    %v2571 = vpack.c.bf16 %v2567, %v2567
    %v2572 = vld [vmem:[#allocation5] sm:$0xff]
    %v2573 = vld [vmem:[#allocation5 + $0x8] sm:$0xff]
    %v2574 = vld [vmem:[#allocation5 + $0x10] sm:$0xff]
    %v2575 = vld [vmem:[#allocation5 + $0x18] sm:$0xf]
    %v2576 = vld [vmem:[#allocation5 + $0x1c] sm:$0xff]
    %v2577 = vld [vmem:[#allocation5 + $0x24] sm:$0xff]
    %v2578 = vld [vmem:[#allocation5 + $0x2c] sm:$0xff]
    %v2579 = vld [vmem:[#allocation5 + $0x34] sm:$0xf]
    %v2580 = vld [vmem:[#allocation5 + $0x38] sm:$0xff]
    %v2581 = vld [vmem:[#allocation5 + $0x40] sm:$0xff]
    %v2582 = vld [vmem:[#allocation5 + $0x48] sm:$0xff]
    %v2583 = vld [vmem:[#allocation5 + $0x50] sm:$0xf]
    %v2584 = vld [vmem:[#allocation5 + $0x54] sm:$0xff]
    %v2585 = vld [vmem:[#allocation5 + $0x5c] sm:$0xff]
    %v2586 = vld [vmem:[#allocation5 + $0x64] sm:$0xff]
    %v2587 = vld [vmem:[#allocation5 + $0x6c] sm:$0xf]
    %v2588 = vld [vmem:[#allocation5 + $0x70] sm:$0xff]
    %v2589 = vld [vmem:[#allocation5 + $0x78] sm:$0xff]
    %v2590 = vld [vmem:[#allocation5 + $0x80] sm:$0xff]
    %v2591 = vld [vmem:[#allocation5 + $0x88] sm:$0xf]
    %v2592 = vld [vmem:[#allocation5 + $0x8c] sm:$0xff]
    %v2593 = vld [vmem:[#allocation5 + $0x94] sm:$0xff]
    %v2594 = vld [vmem:[#allocation5 + $0x9c] sm:$0xff]
    %v2595 = vld [vmem:[#allocation5 + $0xa4] sm:$0xf]
    %v2596 = vld [vmem:[#allocation5 + $0xa8] sm:$0xff]
    %v2597 = vld [vmem:[#allocation5 + $0xb0] sm:$0xff]
    %v2598 = vld [vmem:[#allocation5 + $0xb8] sm:$0xff]
    %v2599 = vld [vmem:[#allocation5 + $0xc0] sm:$0xf]
    %v2600 = vld [vmem:[#allocation5 + $0xc4] sm:$0xff]
    %v2601 = vld [vmem:[#allocation5 + $0xcc] sm:$0xff]
    %v2602 = vld [vmem:[#allocation5 + $0xd4] sm:$0xff]
    %v2603 = vld [vmem:[#allocation5 + $0xdc] sm:$0xf]
    %v2604 = vld [vmem:[#allocation5 + $0xe0] sm:$0xff]
    %v2605 = vld [vmem:[#allocation5 + $0xe8] sm:$0xff]
    %v2606 = vld [vmem:[#allocation5 + $0xf0] sm:$0xff]
    %v2607 = vld [vmem:[#allocation5 + $0xf8] sm:$0xf]
    %v2608 = vld [vmem:[#allocation5 + $0xfc] sm:$0xff]
    %v2609 = vld [vmem:[#allocation5 + $0x104] sm:$0xff]
    %v2610 = vld [vmem:[#allocation5 + $0x10c] sm:$0xff]
    %v2611 = vld [vmem:[#allocation5 + $0x114] sm:$0xf]
    %v2612 = vld [vmem:[#allocation5 + $0x118] sm:$0xff]
    %v2613 = vld [vmem:[#allocation5 + $0x120] sm:$0xff]
    %v2614 = vld [vmem:[#allocation5 + $0x128] sm:$0xff]
    %v2615 = vld [vmem:[#allocation5 + $0x130] sm:$0xf]
    %v2616 = vld [vmem:[#allocation5 + $0x134] sm:$0xff]
    %v2617 = vld [vmem:[#allocation5 + $0x13c] sm:$0xff]
    %v2618 = vld [vmem:[#allocation5 + $0x144] sm:$0xff]
    %v2619 = vld [vmem:[#allocation5 + $0x14c] sm:$0xf]
    %v2620 = vld [vmem:[#allocation5 + $0x150] sm:$0xff]
    %v2621 = vld [vmem:[#allocation5 + $0x158] sm:$0xff]
    %v2622 = vld [vmem:[#allocation5 + $0x160] sm:$0xff]
    %v2623 = vld [vmem:[#allocation5 + $0x168] sm:$0xf]
    %v2624 = vld [vmem:[#allocation5 + $0x16c] sm:$0xff]
    %v2625 = vld [vmem:[#allocation5 + $0x174] sm:$0xff]
    %v2626 = vld [vmem:[#allocation5 + $0x17c] sm:$0xff]
    %v2627 = vld [vmem:[#allocation5 + $0x184] sm:$0xf]
    %v2628 = vld [vmem:[#allocation5 + $0x188] sm:$0xff]
    %v2629 = vld [vmem:[#allocation5 + $0x190] sm:$0xff]
    %v2630 = vld [vmem:[#allocation5 + $0x198] sm:$0xff]
    %v2631 = vld [vmem:[#allocation5 + $0x1a0] sm:$0xf]
    %v2632 = vld [vmem:[#allocation5 + $0x1a4] sm:$0xff]
    %v2633 = vld [vmem:[#allocation5 + $0x1ac] sm:$0xff]
    %v2634 = vld [vmem:[#allocation5 + $0x1b4] sm:$0xff]
    %v2635 = vld [vmem:[#allocation5 + $0x1bc] sm:$0xf]
    %v2636 = vld [vmem:[#allocation5 + $0x1c0] sm:$0xff]
    %v2637 = vld [vmem:[#allocation5 + $0x1c8] sm:$0xff]
    %v2638 = vld [vmem:[#allocation5 + $0x1d0] sm:$0xff]
    %v2639 = vld [vmem:[#allocation5 + $0x1d8] sm:$0xf]
    %v2640 = vld [vmem:[#allocation5 + $0x1dc] sm:$0xff]
    %v2641 = vld [vmem:[#allocation5 + $0x1e4] sm:$0xff]
    %v2642 = vld [vmem:[#allocation5 + $0x1ec] sm:$0xff]
    %v2643 = vld [vmem:[#allocation5 + $0x1f4] sm:$0xf]
    %v2644 = vld [vmem:[#allocation5 + $0x1f8] sm:$0xff]
    %v2645 = vld [vmem:[#allocation5 + $0x200] sm:$0xff]
    %v2646 = vld [vmem:[#allocation5 + $0x208] sm:$0xff]
    %v2647 = vld [vmem:[#allocation5 + $0x210] sm:$0xf]
    %v2648 = vld [vmem:[#allocation5 + $0x214] sm:$0xff]
    %v2649 = vld [vmem:[#allocation5 + $0x21c] sm:$0xff]
    %v2650 = vld [vmem:[#allocation5 + $0x224] sm:$0xff]
    %v2651 = vld [vmem:[#allocation5 + $0x22c] sm:$0xf]
    %v2652 = vld [vmem:[#allocation5 + $0x230] sm:$0xff]
    %v2653 = vld [vmem:[#allocation5 + $0x238] sm:$0xff]
    %v2654 = vld [vmem:[#allocation5 + $0x240] sm:$0xff]
    %v2655 = vld [vmem:[#allocation5 + $0x248] sm:$0xf]
    %v2656 = vld [vmem:[#allocation5 + $0x24c] sm:$0xff]
    %v2657 = vld [vmem:[#allocation5 + $0x254] sm:$0xff]
    %v2658 = vld [vmem:[#allocation5 + $0x25c] sm:$0xff]
    %v2659 = vld [vmem:[#allocation5 + $0x264] sm:$0xf]
    %v2660 = vld [vmem:[#allocation5 + $0x268] sm:$0xff]
    %v2661 = vld [vmem:[#allocation5 + $0x270] sm:$0xff]
    %v2662 = vld [vmem:[#allocation5 + $0x278] sm:$0xff]
    %v2663 = vld [vmem:[#allocation5 + $0x280] sm:$0xf]
    %v2664 = vld [vmem:[#allocation5 + $0x284] sm:$0xff]
    %v2665 = vld [vmem:[#allocation5 + $0x28c] sm:$0xff]
    %v2666 = vld [vmem:[#allocation5 + $0x294] sm:$0xff]
    %v2667 = vld [vmem:[#allocation5 + $0x29c] sm:$0xf]
    %v2668 = vld [vmem:[#allocation5 + $0x2a0] sm:$0xff]
    %v2669 = vld [vmem:[#allocation5 + $0x2a8] sm:$0xff]
    %v2670 = vld [vmem:[#allocation5 + $0x2b0] sm:$0xff]
    %v2671 = vld [vmem:[#allocation5 + $0x2b8] sm:$0xf]
    %v2672 = vld [vmem:[#allocation5 + $0x2bc] sm:$0xff]
    %v2673 = vld [vmem:[#allocation5 + $0x2c4] sm:$0xff]
    %v2674 = vld [vmem:[#allocation5 + $0x2cc] sm:$0xff]
    %v2675 = vld [vmem:[#allocation5 + $0x2d4] sm:$0xf]
    %v2676 = vld [vmem:[#allocation5 + $0x2d8] sm:$0xff]
    %v2677 = vld [vmem:[#allocation5 + $0x2e0] sm:$0xff]
    %v2678 = vld [vmem:[#allocation5 + $0x2e8] sm:$0xff]
    %v2679 = vld [vmem:[#allocation5 + $0x2f0] sm:$0xf]
    %v2680 = vld [vmem:[#allocation5 + $0x2f4] sm:$0xff]
    %v2681 = vld [vmem:[#allocation5 + $0x2fc] sm:$0xff]
    %v2682 = vld [vmem:[#allocation5 + $0x304] sm:$0xff]
    %v2683 = vld [vmem:[#allocation5 + $0x30c] sm:$0xf]
    %v2684 = vld [vmem:[#allocation5 + $0x310] sm:$0xff]
    %v2685 = vld [vmem:[#allocation5 + $0x318] sm:$0xff]
    %v2686 = vld [vmem:[#allocation5 + $0x320] sm:$0xff]
    %v2687 = vld [vmem:[#allocation5 + $0x328] sm:$0xf]
    %v2688 = vld [vmem:[#allocation5 + $0x32c] sm:$0xff]
    %v2689 = vld [vmem:[#allocation5 + $0x334] sm:$0xff]
    %v2690 = vld [vmem:[#allocation5 + $0x33c] sm:$0xff]
    %v2691 = vld [vmem:[#allocation5 + $0x344] sm:$0xf]
    %v2692 = vld [vmem:[#allocation5 + $0x348] sm:$0xff]
    %v2693 = vld [vmem:[#allocation5 + $0x350] sm:$0xff]
    %v2694 = vld [vmem:[#allocation5 + $0x358] sm:$0xff]
    %v2695 = vld [vmem:[#allocation5 + $0x360] sm:$0xf]
    %v2696 = vld [vmem:[#allocation5 + $0x364] sm:$0xff]
    %v2697 = vld [vmem:[#allocation5 + $0x36c] sm:$0xff]
    %v2698 = vld [vmem:[#allocation5 + $0x374] sm:$0xff]
    %v2699 = vld [vmem:[#allocation5 + $0x37c] sm:$0xf]
    %v2700 = vld [vmem:[#allocation5 + $0x380] sm:$0xff]
    %v2701 = vld [vmem:[#allocation5 + $0x388] sm:$0xff]
    %v2702 = vld [vmem:[#allocation5 + $0x390] sm:$0xff]
    %v2703 = vld [vmem:[#allocation5 + $0x398] sm:$0xf]
    %v2704 = vld [vmem:[#allocation5 + $0x39c] sm:$0xff]
    %v2705 = vld [vmem:[#allocation5 + $0x3a4] sm:$0xff]
    %v2706 = vld [vmem:[#allocation5 + $0x3ac] sm:$0xff]
    %v2707 = vld [vmem:[#allocation5 + $0x3b4] sm:$0xf]
    %v2708 = vld [vmem:[#allocation5 + $0x3b8] sm:$0xff]
    %v2709 = vld [vmem:[#allocation5 + $0x3c0] sm:$0xff]
    %v2710 = vld [vmem:[#allocation5 + $0x3c8] sm:$0xff]
    %v2711 = vld [vmem:[#allocation5 + $0x3d0] sm:$0xf]
    %v2712 = vld [vmem:[#allocation5 + $0x3d4] sm:$0xff]
    %v2713 = vld [vmem:[#allocation5 + $0x3dc] sm:$0xff]
    %v2714 = vld [vmem:[#allocation5 + $0x3e4] sm:$0xff]
    %v2715 = vld [vmem:[#allocation5 + $0x3ec] sm:$0xf]
    %v2716 = vld [vmem:[#allocation5 + $0x3f0] sm:$0xff]
    %v2717 = vld [vmem:[#allocation5 + $0x3f8] sm:$0xff]
    %v2718 = vld [vmem:[#allocation5 + $0x400] sm:$0xff]
    %v2719 = vld [vmem:[#allocation5 + $0x408] sm:$0xf]
    %v2720 = vld [vmem:[#allocation5 + $0x40c] sm:$0xff]
    %v2721 = vld [vmem:[#allocation5 + $0x414] sm:$0xff]
    %v2722 = vld [vmem:[#allocation5 + $0x41c] sm:$0xff]
    %v2723 = vld [vmem:[#allocation5 + $0x424] sm:$0xf]
    %v2724 = vld [vmem:[#allocation5 + $0x428] sm:$0xff]
    %v2725 = vld [vmem:[#allocation5 + $0x430] sm:$0xff]
    %v2726 = vld [vmem:[#allocation5 + $0x438] sm:$0xff]
    %v2727 = vld [vmem:[#allocation5 + $0x440] sm:$0xf]
    %v2728 = vld [vmem:[#allocation5 + $0x444] sm:$0xff]
    %v2729 = vld [vmem:[#allocation5 + $0x44c] sm:$0xff]
    %v2730 = vld [vmem:[#allocation5 + $0x454] sm:$0xff]
    %v2731 = vld [vmem:[#allocation5 + $0x45c] sm:$0xf]
    %v2732 = vld [vmem:[#allocation5 + $0x460] sm:$0xff]
    %v2733 = vld [vmem:[#allocation5 + $0x468] sm:$0xff]
    %v2734 = vld [vmem:[#allocation5 + $0x470] sm:$0xff]
    %v2735 = vld [vmem:[#allocation5 + $0x478] sm:$0xf]
    %v2736 = vld [vmem:[#allocation5 + $0x47c] sm:$0xff]
    %v2737 = vld [vmem:[#allocation5 + $0x484] sm:$0xff]
    %v2738 = vld [vmem:[#allocation5 + $0x48c] sm:$0xff]
    %v2739 = vld [vmem:[#allocation5 + $0x494] sm:$0xf]
    %v2740 = vld [vmem:[#allocation5 + $0x498] sm:$0xff]
    %v2741 = vld [vmem:[#allocation5 + $0x4a0] sm:$0xff]
    %v2742 = vld [vmem:[#allocation5 + $0x4a8] sm:$0xff]
    %v2743 = vld [vmem:[#allocation5 + $0x4b0] sm:$0xf]
    %v2744 = vld [vmem:[#allocation5 + $0x4b4] sm:$0xff]
    %v2745 = vld [vmem:[#allocation5 + $0x4bc] sm:$0xff]
    %v2746 = vld [vmem:[#allocation5 + $0x4c4] sm:$0xff]
    %v2747 = vld [vmem:[#allocation5 + $0x4cc] sm:$0xf]
    %v2748 = vld [vmem:[#allocation5 + $0x4d0] sm:$0xff]
    %v2749 = vld [vmem:[#allocation5 + $0x4d8] sm:$0xff]
    %v2750 = vld [vmem:[#allocation5 + $0x4e0] sm:$0xff]
    %v2751 = vld [vmem:[#allocation5 + $0x4e8] sm:$0xf]
    %v2752 = vld [vmem:[#allocation5 + $0x4ec] sm:$0xff]
    %v2753 = vld [vmem:[#allocation5 + $0x4f4] sm:$0xff]
    %v2754 = vld [vmem:[#allocation5 + $0x4fc] sm:$0xff]
    %v2755 = vld [vmem:[#allocation5 + $0x504] sm:$0xf]
    %v2756 = vld [vmem:[#allocation5 + $0x508] sm:$0xff]
    %v2757 = vld [vmem:[#allocation5 + $0x510] sm:$0xff]
    %v2758 = vld [vmem:[#allocation5 + $0x518] sm:$0xff]
    %v2759 = vld [vmem:[#allocation5 + $0x520] sm:$0xf]
    %v2760 = vld [vmem:[#allocation5 + $0x524] sm:$0xff]
    %v2761 = vld [vmem:[#allocation5 + $0x52c] sm:$0xff]
    %v2762 = vld [vmem:[#allocation5 + $0x534] sm:$0xff]
    %v2763 = vld [vmem:[#allocation5 + $0x53c] sm:$0xf]
    %v2764 = vld [vmem:[#allocation5 + $0x540] sm:$0xff]
    %v2765 = vld [vmem:[#allocation5 + $0x548] sm:$0xff]
    %v2766 = vld [vmem:[#allocation5 + $0x550] sm:$0xff]
    %v2767 = vld [vmem:[#allocation5 + $0x558] sm:$0xf]
    %v2768 = vld [vmem:[#allocation5 + $0x55c] sm:$0xff]
    %v2769 = vld [vmem:[#allocation5 + $0x564] sm:$0xff]
    %v2770 = vld [vmem:[#allocation5 + $0x56c] sm:$0xff]
    %v2771 = vld [vmem:[#allocation5 + $0x574] sm:$0xf]
    %v2772 = vld [vmem:[#allocation5 + $0x578] sm:$0xff]
    %v2773 = vld [vmem:[#allocation5 + $0x580] sm:$0xff]
    %v2774 = vld [vmem:[#allocation5 + $0x588] sm:$0xff]
    %v2775 = vld [vmem:[#allocation5 + $0x590] sm:$0xf]
    %v2776 = vld [vmem:[#allocation5 + $0x594] sm:$0xff]
    %v2777 = vld [vmem:[#allocation5 + $0x59c] sm:$0xff]
    %v2778 = vld [vmem:[#allocation5 + $0x5a4] sm:$0xff]
    %v2779 = vld [vmem:[#allocation5 + $0x5ac] sm:$0xf]
    %v2780 = vld [vmem:[#allocation5 + $0x5b0] sm:$0xff]
    %v2781 = vld [vmem:[#allocation5 + $0x5b8] sm:$0xff]
    %v2782 = vld [vmem:[#allocation5 + $0x5c0] sm:$0xff]
    %v2783 = vld [vmem:[#allocation5 + $0x5c8] sm:$0xf]
    %v2784 = vld [vmem:[#allocation5 + $0x5cc] sm:$0xff]
    %v2785 = vld [vmem:[#allocation5 + $0x5d4] sm:$0xff]
    %v2786 = vld [vmem:[#allocation5 + $0x5dc] sm:$0xff]
    %v2787 = vld [vmem:[#allocation5 + $0x5e4] sm:$0xf]
    %v2788 = vld [vmem:[#allocation5 + $0x5e8] sm:$0xff]
    %v2789 = vld [vmem:[#allocation5 + $0x5f0] sm:$0xff]
    %v2790 = vld [vmem:[#allocation5 + $0x5f8] sm:$0xff]
    %v2791 = vld [vmem:[#allocation5 + $0x600] sm:$0xf]
    %v2792 = vld [vmem:[#allocation5 + $0x604] sm:$0xff]
    %v2793 = vld [vmem:[#allocation5 + $0x60c] sm:$0xff]
    %v2794 = vld [vmem:[#allocation5 + $0x614] sm:$0xff]
    %v2795 = vld [vmem:[#allocation5 + $0x61c] sm:$0xf]
    %v2796 = vld [vmem:[#allocation5 + $0x620] sm:$0xff]
    %v2797 = vld [vmem:[#allocation5 + $0x628] sm:$0xff]
    %v2798 = vld [vmem:[#allocation5 + $0x630] sm:$0xff]
    %v2799 = vld [vmem:[#allocation5 + $0x638] sm:$0xf]
    %v2800 = vld [vmem:[#allocation5 + $0x63c] sm:$0xff]
    %v2801 = vld [vmem:[#allocation5 + $0x644] sm:$0xff]
    %v2802 = vld [vmem:[#allocation5 + $0x64c] sm:$0xff]
    %v2803 = vld [vmem:[#allocation5 + $0x654] sm:$0xf]
    %v2804 = vld [vmem:[#allocation5 + $0x658] sm:$0xff]
    %v2805 = vld [vmem:[#allocation5 + $0x660] sm:$0xff]
    %v2806 = vld [vmem:[#allocation5 + $0x668] sm:$0xff]
    %v2807 = vld [vmem:[#allocation5 + $0x670] sm:$0xf]
    %v2808 = vld [vmem:[#allocation5 + $0x674] sm:$0xff]
    %v2809 = vld [vmem:[#allocation5 + $0x67c] sm:$0xff]
    %v2810 = vld [vmem:[#allocation5 + $0x684] sm:$0xff]
    %v2811 = vld [vmem:[#allocation5 + $0x68c] sm:$0xf]
    %v2812 = vld [vmem:[#allocation5 + $0x690] sm:$0xff]
    %v2813 = vld [vmem:[#allocation5 + $0x698] sm:$0xff]
    %v2814 = vld [vmem:[#allocation5 + $0x6a0] sm:$0xff]
    %v2815 = vld [vmem:[#allocation5 + $0x6a8] sm:$0xf]
    %v2816 = vld [vmem:[#allocation5 + $0x6ac] sm:$0xff]
    %v2817 = vld [vmem:[#allocation5 + $0x6b4] sm:$0xff]
    %v2818 = vld [vmem:[#allocation5 + $0x6bc] sm:$0xff]
    %v2819 = vld [vmem:[#allocation5 + $0x6c4] sm:$0xf]
    %v2820 = vld [vmem:[#allocation5 + $0x6c8] sm:$0xff]
    %v2821 = vld [vmem:[#allocation5 + $0x6d0] sm:$0xff]
    %v2822 = vld [vmem:[#allocation5 + $0x6d8] sm:$0xff]
    %v2823 = vld [vmem:[#allocation5 + $0x6e0] sm:$0xf]
    %v2824 = vld [vmem:[#allocation5 + $0x6e4] sm:$0xff]
    %v2825 = vld [vmem:[#allocation5 + $0x6ec] sm:$0xff]
    %v2826 = vld [vmem:[#allocation5 + $0x6f4] sm:$0xff]
    %v2827 = vld [vmem:[#allocation5 + $0x6fc] sm:$0xf]
    %v2828 = vld [vmem:[%s9] sm:$0xff]
    %v2830 = vlaneseq
    %v2831 = vshrl.u32 %v2830, 7
    %v2832 = vsub.s32 0, %v2831
    %v2833 = vrot.slane %v2828, %v2832
    %v2834 = vlaneseq
    %v2835 = vshrl.u32 %v2834, 7
    %v2836 = vsub.s32 1, %v2835
    %v2837 = vrot.slane %v2828, %v2836
    %v2838 = vlaneseq
    %v2839 = vshrl.u32 %v2838, 7
    %v2840 = vsub.s32 2, %v2839
    %v2841 = vrot.slane %v2828, %v2840
    %v2842 = vlaneseq
    %v2843 = vshrl.u32 %v2842, 7
    %v2844 = vsub.s32 3, %v2843
    %v2845 = vrot.slane %v2828, %v2844
    %v2846 = vlaneseq
    %v2847 = vshrl.u32 %v2846, 7
    %v2848 = vsub.s32 4, %v2847
    %v2849 = vrot.slane %v2828, %v2848
    %v2850 = vlaneseq
    %v2851 = vshrl.u32 %v2850, 7
    %v2852 = vsub.s32 5, %v2851
    %v2853 = vrot.slane %v2828, %v2852
    %v2854 = vlaneseq
    %v2855 = vshrl.u32 %v2854, 7
    %v2856 = vsub.s32 6, %v2855
    %v2857 = vrot.slane %v2828, %v2856
    %v3121 = vunpack.c.l.b16 %v2572
    %v3122 = vunpack.c.h.b16 %v2572
    %v3123 = vunpack.c.l.b16 %v2573
    %v3124 = vunpack.c.h.b16 %v2573
    %v3125 = vunpack.c.l.b16 %v2574
    %v3126 = vunpack.c.h.b16 %v2574
    %v3127 = vunpack.c.l.b16 %v2575
    %v3128 = vunpack.c.l.b16 %v2576
    %v3129 = vunpack.c.h.b16 %v2576
    %v3130 = vunpack.c.l.b16 %v2577
    %v3131 = vunpack.c.h.b16 %v2577
    %v3132 = vunpack.c.l.b16 %v2578
    %v3133 = vunpack.c.h.b16 %v2578
    %v3134 = vunpack.c.l.b16 %v2579
    %v3135 = vunpack.c.l.b16 %v2580
    %v3136 = vunpack.c.h.b16 %v2580
    %v3137 = vunpack.c.l.b16 %v2581
    %v3138 = vunpack.c.h.b16 %v2581
    %v3139 = vunpack.c.l.b16 %v2582
    %v3140 = vunpack.c.h.b16 %v2582
    %v3141 = vunpack.c.l.b16 %v2583
    %v3142 = vunpack.c.l.b16 %v2584
    %v3143 = vunpack.c.h.b16 %v2584
    %v3144 = vunpack.c.l.b16 %v2585
    %v3145 = vunpack.c.h.b16 %v2585
    %v3146 = vunpack.c.l.b16 %v2586
    %v3147 = vunpack.c.h.b16 %v2586
    %v3148 = vunpack.c.l.b16 %v2587
    %v3149 = vunpack.c.l.b16 %v2588
    %v3150 = vunpack.c.h.b16 %v2588
    %v3151 = vunpack.c.l.b16 %v2589
    %v3152 = vunpack.c.h.b16 %v2589
    %v3153 = vunpack.c.l.b16 %v2590
    %v3154 = vunpack.c.h.b16 %v2590
    %v3155 = vunpack.c.l.b16 %v2591
    %v3156 = vunpack.c.l.b16 %v2592
    %v3157 = vunpack.c.h.b16 %v2592
    %v3158 = vunpack.c.l.b16 %v2593
    %v3159 = vunpack.c.h.b16 %v2593
    %v3160 = vunpack.c.l.b16 %v2594
    %v3161 = vunpack.c.h.b16 %v2594
    %v3162 = vunpack.c.l.b16 %v2595
    %v3163 = vunpack.c.l.b16 %v2596
    %v3164 = vunpack.c.h.b16 %v2596
    %v3165 = vunpack.c.l.b16 %v2597
    %v3166 = vunpack.c.h.b16 %v2597
    %v3167 = vunpack.c.l.b16 %v2598
    %v3168 = vunpack.c.h.b16 %v2598
    %v3169 = vunpack.c.l.b16 %v2599
    %v3170 = vunpack.c.l.b16 %v2600
    %v3171 = vunpack.c.h.b16 %v2600
    %v3172 = vunpack.c.l.b16 %v2601
    %v3173 = vunpack.c.h.b16 %v2601
    %v3174 = vunpack.c.l.b16 %v2602
    %v3175 = vunpack.c.h.b16 %v2602
    %v3176 = vunpack.c.l.b16 %v2603
    %v3177 = vunpack.c.l.b16 %v2604
    %v3178 = vunpack.c.h.b16 %v2604
    %v3179 = vunpack.c.l.b16 %v2605
    %v3180 = vunpack.c.h.b16 %v2605
    %v3181 = vunpack.c.l.b16 %v2606
    %v3182 = vunpack.c.h.b16 %v2606
    %v3183 = vunpack.c.l.b16 %v2607
    %v3184 = vunpack.c.l.b16 %v2608
    %v3185 = vunpack.c.h.b16 %v2608
    %v3186 = vunpack.c.l.b16 %v2609
    %v3187 = vunpack.c.h.b16 %v2609
    %v3188 = vunpack.c.l.b16 %v2610
    %v3189 = vunpack.c.h.b16 %v2610
    %v3190 = vunpack.c.l.b16 %v2611
    %v3191 = vunpack.c.l.b16 %v2612
    %v3192 = vunpack.c.h.b16 %v2612
    %v3193 = vunpack.c.l.b16 %v2613
    %v3194 = vunpack.c.h.b16 %v2613
    %v3195 = vunpack.c.l.b16 %v2614
    %v3196 = vunpack.c.h.b16 %v2614
    %v3197 = vunpack.c.l.b16 %v2615
    %v3198 = vunpack.c.l.b16 %v2616
    %v3199 = vunpack.c.h.b16 %v2616
    %v3200 = vunpack.c.l.b16 %v2617
    %v3201 = vunpack.c.h.b16 %v2617
    %v3202 = vunpack.c.l.b16 %v2618
    %v3203 = vunpack.c.h.b16 %v2618
    %v3204 = vunpack.c.l.b16 %v2619
    %v3205 = vunpack.c.l.b16 %v2620
    %v3206 = vunpack.c.h.b16 %v2620
    %v3207 = vunpack.c.l.b16 %v2621
    %v3208 = vunpack.c.h.b16 %v2621
    %v3209 = vunpack.c.l.b16 %v2622
    %v3210 = vunpack.c.h.b16 %v2622
    %v3211 = vunpack.c.l.b16 %v2623
    %v3212 = vunpack.c.l.b16 %v2624
    %v3213 = vunpack.c.h.b16 %v2624
    %v3214 = vunpack.c.l.b16 %v2625
    %v3215 = vunpack.c.h.b16 %v2625
    %v3216 = vunpack.c.l.b16 %v2626
    %v3217 = vunpack.c.h.b16 %v2626
    %v3218 = vunpack.c.l.b16 %v2627
    %v3219 = vunpack.c.l.b16 %v2628
    %v3220 = vunpack.c.h.b16 %v2628
    %v3221 = vunpack.c.l.b16 %v2629
    %v3222 = vunpack.c.h.b16 %v2629
    %v3223 = vunpack.c.l.b16 %v2630
    %v3224 = vunpack.c.h.b16 %v2630
    %v3225 = vunpack.c.l.b16 %v2631
    %v3226 = vunpack.c.l.b16 %v2632
    %v3227 = vunpack.c.h.b16 %v2632
    %v3228 = vunpack.c.l.b16 %v2633
    %v3229 = vunpack.c.h.b16 %v2633
    %v3230 = vunpack.c.l.b16 %v2634
    %v3231 = vunpack.c.h.b16 %v2634
    %v3232 = vunpack.c.l.b16 %v2635
    %v3233 = vunpack.c.l.b16 %v2636
    %v3234 = vunpack.c.h.b16 %v2636
    %v3235 = vunpack.c.l.b16 %v2637
    %v3236 = vunpack.c.h.b16 %v2637
    %v3237 = vunpack.c.l.b16 %v2638
    %v3238 = vunpack.c.h.b16 %v2638
    %v3239 = vunpack.c.l.b16 %v2639
    %v3240 = vunpack.c.l.b16 %v2640
    %v3241 = vunpack.c.h.b16 %v2640
    %v3242 = vunpack.c.l.b16 %v2641
    %v3243 = vunpack.c.h.b16 %v2641
    %v3244 = vunpack.c.l.b16 %v2642
    %v3245 = vunpack.c.h.b16 %v2642
    %v3246 = vunpack.c.l.b16 %v2643
    %v3247 = vunpack.c.l.b16 %v2644
    %v3248 = vunpack.c.h.b16 %v2644
    %v3249 = vunpack.c.l.b16 %v2645
    %v3250 = vunpack.c.h.b16 %v2645
    %v3251 = vunpack.c.l.b16 %v2646
    %v3252 = vunpack.c.h.b16 %v2646
    %v3253 = vunpack.c.l.b16 %v2647
    %v3254 = vunpack.c.l.b16 %v2648
    %v3255 = vunpack.c.h.b16 %v2648
    %v3256 = vunpack.c.l.b16 %v2649
    %v3257 = vunpack.c.h.b16 %v2649
    %v3258 = vunpack.c.l.b16 %v2650
    %v3259 = vunpack.c.h.b16 %v2650
    %v3260 = vunpack.c.l.b16 %v2651
    %v3261 = vunpack.c.l.b16 %v2652
    %v3262 = vunpack.c.h.b16 %v2652
    %v3263 = vunpack.c.l.b16 %v2653
    %v3264 = vunpack.c.h.b16 %v2653
    %v3265 = vunpack.c.l.b16 %v2654
    %v3266 = vunpack.c.h.b16 %v2654
    %v3267 = vunpack.c.l.b16 %v2655
    %v3268 = vunpack.c.l.b16 %v2656
    %v3269 = vunpack.c.h.b16 %v2656
    %v3270 = vunpack.c.l.b16 %v2657
    %v3271 = vunpack.c.h.b16 %v2657
    %v3272 = vunpack.c.l.b16 %v2658
    %v3273 = vunpack.c.h.b16 %v2658
    %v3274 = vunpack.c.l.b16 %v2659
    %v3275 = vunpack.c.l.b16 %v2660
    %v3276 = vunpack.c.h.b16 %v2660
    %v3277 = vunpack.c.l.b16 %v2661
    %v3278 = vunpack.c.h.b16 %v2661
    %v3279 = vunpack.c.l.b16 %v2662
    %v3280 = vunpack.c.h.b16 %v2662
    %v3281 = vunpack.c.l.b16 %v2663
    %v3282 = vunpack.c.l.b16 %v2664
    %v3283 = vunpack.c.h.b16 %v2664
    %v3284 = vunpack.c.l.b16 %v2665
    %v3285 = vunpack.c.h.b16 %v2665
    %v3286 = vunpack.c.l.b16 %v2666
    %v3287 = vunpack.c.h.b16 %v2666
    %v3288 = vunpack.c.l.b16 %v2667
    %v3289 = vunpack.c.l.b16 %v2668
    %v3290 = vunpack.c.h.b16 %v2668
    %v3291 = vunpack.c.l.b16 %v2669
    %v3292 = vunpack.c.h.b16 %v2669
    %v3293 = vunpack.c.l.b16 %v2670
    %v3294 = vunpack.c.h.b16 %v2670
    %v3295 = vunpack.c.l.b16 %v2671
    %v3296 = vunpack.c.l.b16 %v2672
    %v3297 = vunpack.c.h.b16 %v2672
    %v3298 = vunpack.c.l.b16 %v2673
    %v3299 = vunpack.c.h.b16 %v2673
    %v3300 = vunpack.c.l.b16 %v2674
    %v3301 = vunpack.c.h.b16 %v2674
    %v3302 = vunpack.c.l.b16 %v2675
    %v3303 = vunpack.c.l.b16 %v2676
    %v3304 = vunpack.c.h.b16 %v2676
    %v3305 = vunpack.c.l.b16 %v2677
    %v3306 = vunpack.c.h.b16 %v2677
    %v3307 = vunpack.c.l.b16 %v2678
    %v3308 = vunpack.c.h.b16 %v2678
    %v3309 = vunpack.c.l.b16 %v2679
    %v3310 = vunpack.c.l.b16 %v2680
    %v3311 = vunpack.c.h.b16 %v2680
    %v3312 = vunpack.c.l.b16 %v2681
    %v3313 = vunpack.c.h.b16 %v2681
    %v3314 = vunpack.c.l.b16 %v2682
    %v3315 = vunpack.c.h.b16 %v2682
    %v3316 = vunpack.c.l.b16 %v2683
    %v3317 = vunpack.c.l.b16 %v2684
    %v3318 = vunpack.c.h.b16 %v2684
    %v3319 = vunpack.c.l.b16 %v2685
    %v3320 = vunpack.c.h.b16 %v2685
    %v3321 = vunpack.c.l.b16 %v2686
    %v3322 = vunpack.c.h.b16 %v2686
    %v3323 = vunpack.c.l.b16 %v2687
    %v3324 = vunpack.c.l.b16 %v2688
    %v3325 = vunpack.c.h.b16 %v2688
    %v3326 = vunpack.c.l.b16 %v2689
    %v3327 = vunpack.c.h.b16 %v2689
    %v3328 = vunpack.c.l.b16 %v2690
    %v3329 = vunpack.c.h.b16 %v2690
    %v3330 = vunpack.c.l.b16 %v2691
    %v3331 = vunpack.c.l.b16 %v2692
    %v3332 = vunpack.c.h.b16 %v2692
    %v3333 = vunpack.c.l.b16 %v2693
    %v3334 = vunpack.c.h.b16 %v2693
    %v3335 = vunpack.c.l.b16 %v2694
    %v3336 = vunpack.c.h.b16 %v2694
    %v3337 = vunpack.c.l.b16 %v2695
    %v3338 = vunpack.c.l.b16 %v2696
    %v3339 = vunpack.c.h.b16 %v2696
    %v3340 = vunpack.c.l.b16 %v2697
    %v3341 = vunpack.c.h.b16 %v2697
    %v3342 = vunpack.c.l.b16 %v2698
    %v3343 = vunpack.c.h.b16 %v2698
    %v3344 = vunpack.c.l.b16 %v2699
    %v3345 = vunpack.c.l.b16 %v2700
    %v3346 = vunpack.c.h.b16 %v2700
    %v3347 = vunpack.c.l.b16 %v2701
    %v3348 = vunpack.c.h.b16 %v2701
    %v3349 = vunpack.c.l.b16 %v2702
    %v3350 = vunpack.c.h.b16 %v2702
    %v3351 = vunpack.c.l.b16 %v2703
    %v3352 = vunpack.c.l.b16 %v2704
    %v3353 = vunpack.c.h.b16 %v2704
    %v3354 = vunpack.c.l.b16 %v2705
    %v3355 = vunpack.c.h.b16 %v2705
    %v3356 = vunpack.c.l.b16 %v2706
    %v3357 = vunpack.c.h.b16 %v2706
    %v3358 = vunpack.c.l.b16 %v2707
    %v3359 = vunpack.c.l.b16 %v2708
    %v3360 = vunpack.c.h.b16 %v2708
    %v3361 = vunpack.c.l.b16 %v2709
    %v3362 = vunpack.c.h.b16 %v2709
    %v3363 = vunpack.c.l.b16 %v2710
    %v3364 = vunpack.c.h.b16 %v2710
    %v3365 = vunpack.c.l.b16 %v2711
    %v3366 = vunpack.c.l.b16 %v2712
    %v3367 = vunpack.c.h.b16 %v2712
    %v3368 = vunpack.c.l.b16 %v2713
    %v3369 = vunpack.c.h.b16 %v2713
    %v3370 = vunpack.c.l.b16 %v2714
    %v3371 = vunpack.c.h.b16 %v2714
    %v3372 = vunpack.c.l.b16 %v2715
    %v3373 = vunpack.c.l.b16 %v2716
    %v3374 = vunpack.c.h.b16 %v2716
    %v3375 = vunpack.c.l.b16 %v2717
    %v3376 = vunpack.c.h.b16 %v2717
    %v3377 = vunpack.c.l.b16 %v2718
    %v3378 = vunpack.c.h.b16 %v2718
    %v3379 = vunpack.c.l.b16 %v2719
    %v3380 = vunpack.c.l.b16 %v2720
    %v3381 = vunpack.c.h.b16 %v2720
    %v3382 = vunpack.c.l.b16 %v2721
    %v3383 = vunpack.c.h.b16 %v2721
    %v3384 = vunpack.c.l.b16 %v2722
    %v3385 = vunpack.c.h.b16 %v2722
    %v3386 = vunpack.c.l.b16 %v2723
    %v3387 = vunpack.c.l.b16 %v2724
    %v3388 = vunpack.c.h.b16 %v2724
    %v3389 = vunpack.c.l.b16 %v2725
    %v3390 = vunpack.c.h.b16 %v2725
    %v3391 = vunpack.c.l.b16 %v2726
    %v3392 = vunpack.c.h.b16 %v2726
    %v3393 = vunpack.c.l.b16 %v2727
    %v3394 = vunpack.c.l.b16 %v2728
    %v3395 = vunpack.c.h.b16 %v2728
    %v3396 = vunpack.c.l.b16 %v2729
    %v3397 = vunpack.c.h.b16 %v2729
    %v3398 = vunpack.c.l.b16 %v2730
    %v3399 = vunpack.c.h.b16 %v2730
    %v3400 = vunpack.c.l.b16 %v2731
    %v3401 = vunpack.c.l.b16 %v2732
    %v3402 = vunpack.c.h.b16 %v2732
    %v3403 = vunpack.c.l.b16 %v2733
    %v3404 = vunpack.c.h.b16 %v2733
    %v3405 = vunpack.c.l.b16 %v2734
    %v3406 = vunpack.c.h.b16 %v2734
    %v3407 = vunpack.c.l.b16 %v2735
    %v3408 = vunpack.c.l.b16 %v2736
    %v3409 = vunpack.c.h.b16 %v2736
    %v3410 = vunpack.c.l.b16 %v2737
    %v3411 = vunpack.c.h.b16 %v2737
    %v3412 = vunpack.c.l.b16 %v2738
    %v3413 = vunpack.c.h.b16 %v2738
    %v3414 = vunpack.c.l.b16 %v2739
    %v3415 = vunpack.c.l.b16 %v2740
    %v3416 = vunpack.c.h.b16 %v2740
    %v3417 = vunpack.c.l.b16 %v2741
    %v3418 = vunpack.c.h.b16 %v2741
    %v3419 = vunpack.c.l.b16 %v2742
    %v3420 = vunpack.c.h.b16 %v2742
    %v3421 = vunpack.c.l.b16 %v2743
    %v3422 = vunpack.c.l.b16 %v2744
    %v3423 = vunpack.c.h.b16 %v2744
    %v3424 = vunpack.c.l.b16 %v2745
    %v3425 = vunpack.c.h.b16 %v2745
    %v3426 = vunpack.c.l.b16 %v2746
    %v3427 = vunpack.c.h.b16 %v2746
    %v3428 = vunpack.c.l.b16 %v2747
    %v3429 = vunpack.c.l.b16 %v2748
    %v3430 = vunpack.c.h.b16 %v2748
    %v3431 = vunpack.c.l.b16 %v2749
    %v3432 = vunpack.c.h.b16 %v2749
    %v3433 = vunpack.c.l.b16 %v2750
    %v3434 = vunpack.c.h.b16 %v2750
    %v3435 = vunpack.c.l.b16 %v2751
    %v3436 = vunpack.c.l.b16 %v2752
    %v3437 = vunpack.c.h.b16 %v2752
    %v3438 = vunpack.c.l.b16 %v2753
    %v3439 = vunpack.c.h.b16 %v2753
    %v3440 = vunpack.c.l.b16 %v2754
    %v3441 = vunpack.c.h.b16 %v2754
    %v3442 = vunpack.c.l.b16 %v2755
    %v3443 = vunpack.c.l.b16 %v2756
    %v3444 = vunpack.c.h.b16 %v2756
    %v3445 = vunpack.c.l.b16 %v2757
    %v3446 = vunpack.c.h.b16 %v2757
    %v3447 = vunpack.c.l.b16 %v2758
    %v3448 = vunpack.c.h.b16 %v2758
    %v3449 = vunpack.c.l.b16 %v2759
    %v3450 = vunpack.c.l.b16 %v2760
    %v3451 = vunpack.c.h.b16 %v2760
    %v3452 = vunpack.c.l.b16 %v2761
    %v3453 = vunpack.c.h.b16 %v2761
    %v3454 = vunpack.c.l.b16 %v2762
    %v3455 = vunpack.c.h.b16 %v2762
    %v3456 = vunpack.c.l.b16 %v2763
    %v3457 = vunpack.c.l.b16 %v2764
    %v3458 = vunpack.c.h.b16 %v2764
    %v3459 = vunpack.c.l.b16 %v2765
    %v3460 = vunpack.c.h.b16 %v2765
    %v3461 = vunpack.c.l.b16 %v2766
    %v3462 = vunpack.c.h.b16 %v2766
    %v3463 = vunpack.c.l.b16 %v2767
    %v3464 = vunpack.c.l.b16 %v2768
    %v3465 = vunpack.c.h.b16 %v2768
    %v3466 = vunpack.c.l.b16 %v2769
    %v3467 = vunpack.c.h.b16 %v2769
    %v3468 = vunpack.c.l.b16 %v2770
    %v3469 = vunpack.c.h.b16 %v2770
    %v3470 = vunpack.c.l.b16 %v2771
    %v3471 = vunpack.c.l.b16 %v2772
    %v3472 = vunpack.c.h.b16 %v2772
    %v3473 = vunpack.c.l.b16 %v2773
    %v3474 = vunpack.c.h.b16 %v2773
    %v3475 = vunpack.c.l.b16 %v2774
    %v3476 = vunpack.c.h.b16 %v2774
    %v3477 = vunpack.c.l.b16 %v2775
    %v3478 = vunpack.c.l.b16 %v2776
    %v3479 = vunpack.c.h.b16 %v2776
    %v3480 = vunpack.c.l.b16 %v2777
    %v3481 = vunpack.c.h.b16 %v2777
    %v3482 = vunpack.c.l.b16 %v2778
    %v3483 = vunpack.c.h.b16 %v2778
    %v3484 = vunpack.c.l.b16 %v2779
    %v3485 = vunpack.c.l.b16 %v2780
    %v3486 = vunpack.c.h.b16 %v2780
    %v3487 = vunpack.c.l.b16 %v2781
    %v3488 = vunpack.c.h.b16 %v2781
    %v3489 = vunpack.c.l.b16 %v2782
    %v3490 = vunpack.c.h.b16 %v2782
    %v3491 = vunpack.c.l.b16 %v2783
    %v3492 = vunpack.c.l.b16 %v2784
    %v3493 = vunpack.c.h.b16 %v2784
    %v3494 = vunpack.c.l.b16 %v2785
    %v3495 = vunpack.c.h.b16 %v2785
    %v3496 = vunpack.c.l.b16 %v2786
    %v3497 = vunpack.c.h.b16 %v2786
    %v3498 = vunpack.c.l.b16 %v2787
    %v3499 = vunpack.c.l.b16 %v2788
    %v3500 = vunpack.c.h.b16 %v2788
    %v3501 = vunpack.c.l.b16 %v2789
    %v3502 = vunpack.c.h.b16 %v2789
    %v3503 = vunpack.c.l.b16 %v2790
    %v3504 = vunpack.c.h.b16 %v2790
    %v3505 = vunpack.c.l.b16 %v2791
    %v3506 = vunpack.c.l.b16 %v2792
    %v3507 = vunpack.c.h.b16 %v2792
    %v3508 = vunpack.c.l.b16 %v2793
    %v3509 = vunpack.c.h.b16 %v2793
    %v3510 = vunpack.c.l.b16 %v2794
    %v3511 = vunpack.c.h.b16 %v2794
    %v3512 = vunpack.c.l.b16 %v2795
    %v3513 = vunpack.c.l.b16 %v2796
    %v3514 = vunpack.c.h.b16 %v2796
    %v3515 = vunpack.c.l.b16 %v2797
    %v3516 = vunpack.c.h.b16 %v2797
    %v3517 = vunpack.c.l.b16 %v2798
    %v3518 = vunpack.c.h.b16 %v2798
    %v3519 = vunpack.c.l.b16 %v2799
    %v3520 = vunpack.c.l.b16 %v2800
    %v3521 = vunpack.c.h.b16 %v2800
    %v3522 = vunpack.c.l.b16 %v2801
    %v3523 = vunpack.c.h.b16 %v2801
    %v3524 = vunpack.c.l.b16 %v2802
    %v3525 = vunpack.c.h.b16 %v2802
    %v3526 = vunpack.c.l.b16 %v2803
    %v3527 = vunpack.c.l.b16 %v2804
    %v3528 = vunpack.c.h.b16 %v2804
    %v3529 = vunpack.c.l.b16 %v2805
    %v3530 = vunpack.c.h.b16 %v2805
    %v3531 = vunpack.c.l.b16 %v2806
    %v3532 = vunpack.c.h.b16 %v2806
    %v3533 = vunpack.c.l.b16 %v2807
    %v3534 = vunpack.c.l.b16 %v2808
    %v3535 = vunpack.c.h.b16 %v2808
    %v3536 = vunpack.c.l.b16 %v2809
    %v3537 = vunpack.c.h.b16 %v2809
    %v3538 = vunpack.c.l.b16 %v2810
    %v3539 = vunpack.c.h.b16 %v2810
    %v3540 = vunpack.c.l.b16 %v2811
    %v3541 = vunpack.c.l.b16 %v2812
    %v3542 = vunpack.c.h.b16 %v2812
    %v3543 = vunpack.c.l.b16 %v2813
    %v3544 = vunpack.c.h.b16 %v2813
    %v3545 = vunpack.c.l.b16 %v2814
    %v3546 = vunpack.c.h.b16 %v2814
    %v3547 = vunpack.c.l.b16 %v2815
    %v3548 = vunpack.c.l.b16 %v2816
    %v3549 = vunpack.c.h.b16 %v2816
    %v3550 = vunpack.c.l.b16 %v2817
    %v3551 = vunpack.c.h.b16 %v2817
    %v3552 = vunpack.c.l.b16 %v2818
    %v3553 = vunpack.c.h.b16 %v2818
    %v3554 = vunpack.c.l.b16 %v2819
    %v3555 = vunpack.c.l.b16 %v2820
    %v3556 = vunpack.c.h.b16 %v2820
    %v3557 = vunpack.c.l.b16 %v2821
    %v3558 = vunpack.c.h.b16 %v2821
    %v3559 = vunpack.c.l.b16 %v2822
    %v3560 = vunpack.c.h.b16 %v2822
    %v3561 = vunpack.c.l.b16 %v2823
    %v3562 = vunpack.c.l.b16 %v2824
    %v3563 = vunpack.c.h.b16 %v2824
    %v3564 = vunpack.c.l.b16 %v2825
    %v3565 = vunpack.c.h.b16 %v2825
    %v3566 = vunpack.c.l.b16 %v2826
    %v3567 = vunpack.c.h.b16 %v2826
    %v3568 = vunpack.c.l.b16 %v2827
    %v3569 = vpack.c.b16 %v3128, %v3121
    %v3570 = vpack.c.b16 %v3129, %v3122
    %v3571 = vpack.c.b16 %v3130, %v3123
    %v3572 = vpack.c.b16 %v3131, %v3124
    %v3573 = vpack.c.b16 %v3132, %v3125
    %v3574 = vpack.c.b16 %v3133, %v3126
    %v3575 = vpack.c.b16 %v3134, %v3127
    %v3576 = vpack.c.b16 %v3142, %v3135
    %v3577 = vpack.c.b16 %v3143, %v3136
    %v3578 = vpack.c.b16 %v3144, %v3137
    %v3579 = vpack.c.b16 %v3145, %v3138
    %v3580 = vpack.c.b16 %v3146, %v3139
    %v3581 = vpack.c.b16 %v3147, %v3140
    %v3582 = vpack.c.b16 %v3148, %v3141
    %v3583 = vpack.c.b16 %v3156, %v3149
    %v3584 = vpack.c.b16 %v3157, %v3150
    %v3585 = vpack.c.b16 %v3158, %v3151
    %v3586 = vpack.c.b16 %v3159, %v3152
    %v3587 = vpack.c.b16 %v3160, %v3153
    %v3588 = vpack.c.b16 %v3161, %v3154
    %v3589 = vpack.c.b16 %v3162, %v3155
    %v3590 = vpack.c.b16 %v3170, %v3163
    %v3591 = vpack.c.b16 %v3171, %v3164
    %v3592 = vpack.c.b16 %v3172, %v3165
    %v3593 = vpack.c.b16 %v3173, %v3166
    %v3594 = vpack.c.b16 %v3174, %v3167
    %v3595 = vpack.c.b16 %v3175, %v3168
    %v3596 = vpack.c.b16 %v3176, %v3169
    %v3597 = vpack.c.b16 %v3184, %v3177
    %v3598 = vpack.c.b16 %v3185, %v3178
    %v3599 = vpack.c.b16 %v3186, %v3179
    %v3600 = vpack.c.b16 %v3187, %v3180
    %v3601 = vpack.c.b16 %v3188, %v3181
    %v3602 = vpack.c.b16 %v3189, %v3182
    %v3603 = vpack.c.b16 %v3190, %v3183
    %v3604 = vpack.c.b16 %v3198, %v3191
    %v3605 = vpack.c.b16 %v3199, %v3192
    %v3606 = vpack.c.b16 %v3200, %v3193
    %v3607 = vpack.c.b16 %v3201, %v3194
    %v3608 = vpack.c.b16 %v3202, %v3195
    %v3609 = vpack.c.b16 %v3203, %v3196
    %v3610 = vpack.c.b16 %v3204, %v3197
    %v3611 = vpack.c.b16 %v3212, %v3205
    %v3612 = vpack.c.b16 %v3213, %v3206
    %v3613 = vpack.c.b16 %v3214, %v3207
    %v3614 = vpack.c.b16 %v3215, %v3208
    %v3615 = vpack.c.b16 %v3216, %v3209
    %v3616 = vpack.c.b16 %v3217, %v3210
    %v3617 = vpack.c.b16 %v3218, %v3211
    %v3618 = vpack.c.b16 %v3226, %v3219
    %v3619 = vpack.c.b16 %v3227, %v3220
    %v3620 = vpack.c.b16 %v3228, %v3221
    %v3621 = vpack.c.b16 %v3229, %v3222
    %v3622 = vpack.c.b16 %v3230, %v3223
    %v3623 = vpack.c.b16 %v3231, %v3224
    %v3624 = vpack.c.b16 %v3232, %v3225
    %v3625 = vpack.c.b16 %v3240, %v3233
    %v3626 = vpack.c.b16 %v3241, %v3234
    %v3627 = vpack.c.b16 %v3242, %v3235
    %v3628 = vpack.c.b16 %v3243, %v3236
    %v3629 = vpack.c.b16 %v3244, %v3237
    %v3630 = vpack.c.b16 %v3245, %v3238
    %v3631 = vpack.c.b16 %v3246, %v3239
    %v3632 = vpack.c.b16 %v3254, %v3247
    %v3633 = vpack.c.b16 %v3255, %v3248
    %v3634 = vpack.c.b16 %v3256, %v3249
    %v3635 = vpack.c.b16 %v3257, %v3250
    %v3636 = vpack.c.b16 %v3258, %v3251
    %v3637 = vpack.c.b16 %v3259, %v3252
    %v3638 = vpack.c.b16 %v3260, %v3253
    %v3639 = vpack.c.b16 %v3268, %v3261
    %v3640 = vpack.c.b16 %v3269, %v3262
    %v3641 = vpack.c.b16 %v3270, %v3263
    %v3642 = vpack.c.b16 %v3271, %v3264
    %v3643 = vpack.c.b16 %v3272, %v3265
    %v3644 = vpack.c.b16 %v3273, %v3266
    %v3645 = vpack.c.b16 %v3274, %v3267
    %v3646 = vpack.c.b16 %v3282, %v3275
    %v3647 = vpack.c.b16 %v3283, %v3276
    %v3648 = vpack.c.b16 %v3284, %v3277
    %v3649 = vpack.c.b16 %v3285, %v3278
    %v3650 = vpack.c.b16 %v3286, %v3279
    %v3651 = vpack.c.b16 %v3287, %v3280
    %v3652 = vpack.c.b16 %v3288, %v3281
    %v3653 = vpack.c.b16 %v3296, %v3289
    %v3654 = vpack.c.b16 %v3297, %v3290
    %v3655 = vpack.c.b16 %v3298, %v3291
    %v3656 = vpack.c.b16 %v3299, %v3292
    %v3657 = vpack.c.b16 %v3300, %v3293
    %v3658 = vpack.c.b16 %v3301, %v3294
    %v3659 = vpack.c.b16 %v3302, %v3295
    %v3660 = vpack.c.b16 %v3310, %v3303
    %v3661 = vpack.c.b16 %v3311, %v3304
    %v3662 = vpack.c.b16 %v3312, %v3305
    %v3663 = vpack.c.b16 %v3313, %v3306
    %v3664 = vpack.c.b16 %v3314, %v3307
    %v3665 = vpack.c.b16 %v3315, %v3308
    %v3666 = vpack.c.b16 %v3316, %v3309
    %v3667 = vpack.c.b16 %v3324, %v3317
    %v3668 = vpack.c.b16 %v3325, %v3318
    %v3669 = vpack.c.b16 %v3326, %v3319
    %v3670 = vpack.c.b16 %v3327, %v3320
    %v3671 = vpack.c.b16 %v3328, %v3321
    %v3672 = vpack.c.b16 %v3329, %v3322
    %v3673 = vpack.c.b16 %v3330, %v3323
    %v3674 = vpack.c.b16 %v3338, %v3331
    %v3675 = vpack.c.b16 %v3339, %v3332
    %v3676 = vpack.c.b16 %v3340, %v3333
    %v3677 = vpack.c.b16 %v3341, %v3334
    %v3678 = vpack.c.b16 %v3342, %v3335
    %v3679 = vpack.c.b16 %v3343, %v3336
    %v3680 = vpack.c.b16 %v3344, %v3337
    %v3681 = vpack.c.b16 %v3352, %v3345
    %v3682 = vpack.c.b16 %v3353, %v3346
    %v3683 = vpack.c.b16 %v3354, %v3347
    %v3684 = vpack.c.b16 %v3355, %v3348
    %v3685 = vpack.c.b16 %v3356, %v3349
    %v3686 = vpack.c.b16 %v3357, %v3350
    %v3687 = vpack.c.b16 %v3358, %v3351
    %v3688 = vpack.c.b16 %v3366, %v3359
    %v3689 = vpack.c.b16 %v3367, %v3360
    %v3690 = vpack.c.b16 %v3368, %v3361
    %v3691 = vpack.c.b16 %v3369, %v3362
    %v3692 = vpack.c.b16 %v3370, %v3363
    %v3693 = vpack.c.b16 %v3371, %v3364
    %v3694 = vpack.c.b16 %v3372, %v3365
    %v3695 = vpack.c.b16 %v3380, %v3373
    %v3696 = vpack.c.b16 %v3381, %v3374
    %v3697 = vpack.c.b16 %v3382, %v3375
    %v3698 = vpack.c.b16 %v3383, %v3376
    %v3699 = vpack.c.b16 %v3384, %v3377
    %v3700 = vpack.c.b16 %v3385, %v3378
    %v3701 = vpack.c.b16 %v3386, %v3379
    %v3702 = vpack.c.b16 %v3394, %v3387
    %v3703 = vpack.c.b16 %v3395, %v3388
    %v3704 = vpack.c.b16 %v3396, %v3389
    %v3705 = vpack.c.b16 %v3397, %v3390
    %v3706 = vpack.c.b16 %v3398, %v3391
    %v3707 = vpack.c.b16 %v3399, %v3392
    %v3708 = vpack.c.b16 %v3400, %v3393
    %v3709 = vpack.c.b16 %v3408, %v3401
    %v3710 = vpack.c.b16 %v3409, %v3402
    %v3711 = vpack.c.b16 %v3410, %v3403
    %v3712 = vpack.c.b16 %v3411, %v3404
    %v3713 = vpack.c.b16 %v3412, %v3405
    %v3714 = vpack.c.b16 %v3413, %v3406
    %v3715 = vpack.c.b16 %v3414, %v3407
    %v3716 = vpack.c.b16 %v3422, %v3415
    %v3717 = vpack.c.b16 %v3423, %v3416
    %v3718 = vpack.c.b16 %v3424, %v3417
    %v3719 = vpack.c.b16 %v3425, %v3418
    %v3720 = vpack.c.b16 %v3426, %v3419
    %v3721 = vpack.c.b16 %v3427, %v3420
    %v3722 = vpack.c.b16 %v3428, %v3421
    %v3723 = vpack.c.b16 %v3436, %v3429
    %v3724 = vpack.c.b16 %v3437, %v3430
    %v3725 = vpack.c.b16 %v3438, %v3431
    %v3726 = vpack.c.b16 %v3439, %v3432
    %v3727 = vpack.c.b16 %v3440, %v3433
    %v3728 = vpack.c.b16 %v3441, %v3434
    %v3729 = vpack.c.b16 %v3442, %v3435
    %v3730 = vpack.c.b16 %v3450, %v3443
    %v3731 = vpack.c.b16 %v3451, %v3444
    %v3732 = vpack.c.b16 %v3452, %v3445
    %v3733 = vpack.c.b16 %v3453, %v3446
    %v3734 = vpack.c.b16 %v3454, %v3447
    %v3735 = vpack.c.b16 %v3455, %v3448
    %v3736 = vpack.c.b16 %v3456, %v3449
    %v3737 = vpack.c.b16 %v3464, %v3457
    %v3738 = vpack.c.b16 %v3465, %v3458
    %v3739 = vpack.c.b16 %v3466, %v3459
    %v3740 = vpack.c.b16 %v3467, %v3460
    %v3741 = vpack.c.b16 %v3468, %v3461
    %v3742 = vpack.c.b16 %v3469, %v3462
    %v3743 = vpack.c.b16 %v3470, %v3463
    %v3744 = vpack.c.b16 %v3478, %v3471
    %v3745 = vpack.c.b16 %v3479, %v3472
    %v3746 = vpack.c.b16 %v3480, %v3473
    %v3747 = vpack.c.b16 %v3481, %v3474
    %v3748 = vpack.c.b16 %v3482, %v3475
    %v3749 = vpack.c.b16 %v3483, %v3476
    %v3750 = vpack.c.b16 %v3484, %v3477
    %v3751 = vpack.c.b16 %v3492, %v3485
    %v3752 = vpack.c.b16 %v3493, %v3486
    %v3753 = vpack.c.b16 %v3494, %v3487
    %v3754 = vpack.c.b16 %v3495, %v3488
    %v3755 = vpack.c.b16 %v3496, %v3489
    %v3756 = vpack.c.b16 %v3497, %v3490
    %v3757 = vpack.c.b16 %v3498, %v3491
    %v3758 = vpack.c.b16 %v3506, %v3499
    %v3759 = vpack.c.b16 %v3507, %v3500
    %v3760 = vpack.c.b16 %v3508, %v3501
    %v3761 = vpack.c.b16 %v3509, %v3502
    %v3762 = vpack.c.b16 %v3510, %v3503
    %v3763 = vpack.c.b16 %v3511, %v3504
    %v3764 = vpack.c.b16 %v3512, %v3505
    %v3765 = vpack.c.b16 %v3520, %v3513
    %v3766 = vpack.c.b16 %v3521, %v3514
    %v3767 = vpack.c.b16 %v3522, %v3515
    %v3768 = vpack.c.b16 %v3523, %v3516
    %v3769 = vpack.c.b16 %v3524, %v3517
    %v3770 = vpack.c.b16 %v3525, %v3518
    %v3771 = vpack.c.b16 %v3526, %v3519
    %v3772 = vpack.c.b16 %v3534, %v3527
    %v3773 = vpack.c.b16 %v3535, %v3528
    %v3774 = vpack.c.b16 %v3536, %v3529
    %v3775 = vpack.c.b16 %v3537, %v3530
    %v3776 = vpack.c.b16 %v3538, %v3531
    %v3777 = vpack.c.b16 %v3539, %v3532
    %v3778 = vpack.c.b16 %v3540, %v3533
    %v3779 = vpack.c.b16 %v3548, %v3541
    %v3780 = vpack.c.b16 %v3549, %v3542
    %v3781 = vpack.c.b16 %v3550, %v3543
    %v3782 = vpack.c.b16 %v3551, %v3544
    %v3783 = vpack.c.b16 %v3552, %v3545
    %v3784 = vpack.c.b16 %v3553, %v3546
    %v3785 = vpack.c.b16 %v3554, %v3547
    %v3786 = vpack.c.b16 %v3562, %v3555
    %v3787 = vpack.c.b16 %v3563, %v3556
    %v3788 = vpack.c.b16 %v3564, %v3557
    %v3789 = vpack.c.b16 %v3565, %v3558
    %v3790 = vpack.c.b16 %v3566, %v3559
    %v3791 = vpack.c.b16 %v3567, %v3560
    %v3792 = vpack.c.b16 %v3568, %v3561
    %4017 = vmatprep.subr.bf16.mxu0 %v3570
    %4018 = vmatpush1.bf16.msra.mxu0 %v3569
    %4019 = vmatprep.subr.bf16.mxu0 %v3577
    %4020 = vmatpush1.bf16.msra.mxu0 %v3576
    %4021 = vmatprep.subr.bf16.mxu0 %v3584
    %4022 = vmatpush1.bf16.msra.mxu0 %v3583
    %4023 = vmatprep.subr.bf16.mxu0 %v3591
    %4024 = vmatpush1.bf16.msra.mxu0 %v3590
    %4025 = vmatprep.subr.bf16.mxu0 %v3598
    %4026 = vmatpush1.bf16.msra.mxu0 %v3597
    %4027 = vmatprep.subr.bf16.mxu0 %v3605
    %4028 = vmatpush1.bf16.msra.mxu0 %v3604
    %4029 = vmatprep.subr.bf16.mxu0 %v3612
    %4030 = vmatpush1.bf16.msra.mxu0 %v3611
    %4031 = vmatprep.subr.bf16.mxu0 %v3619
    %4032 = vmatpush1.bf16.msra.mxu0 %v3618
    %4033 = vmatprep.subr.bf16.mxu0 %v3626
    %4034 = vmatpush1.bf16.msra.mxu0 %v3625
    %4035 = vmatprep.subr.bf16.mxu0 %v3633
    %4036 = vmatpush1.bf16.msra.mxu0 %v3632
    %4037 = vmatprep.subr.bf16.mxu0 %v3640
    %4038 = vmatpush1.bf16.msra.mxu0 %v3639
    %4039 = vmatprep.subr.bf16.mxu0 %v3647
    %4040 = vmatpush1.bf16.msra.mxu0 %v3646
    %4041 = vmatprep.subr.bf16.mxu0 %v3654
    %4042 = vmatpush1.bf16.msra.mxu0 %v3653
    %4043 = vmatprep.subr.bf16.mxu0 %v3661
    %4044 = vmatpush1.bf16.msra.mxu0 %v3660
    %4045 = vmatprep.subr.bf16.mxu0 %v3668
    %4046 = vmatpush1.bf16.msra.mxu0 %v3667
    %4047 = vmatprep.subr.bf16.mxu0 %v3675
    %4048 = vmatpush1.bf16.msra.mxu0 %v3674
    %4049 = vmatprep.mubr.bf16.mxu0 %v2569
    %4050 = vmatmul.mubr.bf16.gmra.mrb[0].mxu0 %v2568
    %v4051 = vpop.f32.mrb[0].mxu0
    %v4052 = vadd.f32 %v2833, %v4051
    %v4053 = vpop.f32.mrb[0].mxu0
    %v4054 = vadd.f32 %v2837, %v4053
    %v4055 = vpop.f32.mrb[0].mxu0
    %v4056 = vpop.f32.mrb[0].mxu0
    %4057 = vdwg.mxu0
    %4058 = vmatprep.subr.bf16.mxu0 %v3682
    %4059 = vmatpush1.bf16.msra.mxu0 %v3681
    %4060 = vmatprep.subr.bf16.mxu0 %v3689
    %4061 = vmatpush1.bf16.msra.mxu0 %v3688
    %4062 = vmatprep.subr.bf16.mxu0 %v3696
    %4063 = vmatpush1.bf16.msra.mxu0 %v3695
    %4064 = vmatprep.subr.bf16.mxu0 %v3703
    %4065 = vmatpush1.bf16.msra.mxu0 %v3702
    %4066 = vmatprep.subr.bf16.mxu0 %v3710
    %4067 = vmatpush1.bf16.msra.mxu0 %v3709
    %4068 = vmatprep.subr.bf16.mxu0 %v3717
    %4069 = vmatpush1.bf16.msra.mxu0 %v3716
    %4070 = vmatprep.subr.bf16.mxu0 %v3724
    %4071 = vmatpush1.bf16.msra.mxu0 %v3723
    %4072 = vmatprep.subr.bf16.mxu0 %v3731
    %4073 = vmatpush1.bf16.msra.mxu0 %v3730
    %4074 = vmatprep.subr.bf16.mxu0 %v3738
    %4075 = vmatpush1.bf16.msra.mxu0 %v3737
    %4076 = vmatprep.subr.bf16.mxu0 %v3745
    %4077 = vmatpush1.bf16.msra.mxu0 %v3744
    %4078 = vmatprep.subr.bf16.mxu0 %v3752
    %4079 = vmatpush1.bf16.msra.mxu0 %v3751
    %4080 = vmatprep.subr.bf16.mxu0 %v3759
    %4081 = vmatpush1.bf16.msra.mxu0 %v3758
    %4082 = vmatprep.subr.bf16.mxu0 %v3766
    %4083 = vmatpush1.bf16.msra.mxu0 %v3765
    %4084 = vmatprep.subr.bf16.mxu0 %v3773
    %4085 = vmatpush1.bf16.msra.mxu0 %v3772
    %4086 = vmatprep.subr.bf16.mxu0 %v3780
    %4087 = vmatpush1.bf16.msra.mxu0 %v3779
    %4088 = vmatprep.subr.bf16.mxu0 %v3787
    %4089 = vmatpush1.bf16.msra.mxu0 %v3786
    %4090 = vmatprep.mubr.bf16.mxu0 %v2571
    %4091 = vmatmul.mubr.bf16.gmra.mrb[0].mxu0 %v2570
    %v4092 = vpop.f32.mrb[0].mxu0
    %v4093 = vadd.f32 %v4052, %v4092
    %v4094 = vpop.f32.mrb[0].mxu0
    %v4095 = vadd.f32 %v4054, %v4094
    %v4096 = vpop.f32.mrb[0].mxu0
    %v4097 = vpop.f32.mrb[0].mxu0
    %4098 = vdwg.mxu0
    %4099 = vmatprep.subr.bf16.mxu0 %v3572
    %4100 = vmatpush1.bf16.msra.mxu0 %v3571
    %4101 = vmatprep.subr.bf16.mxu0 %v3579
    %4102 = vmatpush1.bf16.msra.mxu0 %v3578
    %4103 = vmatprep.subr.bf16.mxu0 %v3586
    %4104 = vmatpush1.bf16.msra.mxu0 %v3585
    %4105 = vmatprep.subr.bf16.mxu0 %v3593
    %4106 = vmatpush1.bf16.msra.mxu0 %v3592
    %4107 = vmatprep.subr.bf16.mxu0 %v3600
    %4108 = vmatpush1.bf16.msra.mxu0 %v3599
    %4109 = vmatprep.subr.bf16.mxu0 %v3607
    %4110 = vmatpush1.bf16.msra.mxu0 %v3606
    %4111 = vmatprep.subr.bf16.mxu0 %v3614
    %4112 = vmatpush1.bf16.msra.mxu0 %v3613
    %4113 = vmatprep.subr.bf16.mxu0 %v3621
    %4114 = vmatpush1.bf16.msra.mxu0 %v3620
    %4115 = vmatprep.subr.bf16.mxu0 %v3628
    %4116 = vmatpush1.bf16.msra.mxu0 %v3627
    %4117 = vmatprep.subr.bf16.mxu0 %v3635
    %4118 = vmatpush1.bf16.msra.mxu0 %v3634
    %4119 = vmatprep.subr.bf16.mxu0 %v3642
    %4120 = vmatpush1.bf16.msra.mxu0 %v3641
    %4121 = vmatprep.subr.bf16.mxu0 %v3649
    %4122 = vmatpush1.bf16.msra.mxu0 %v3648
    %4123 = vmatprep.subr.bf16.mxu0 %v3656
    %4124 = vmatpush1.bf16.msra.mxu0 %v3655
    %4125 = vmatprep.subr.bf16.mxu0 %v3663
    %4126 = vmatpush1.bf16.msra.mxu0 %v3662
    %4127 = vmatprep.subr.bf16.mxu0 %v3670
    %4128 = vmatpush1.bf16.msra.mxu0 %v3669
    %4129 = vmatprep.subr.bf16.mxu0 %v3677
    %4130 = vmatpush1.bf16.msra.mxu0 %v3676
    %4131 = vmatprep.mubr.bf16.mxu0 %v2569
    %4132 = vmatmul.mubr.bf16.gmra.mrb[0].mxu0 %v2568
    %v4133 = vpop.f32.mrb[0].mxu0
    %v4134 = vadd.f32 %v2841, %v4133
    %v4135 = vpop.f32.mrb[0].mxu0
    %v4136 = vadd.f32 %v2845, %v4135
    %v4137 = vpop.f32.mrb[0].mxu0
    %v4138 = vpop.f32.mrb[0].mxu0
    %4139 = vdwg.mxu0
    %4140 = vmatprep.subr.bf16.mxu0 %v3684
    %4141 = vmatpush1.bf16.msra.mxu0 %v3683
    %4142 = vmatprep.subr.bf16.mxu0 %v3691
    %4143 = vmatpush1.bf16.msra.mxu0 %v3690
    %4144 = vmatprep.subr.bf16.mxu0 %v3698
    %4145 = vmatpush1.bf16.msra.mxu0 %v3697
    %4146 = vmatprep.subr.bf16.mxu0 %v3705
    %4147 = vmatpush1.bf16.msra.mxu0 %v3704
    %4148 = vmatprep.subr.bf16.mxu0 %v3712
    %4149 = vmatpush1.bf16.msra.mxu0 %v3711
    %4150 = vmatprep.subr.bf16.mxu0 %v3719
    %4151 = vmatpush1.bf16.msra.mxu0 %v3718
    %4152 = vmatprep.subr.bf16.mxu0 %v3726
    %4153 = vmatpush1.bf16.msra.mxu0 %v3725
    %4154 = vmatprep.subr.bf16.mxu0 %v3733
    %4155 = vmatpush1.bf16.msra.mxu0 %v3732
    %4156 = vmatprep.subr.bf16.mxu0 %v3740
    %4157 = vmatpush1.bf16.msra.mxu0 %v3739
    %4158 = vmatprep.subr.bf16.mxu0 %v3747
    %4159 = vmatpush1.bf16.msra.mxu0 %v3746
    %4160 = vmatprep.subr.bf16.mxu0 %v3754
    %4161 = vmatpush1.bf16.msra.mxu0 %v3753
    %4162 = vmatprep.subr.bf16.mxu0 %v3761
    %4163 = vmatpush1.bf16.msra.mxu0 %v3760
    %4164 = vmatprep.subr.bf16.mxu0 %v3768
    %4165 = vmatpush1.bf16.msra.mxu0 %v3767
    %4166 = vmatprep.subr.bf16.mxu0 %v3775
    %4167 = vmatpush1.bf16.msra.mxu0 %v3774
    %4168 = vmatprep.subr.bf16.mxu0 %v3782
    %4169 = vmatpush1.bf16.msra.mxu0 %v3781
    %4170 = vmatprep.subr.bf16.mxu0 %v3789
    %4171 = vmatpush1.bf16.msra.mxu0 %v3788
    %4172 = vmatprep.mubr.bf16.mxu0 %v2571
    %4173 = vmatmul.mubr.bf16.gmra.mrb[0].mxu0 %v2570
    %v4174 = vpop.f32.mrb[0].mxu0
    %v4175 = vadd.f32 %v4134, %v4174
    %v4176 = vpop.f32.mrb[0].mxu0
    %v4177 = vadd.f32 %v4136, %v4176
    %v4178 = vpop.f32.mrb[0].mxu0
    %v4179 = vpop.f32.mrb[0].mxu0
    %4180 = vdwg.mxu0
    %4181 = vmatprep.subr.bf16.mxu0 %v3574
    %4182 = vmatpush1.bf16.msra.mxu0 %v3573
    %4183 = vmatprep.subr.bf16.mxu0 %v3581
    %4184 = vmatpush1.bf16.msra.mxu0 %v3580
    %4185 = vmatprep.subr.bf16.mxu0 %v3588
    %4186 = vmatpush1.bf16.msra.mxu0 %v3587
    %4187 = vmatprep.subr.bf16.mxu0 %v3595
    %4188 = vmatpush1.bf16.msra.mxu0 %v3594
    %4189 = vmatprep.subr.bf16.mxu0 %v3602
    %4190 = vmatpush1.bf16.msra.mxu0 %v3601
    %4191 = vmatprep.subr.bf16.mxu0 %v3609
    %4192 = vmatpush1.bf16.msra.mxu0 %v3608
    %4193 = vmatprep.subr.bf16.mxu0 %v3616
    %4194 = vmatpush1.bf16.msra.mxu0 %v3615
    %4195 = vmatprep.subr.bf16.mxu0 %v3623
    %4196 = vmatpush1.bf16.msra.mxu0 %v3622
    %4197 = vmatprep.subr.bf16.mxu0 %v3630
    %4198 = vmatpush1.bf16.msra.mxu0 %v3629
    %4199 = vmatprep.subr.bf16.mxu0 %v3637
    %4200 = vmatpush1.bf16.msra.mxu0 %v3636
    %4201 = vmatprep.subr.bf16.mxu0 %v3644
    %4202 = vmatpush1.bf16.msra.mxu0 %v3643
    %4203 = vmatprep.subr.bf16.mxu0 %v3651
    %4204 = vmatpush1.bf16.msra.mxu0 %v3650
    %4205 = vmatprep.subr.bf16.mxu0 %v3658
    %4206 = vmatpush1.bf16.msra.mxu0 %v3657
    %4207 = vmatprep.subr.bf16.mxu0 %v3665
    %4208 = vmatpush1.bf16.msra.mxu0 %v3664
    %4209 = vmatprep.subr.bf16.mxu0 %v3672
    %4210 = vmatpush1.bf16.msra.mxu0 %v3671
    %4211 = vmatprep.subr.bf16.mxu0 %v3679
    %4212 = vmatpush1.bf16.msra.mxu0 %v3678
    %4213 = vmatprep.mubr.bf16.mxu0 %v2569
    %4214 = vmatmul.mubr.bf16.gmra.mrb[0].mxu0 %v2568
    %v4215 = vpop.f32.mrb[0].mxu0
    %v4216 = vadd.f32 %v2849, %v4215
    %v4217 = vpop.f32.mrb[0].mxu0
    %v4218 = vadd.f32 %v2853, %v4217
    %v4219 = vpop.f32.mrb[0].mxu0
    %v4220 = vpop.f32.mrb[0].mxu0
    %4221 = vdwg.mxu0
    %4222 = vmatprep.subr.bf16.mxu0 %v3686
    %4223 = vmatpush1.bf16.msra.mxu0 %v3685
    %4224 = vmatprep.subr.bf16.mxu0 %v3693
    %4225 = vmatpush1.bf16.msra.mxu0 %v3692
    %4226 = vmatprep.subr.bf16.mxu0 %v3700
    %4227 = vmatpush1.bf16.msra.mxu0 %v3699
    %4228 = vmatprep.subr.bf16.mxu0 %v3707
    %4229 = vmatpush1.bf16.msra.mxu0 %v3706
    %4230 = vmatprep.subr.bf16.mxu0 %v3714
    %4231 = vmatpush1.bf16.msra.mxu0 %v3713
    %4232 = vmatprep.subr.bf16.mxu0 %v3721
    %4233 = vmatpush1.bf16.msra.mxu0 %v3720
    %4234 = vmatprep.subr.bf16.mxu0 %v3728
    %4235 = vmatpush1.bf16.msra.mxu0 %v3727
    %4236 = vmatprep.subr.bf16.mxu0 %v3735
    %4237 = vmatpush1.bf16.msra.mxu0 %v3734
    %4238 = vmatprep.subr.bf16.mxu0 %v3742
    %4239 = vmatpush1.bf16.msra.mxu0 %v3741
    %4240 = vmatprep.subr.bf16.mxu0 %v3749
    %4241 = vmatpush1.bf16.msra.mxu0 %v3748
    %4242 = vmatprep.subr.bf16.mxu0 %v3756
    %4243 = vmatpush1.bf16.msra.mxu0 %v3755
    %4244 = vmatprep.subr.bf16.mxu0 %v3763
    %4245 = vmatpush1.bf16.msra.mxu0 %v3762
    %4246 = vmatprep.subr.bf16.mxu0 %v3770
    %4247 = vmatpush1.bf16.msra.mxu0 %v3769
    %4248 = vmatprep.subr.bf16.mxu0 %v3777
    %4249 = vmatpush1.bf16.msra.mxu0 %v3776
    %4250 = vmatprep.subr.bf16.mxu0 %v3784
    %4251 = vmatpush1.bf16.msra.mxu0 %v3783
    %4252 = vmatprep.subr.bf16.mxu0 %v3791
    %4253 = vmatpush1.bf16.msra.mxu0 %v3790
    %4254 = vmatprep.mubr.bf16.mxu0 %v2571
    %4255 = vmatmul.mubr.bf16.gmra.mrb[0].mxu0 %v2570
    %v4256 = vpop.f32.mrb[0].mxu0
    %v4257 = vadd.f32 %v4216, %v4256
    %v4258 = vpop.f32.mrb[0].mxu0
    %v4259 = vadd.f32 %v4218, %v4258
    %v4260 = vpop.f32.mrb[0].mxu0
    %v4261 = vpop.f32.mrb[0].mxu0
    %4262 = vdwg.mxu0
    %4263 = vmatprep.subr.bf16.mxu0 0
    %4264 = vmatpush1.bf16.msra.mxu0 %v3575
    %4265 = vmatprep.subr.bf16.mxu0 0
    %4266 = vmatpush1.bf16.msra.mxu0 %v3582
    %4267 = vmatprep.subr.bf16.mxu0 0
    %4268 = vmatpush1.bf16.msra.mxu0 %v3589
    %4269 = vmatprep.subr.bf16.mxu0 0
    %4270 = vmatpush1.bf16.msra.mxu0 %v3596
    %4271 = vmatprep.subr.bf16.mxu0 0
    %4272 = vmatpush1.bf16.msra.mxu0 %v3603
    %4273 = vmatprep.subr.bf16.mxu0 0
    %4274 = vmatpush1.bf16.msra.mxu0 %v3610
    %4275 = vmatprep.subr.bf16.mxu0 0
    %4276 = vmatpush1.bf16.msra.mxu0 %v3617
    %4277 = vmatprep.subr.bf16.mxu0 0
    %4278 = vmatpush1.bf16.msra.mxu0 %v3624
    %4279 = vmatprep.subr.bf16.mxu0 0
    %4280 = vmatpush1.bf16.msra.mxu0 %v3631
    %4281 = vmatprep.subr.bf16.mxu0 0
    %4282 = vmatpush1.bf16.msra.mxu0 %v3638
    %4283 = vmatprep.subr.bf16.mxu0 0
    %4284 = vmatpush1.bf16.msra.mxu0 %v3645
    %4285 = vmatprep.subr.bf16.mxu0 0
    %4286 = vmatpush1.bf16.msra.mxu0 %v3652
    %4287 = vmatprep.subr.bf16.mxu0 0
    %4288 = vmatpush1.bf16.msra.mxu0 %v3659
    %4289 = vmatprep.subr.bf16.mxu0 0
    %4290 = vmatpush1.bf16.msra.mxu0 %v3666
    %4291 = vmatprep.subr.bf16.mxu0 0
    %4292 = vmatpush1.bf16.msra.mxu0 %v3673
    %4293 = vmatprep.subr.bf16.mxu0 0
    %4294 = vmatpush1.bf16.msra.mxu0 %v3680
    %4295 = vmatprep.mubr.bf16.mxu0 %v2569
    %4296 = vmatmul.mubr.bf16.gmra.mrb[0].mxu0 %v2568
    %v4297 = vpop.f32.mrb[0].mxu0
    %v4298 = vadd.f32 %v2857, %v4297
    %v4299 = vpop.f32.mrb[0].mxu0
    %v4300 = vpop.f32.mrb[0].mxu0
    %v4301 = vpop.f32.mrb[0].mxu0
    %4302 = vdwg.mxu0
    %4303 = vmatprep.subr.bf16.mxu0 0
    %4304 = vmatpush1.bf16.msra.mxu0 %v3687
    %4305 = vmatprep.subr.bf16.mxu0 0
    %4306 = vmatpush1.bf16.msra.mxu0 %v3694
    %4307 = vmatprep.subr.bf16.mxu0 0
    %4308 = vmatpush1.bf16.msra.mxu0 %v3701
    %4309 = vmatprep.subr.bf16.mxu0 0
    %4310 = vmatpush1.bf16.msra.mxu0 %v3708
    %4311 = vmatprep.subr.bf16.mxu0 0
    %4312 = vmatpush1.bf16.msra.mxu0 %v3715
    %4313 = vmatprep.subr.bf16.mxu0 0
    %4314 = vmatpush1.bf16.msra.mxu0 %v3722
    %4315 = vmatprep.subr.bf16.mxu0 0
    %4316 = vmatpush1.bf16.msra.mxu0 %v3729
    %4317 = vmatprep.subr.bf16.mxu0 0
    %4318 = vmatpush1.bf16.msra.mxu0 %v3736
    %4319 = vmatprep.subr.bf16.mxu0 0
    %4320 = vmatpush1.bf16.msra.mxu0 %v3743
    %4321 = vmatprep.subr.bf16.mxu0 0
    %4322 = vmatpush1.bf16.msra.mxu0 %v3750
    %4323 = vmatprep.subr.bf16.mxu0 0
    %4324 = vmatpush1.bf16.msra.mxu0 %v3757
    %4325 = vmatprep.subr.bf16.mxu0 0
    %4326 = vmatpush1.bf16.msra.mxu0 %v3764
    %4327 = vmatprep.subr.bf16.mxu0 0
    %4328 = vmatpush1.bf16.msra.mxu0 %v3771
    %4329 = vmatprep.subr.bf16.mxu0 0
    %4330 = vmatpush1.bf16.msra.mxu0 %v3778
    %4331 = vmatprep.subr.bf16.mxu0 0
    %4332 = vmatpush1.bf16.msra.mxu0 %v3785
    %4333 = vmatprep.subr.bf16.mxu0 0
    %4334 = vmatpush1.bf16.msra.mxu0 %v3792
    %4335 = vmatprep.mubr.bf16.mxu0 %v2571
    %4336 = vmatmul.mubr.bf16.gmra.mrb[0].mxu0 %v2570
    %v4337 = vpop.f32.mrb[0].mxu0
    %v4338 = vadd.f32 %v4298, %v4337
    %v4339 = vpop.f32.mrb[0].mxu0
    %v4340 = vpop.f32.mrb[0].mxu0
    %v4341 = vpop.f32.mrb[0].mxu0
    %4342 = vdwg.mxu0
    %v4343 = vxor.u32 %v4093, 2147483648
    %v4344 = vxor.u32 %v4095, 2147483648
    %v4345 = vxor.u32 %v4175, 2147483648
    %v4346 = vxor.u32 %v4177, 2147483648
    %v4347 = vxor.u32 %v4257, 2147483648
    %v4348 = vxor.u32 %v4259, 2147483648
    %v4349 = vxor.u32 %v4338, 2147483648
    %v4350 = vmul.f32 %v4343, 1.442695
    %v4351 = vpow.pop %v4350
    %v4352 = vmul.f32 %v4344, 1.442695
    %v4353 = vpow.pop %v4352
    %v4354 = vmul.f32 %v4345, 1.442695
    %v4355 = vpow.pop %v4354
    %v4356 = vmul.f32 %v4346, 1.442695
    %v4357 = vpow.pop %v4356
    %v4358 = vmul.f32 %v4347, 1.442695
    %v4359 = vpow.pop %v4358
    %v4360 = vmul.f32 %v4348, 1.442695
    %v4361 = vpow.pop %v4360
    %v4362 = vmul.f32 %v4349, 1.442695
    %v4363 = vpow.pop %v4362
    %v4364 = vadd.f32 %v4351, 1.0
    %v4365 = vadd.f32 %v4353, 1.0
    %v4366 = vadd.f32 %v4355, 1.0
    %v4367 = vadd.f32 %v4357, 1.0
    %v4368 = vadd.f32 %v4359, 1.0
    %v4369 = vadd.f32 %v4361, 1.0
    %v4370 = vadd.f32 %v4363, 1.0
    %v4371 = vrcp.pop %v4364
    %v4372 = vmul.f32 1.0, %v4371
    %v4373 = vrcp.pop %v4365
    %v4374 = vmul.f32 1.0, %v4373
    %v4375 = vrcp.pop %v4366
    %v4376 = vmul.f32 1.0, %v4375
    %v4377 = vrcp.pop %v4367
    %v4378 = vmul.f32 1.0, %v4377
    %v4379 = vrcp.pop %v4368
    %v4380 = vmul.f32 1.0, %v4379
    %v4381 = vrcp.pop %v4369
    %v4382 = vmul.f32 1.0, %v4381
    %v4383 = vrcp.pop %v4370
    %v4384 = vmul.f32 1.0, %v4383
    %4385 = vst [vmem:[#allocation7] sm:$0xff] %v4372
    %4386 = vst [vmem:[#allocation7 + $0x8] sm:$0xff] %v4374
    %4387 = vst [vmem:[#allocation7 + $0x10] sm:$0xff] %v4376
    %4388 = vst [vmem:[#allocation7 + $0x18] sm:$0xff] %v4378
    %4389 = vst [vmem:[#allocation7 + $0x20] sm:$0xff] %v4380
    %4390 = vst [vmem:[#allocation7 + $0x28] sm:$0xff] %v4382
    %4391 = vst [vmem:[#allocation7 + $0x30] sm:$0xff] %v4384
    %4392 = vst [vmem:[%s11] sm:$0xff] %v2255
    %4393 = vst [vmem:[%s11 + $0x8] sm:$0xff] %v2257
    // Predicated region
    $region50: #{vae_forward.1} parent=1 // pred_check
      _
    $region51: #{vae_forward.1} parent=1 // pred_check_branch
      %4395 = sbr.rel (0) target = $region53
    $region52: #{vae_forward.1} parent=1 // pred_region
      %s4397 = ssub.s32 896, 896
      %4398 = vsyncadd [#allocation4], %s4397
      %s4400 = sshll.u32 [#allocation7], 4
      %s4401 = int_to_ptr.vmem [resolvable:$true] %s4400
      %4403 = dma.vmem_to_hbm [thread:$0]  %s4401, 896, %s10, [#allocation4]
    $region53: #{vae_forward.1} parent=1 // pred_fallthru
      _
    // Predicated region
    $region54: #{vae_forward.1} parent=1 // pred_check
      _
    $region55: #{vae_forward.1} parent=1 // pred_check_branch
      %4405 = sbr.rel (0) target = $region57
    $region56: #{vae_forward.1} parent=1 // pred_region
      _
    $region57: #{vae_forward.1} parent=1 // pred_fallthru
      _
    // Predicated region
    $region58: #{vae_forward.1} parent=1 // pred_check
      _
    $region59: #{vae_forward.1} parent=1 // pred_check_branch
      %4407 = sbr.rel (0) target = $region61
    $region60: #{vae_forward.1} parent=1 // pred_region
      %4408 = dma.done [#allocation4], 896
    $region61: #{vae_forward.1} parent=1 // pred_fallthru
      _
    // Predicated region
    $region62: #{vae_forward.1} parent=1 // pred_check
      _
    $region63: #{vae_forward.1} parent=1 // pred_check_branch
      %4410 = sbr.rel (0) target = $region65
    $region64: #{vae_forward.1} parent=1 // pred_region
      _
    $region65: #{vae_forward.1} parent=1 // pred_fallthru
      _
    %4411 = vsyncpa [#allocation3], 1
    %4412 = vsyncpa [#allocation6], 1
    %4413 = vsyncpa [#allocation4], 1

</llo_original>
